<compile_context>
chip_gen: v5e
topology: v5e:2x2
jax: 0.10.0
libtpu: 0.0.40
codegen_flags: <defaults>
</compile_context>

<pallas_src>
import math

import jax
import jax.numpy as jnp
from jax import lax
from jax.experimental import pallas as pl
from jax.experimental.pallas import tpu as pltpu

INPUT_SIZE = 1
HIDDEN = 32
BN_EPS = 1e-5


# ---------------------------------------------------------------------------
# Pallas kernel
# ---------------------------------------------------------------------------
def _simple_lstm_kernel(
    x_ref,       # (T, B, 1)  time-major input, f32
    rows_ref,    # (6, 8H)    f32: [w0f, w0b, b0, b1, gate_scale, gate_shift]
    wslab_ref,   # (8H, 8H)   bf16: [whh0; whh1; w1_upper; w1_lower], each (2H, 8H)
    misc_ref,    # (8, 2H)    f32: [attn_w, bn_scale, bn_shift, w_fc, w_dir, w_mag, head_bias, 0]
    out_ref,     # (B, 1)     f32
    attn_ref,    # (B, T)     f32 (lane-dense attention weights)
    gx_ref,      # scratch: (T, B, 8H) f32 — staging for hoisted input projections (reused by both layers)
):
    T, B, _ = x_ref.shape
    H8 = rows_ref.shape[1]
    H = H8 // 8
    H2 = 2 * H
    bf16 = jnp.bfloat16
    f32 = jnp.float32

    # ---- loop-invariant operands: load once, keep resident ----
    rows = rows_ref[...]                     # (6, 8H)
    w0f, w0b = rows[0:1, :], rows[1:2, :]
    b0, b1 = rows[2:3, :], rows[3:4, :]
    gsc, gsh = rows[4:5, :], rows[5:6, :]

    whh0 = wslab_ref[0:H2, :]                # (2H, 8H) bf16
    whh1 = wslab_ref[H2:2 * H2, :]
    w1a = wslab_ref[2 * H2:3 * H2, :]        # multiplies outs0[t]       = [h0_f(t)     | h0_b(T-1-t)]
    w1b = wslab_ref[3 * H2:4 * H2, :]        # multiplies outs0[T-1-t]   = [h0_f(T-1-t) | h0_b(t)]

    # Fused bidirectional recurrence.  Carry layout (B, 2H): lanes [0:H] = forward hidden,
    # [H:2H] = backward hidden.  Gate layout (B, 8H): [i_f,i_b, f_f,f_b, g_f,g_b, o_f,o_b].
    # gx_ref[t] holds the hoisted input projection for the fwd direction at time t and the bwd
    # direction at time T-1-t.  outs[t] = [h_f(t) | h_b(T-1-t)].
    def run_layer(whh_bf16):
        hc = jnp.zeros((B, H2), f32)
        cc = jnp.zeros((B, H2), f32)
        outs = []
        for t in range(T):
            g = gx_ref[t]                                           # (B, 8H) f32 from VMEM scratch
            if t > 0:                                               # hc == 0 at t == 0
                # Single-pass bf16 MXU matmul on the serial chain, f32 accumulation.
                g = g + jnp.dot(hc.astype(bf16), whh_bf16, preferred_element_type=f32)
            # One EUP pass over all 256 gate lanes: sigmoid lanes were pre-scaled by 0.5 in the
            # stacked weights, so sigma(z) = 0.5*tanh(z/2) + 0.5 falls out of the scale/shift.
            acts = jnp.tanh(g) * gsc + gsh
            i_g = acts[:, 0:H2]
            f_g = acts[:, H2:2 * H2]
            c_g = acts[:, 2 * H2:3 * H2]
            o_g = acts[:, 3 * H2:4 * H2]
            cc = f_g * cc + i_g * c_g
            hc = o_g * jnp.tanh(cc)
            outs.append(hc)
        return outs

    # ---- layer 0: input projection hoisted; input_size == 1 -> pure VPU broadcast multiply ----
    for t in range(T):
        gx_ref[t] = x_ref[t] * w0f + x_ref[T - 1 - t] * w0b + b0
    outs0 = run_layer(whh0)

    # ---- layer 1: input projection as two independent bf16 matmuls per step (no lane concat),
    #      all off the serial dependency chain; results staged through the reused scratch ----
    o0b = [o.astype(bf16) for o in outs0]
    for t in range(T):
        gx_ref[t] = (jnp.dot(o0b[t], w1a, preferred_element_type=f32)
                     + jnp.dot(o0b[T - 1 - t], w1b, preferred_element_type=f32)
                     + b1)
    outs1 = run_layer(whh1)

    # time-aligned bidirectional layer-1 output: s1[t] = [h1_f(t) | h1_b(t)]  (B, 2H)
    # pure VPU lane-mask select (both operands already hold the wanted halves at the right lanes)
    lane_lt_h = lax.broadcasted_iota(jnp.int32, (B, H2), 1) < H
    s1 = [jnp.where(lane_lt_h, outs1[t], outs1[T - 1 - t]) for t in range(T)]

    # ---- attention, lane-major: B on sublanes, T on lanes ----
    misc = misc_ref[...]                                            # (8, 2H)
    aw = misc[0:1, :]                                               # (1, 2H)
    cols = [jnp.sum(s1[t] * aw, axis=-1, keepdims=True) for t in range(T)]
    scores = jnp.concatenate(cols, axis=-1)                         # (B, T)
    m = jnp.max(scores, axis=-1, keepdims=True)
    e = jnp.exp(scores - m)
    attn = e * pl.reciprocal(jnp.sum(e, axis=-1, keepdims=True), approx=True)
    attn_ref[...] = attn                                            # (B, T) lane-dense output

    context = s1[0] * attn[:, 0:1]
    for t in range(1, T):
        context = context + s1[t] * attn[:, t:t + 1]                # (B, 2H)

    # ---- BatchNorm1d (eval, running stats folded to scale/shift) + output heads ----
    ctx_bn = context * misc[1:2, :] + misc[2:3, :]
    fc_o = jnp.sum(ctx_bn * misc[3:4, :], axis=-1, keepdims=True) + misc[6:7, 0:1]
    dir_p = jnp.sum(ctx_bn * misc[4:5, :], axis=-1, keepdims=True) + misc[6:7, 1:2]
    mag_p = jnp.sum(ctx_bn * misc[5:6, :], axis=-1, keepdims=True) + misc[6:7, 2:3]
    dir_o = jnp.tanh(dir_p)
    mag_o = 0.5 * jnp.tanh(0.5 * mag_p) + 0.5                       # sigmoid via tanh
    out_ref[...] = fc_o * 0.4 + dir_o * mag_o * 0.6


# ---------------------------------------------------------------------------
# one-time parameter packing (pure layout plumbing, runs OUTSIDE the per-call jit)
# ---------------------------------------------------------------------------
def prepare_params(p):
    """Pack all weights into 3 kernel operands: rows (6,8H) f32, wslab (8H,8H) bf16, misc (8,2H) f32."""
    f32 = jnp.float32
    H = p['whh0f'].shape[1]
    Z1 = jnp.zeros((1, 4 * H), f32)
    ZH = jnp.zeros((H, 4 * H), f32)

    def inter(mf, mb):
        # (R,4H)+(R,4H) [gate order i,f,g,o] -> (R,8H) interleaved [i_f,i_b,f_f,f_b,g_f,g_b,o_f,o_b]
        cols = []
        for k in range(4):
            cols.append(mf[:, k * H:(k + 1) * H])
            cols.append(mb[:, k * H:(k + 1) * H])
        return jnp.concatenate(cols, axis=1)

    lane = jnp.arange(8 * H)
    is_cell = (lane >= 4 * H) & (lane < 6 * H)                  # tanh (cell) gate lanes
    pre = jnp.where(is_cell, 1.0, 0.5).astype(f32)[None, :]     # folded pre-scale (sigmoid via tanh)
    gact_scale = pre
    gact_shift = jnp.where(is_cell, 0.0, 0.5).astype(f32)[None, :]

    def hh_stack(whh_f, whh_b):
        top = inter(whh_f.T, ZH)           # rows driven by h_f -> forward-gate columns
        bot = inter(ZH, whh_b.T)           # rows driven by h_b -> backward-gate columns
        return jnp.concatenate([top, bot], axis=0) * pre        # (2H, 8H)

    w0f_row = inter(p['wih0f'].T, Z1) * pre                     # (1, 8H)
    w0b_row = inter(Z1, p['wih0b'].T) * pre
    b0 = inter(p['b0f'][None, :], p['b0b'][None, :]) * pre
    b1 = inter(p['b1f'][None, :], p['b1b'][None, :]) * pre
    whh0 = hh_stack(p['whh0f'], p['whh0b'])
    whh1 = hh_stack(p['whh1f'], p['whh1b'])

    wi1f = p['wih1f'].T                                         # (2H, 4H)
    wi1b = p['wih1b'].T
    # kernel step t multiplies outs0[t] = [h0_f(t) | h0_b(T-1-t)] by w1_upper and
    # outs0[T-1-t] = [h0_f(T-1-t) | h0_b(t)] by w1_lower
    w1_upper = jnp.concatenate([inter(wi1f[:H], ZH),       # h0_f(t)      -> forward gates
                                inter(ZH, wi1b[H:])], 0) * pre   # h0_b(T-1-t) -> backward gates
    w1_lower = jnp.concatenate([inter(ZH, wi1b[:H]),       # h0_f(T-1-t)  -> backward gates
                                inter(wi1f[H:], ZH)], 0) * pre   # h0_b(t)    -> forward gates

    rows = jnp.concatenate([w0f_row, w0b_row, b0, b1, gact_scale, gact_shift], axis=0)   # (6, 8H) f32
    wslab = jnp.concatenate([whh0, whh1, w1_upper, w1_lower], axis=0).astype(jnp.bfloat16)  # (8H, 8H)

    # eval-mode BatchNorm folded to scale/shift; heads packed as rows
    scale = p['bn_gamma'] / jnp.sqrt(p['bn_var'] + BN_EPS)
    bn_scale = scale[None, :]
    bn_shift = (p['bn_beta'] - p['bn_mean'] * scale)[None, :]
    head_bias = jnp.concatenate(
        [p['bfc'], p['bd'], p['bm'], jnp.zeros((2 * H - 3,), f32)])[None, :]             # (1, 2H)
    misc = jnp.concatenate([p['attn_w'].T, bn_scale, bn_shift,
                            p['wfc'], p['wd'], p['wm'],
                            head_bias, jnp.zeros((1, 2 * H), f32)], axis=0)              # (8, 2H) f32
    return rows, wslab, misc


# ---------------------------------------------------------------------------
# per-call wrapper: only transpose x and launch the kernel
# ---------------------------------------------------------------------------
@jax.jit
def simple_lstm_forward(x, rows, wslab, misc):
    """x: (B, T, 1) float32. Returns (output (B, 1), attn_weights (B, T))."""
    B, T, I = x.shape
    assert I == 1, "kernel assumes univariate input (input_size=1)"
    H8 = rows.shape[1]
    x_tm = jnp.transpose(x, (1, 0, 2)).astype(jnp.float32)      # (T, B, 1) time-major

    out, attn = pl.pallas_call(
        _simple_lstm_kernel,
        out_shape=(jax.ShapeDtypeStruct((B, 1), jnp.float32),
                   jax.ShapeDtypeStruct((B, T), jnp.float32)),
        in_specs=[pl.BlockSpec(memory_space=pltpu.MemorySpace.VMEM)] * 4,
        out_specs=(pl.BlockSpec(memory_space=pltpu.MemorySpace.VMEM),
                   pl.BlockSpec(memory_space=pltpu.MemorySpace.VMEM)),
        scratch_shapes=[pltpu.VMEM((T, B, H8), jnp.float32)],
    )(x_tm, rows, wslab, misc)
    return out, attn


# ---------------- deterministic parameter init (shapes from __init__) ----------------
def init_params(key, hidden=HIDDEN, input_size=INPUT_SIZE):
    H = hidden

    def xavier(k, shape):
        fan_out, fan_in = shape
        lim = math.sqrt(6.0 / (fan_in + fan_out))
        return jax.random.uniform(k, shape, jnp.float32, -lim, lim)

    def orthogonal(k, shape):
        a = jax.random.normal(k, shape, jnp.float32)
        q, r = jnp.linalg.qr(a)
        return (q * jnp.sign(jnp.diagonal(r))[None, :]).astype(jnp.float32)

    def lstm_bias():
        # bias_ih + bias_hh, both zero with forget gate [H:2H] = 1.0 each -> combined 2.0
        return jnp.zeros((4 * H,), jnp.float32).at[H:2 * H].set(2.0)

    ks = jax.random.split(key, 12)
    p = {}
    p['wih0f'] = xavier(ks[0], (4 * H, input_size)); p['whh0f'] = orthogonal(ks[1], (4 * H, H)); p['b0f'] = lstm_bias()
    p['wih0b'] = xavier(ks[2], (4 * H, input_size)); p['whh0b'] = orthogonal(ks[3], (4 * H, H)); p['b0b'] = lstm_bias()
    p['wih1f'] = xavier(ks[4], (4 * H, 2 * H));      p['whh1f'] = orthogonal(ks[5], (4 * H, H)); p['b1f'] = lstm_bias()
    p['wih1b'] = xavier(ks[6], (4 * H, 2 * H));      p['whh1b'] = orthogonal(ks[7], (4 * H, H)); p['b1b'] = lstm_bias()
    p['attn_w'] = xavier(ks[8], (2 * H, 1))
    p['wd'] = xavier(ks[9], (1, 2 * H));  p['bd'] = jnp.zeros((1,), jnp.float32)
    p['wm'] = xavier(ks[10], (1, 2 * H)); p['bm'] = jnp.zeros((1,), jnp.float32)
    p['wfc'] = xavier(ks[11], (1, 2 * H)); p['bfc'] = jnp.zeros((1,), jnp.float32)
    # BatchNorm1d(2H) affine params + running statistics (eval-mode BN consumes these)
    p['bn_gamma'] = jnp.ones((2 * H,), jnp.float32)
    p['bn_beta'] = jnp.zeros((2 * H,), jnp.float32)
    p['bn_mean'] = jnp.zeros((2 * H,), jnp.float32)
    p['bn_var'] = jnp.ones((2 * H,), jnp.float32)
    return p


# ---------------- pure-JAX f32 reference (for correctness check) ----------------
def reference_forward(x, p):
    H = p['whh0f'].shape[1]
    xt = jnp.transpose(x, (1, 0, 2)).astype(jnp.float32)   # (T, B, I)

    def sigmoid(v):
        return 1.0 / (1.0 + jnp.exp(-v))

    def run(seq, wih, whh, b, reverse):
        Bn = seq.shape[1]

        def cell(carry, x_t):
            h, c = carry
            g = x_t @ wih.T + h @ whh.T + b
            i = sigmoid(g[:, :H]); f = sigmoid(g[:, H:2 * H])
            gg = jnp.tanh(g[:, 2 * H:3 * H]); o = sigmoid(g[:, 3 * H:])
            c = f * c + i * gg
            h = o * jnp.tanh(c)
            return (h, c), h

        init = (jnp.zeros((Bn, H), jnp.float32), jnp.zeros((Bn, H), jnp.float32))
        xs = seq[::-1] if reverse else seq
        _, hs = lax.scan(cell, init, xs)
        return hs[::-1] if reverse else hs

    s0 = jnp.concatenate([run(xt, p['wih0f'], p['whh0f'], p['b0f'], False),
                          run(xt, p['wih0b'], p['whh0b'], p['b0b'], True)], axis=-1)
    s1 = jnp.concatenate([run(s0, p['wih1f'], p['whh1f'], p['b1f'], False),
                          run(s0, p['wih1b'], p['whh1b'], p['b1b'], True)], axis=-1)   # (T, B, 2H)
    scores = jnp.sum(s1 * p['attn_w'][:, 0][None, None, :], axis=-1)                   # (T, B)
    attn = jax.nn.softmax(scores, axis=0)
    ctx = jnp.sum(s1 * attn[:, :, None], axis=0)                                       # (B, 2H)
    scale = p['bn_gamma'] / jnp.sqrt(p['bn_var'] + BN_EPS)
    ctx_bn = (ctx - p['bn_mean']) * scale + p['bn_beta']
    d = jnp.tanh(ctx_bn @ p['wd'].T + p['bd'])
    m = sigmoid(ctx_bn @ p['wm'].T + p['bm'])
    o = ctx_bn @ p['wfc'].T + p['bfc']
    return o * 0.4 + d * m * 0.6, attn.T


if __name__ == "__main__":
    key = jax.random.PRNGKey(0)
    pkey, xkey = jax.random.split(key)
    params = init_params(pkey)
    rows, wslab, misc = prepare_params(params)          # one-time packing, outside the jitted forward

    B, T = 2, 8
    x = jax.random.normal(xkey, (B, T, INPUT_SIZE), jnp.float32)

    out, attn = jax.block_until_ready(simple_lstm_forward(x, rows, wslab, misc))
    ref_out, ref_attn = reference_forward(x, params)

    assert out.shape == (B, 1) and attn.shape == (B, T)
    assert bool(jnp.all(jnp.isfinite(out))) and bool(jnp.all(jnp.isfinite(attn)))
    # bf16 MXU operands over the 2-layer / 16-step recurrence -> slightly looser output tolerance
    # than the pure-f32 variant (f32 accumulation keeps the error well below 1e-2).
    assert jnp.allclose(out, ref_out, atol=1e-2, rtol=1e-2)
    assert jnp.allclose(attn, ref_attn, atol=5e-3, rtol=5e-3)
    print("KERNEL_OK")
</pallas_src>

<mosaic_0001>
module attributes {stable_mosaic.version = 11 : i64} {
  func.func @_simple_lstm_kernel(%arg0: memref<8x2x1xf32, #tpu.memory_space<vmem>>, %arg1: memref<6x256xf32, #tpu.memory_space<vmem>>, %arg2: memref<256x256xbf16, #tpu.memory_space<vmem>>, %arg3: memref<8x64xf32, #tpu.memory_space<vmem>>, %arg4: memref<2x1xf32, #tpu.memory_space<vmem>>, %arg5: memref<2x8xf32, #tpu.memory_space<vmem>>, %arg6: memref<8x2x256xf32, #tpu.memory_space<vmem>>) attributes {dimension_semantics = [], scalar_prefetch = 0 : i64, scratch_operands = 1 : i64, tpu.core_type = #tpu.core_type<tc>} {
    %c0 = arith.constant 0 : index
    %c0_0 = arith.constant 0 : index
    %0 = vector.load %arg1[%c0, %c0_0] : memref<6x256xf32, #tpu.memory_space<vmem>>, vector<6x256xf32>
    %1 = vector.extract_strided_slice %0 {offsets = [0, 0], sizes = [1, 256], strides = [1, 1]} : vector<6x256xf32> to vector<1x256xf32>
    %2 = vector.extract_strided_slice %0 {offsets = [1, 0], sizes = [1, 256], strides = [1, 1]} : vector<6x256xf32> to vector<1x256xf32>
    %3 = vector.extract_strided_slice %0 {offsets = [2, 0], sizes = [1, 256], strides = [1, 1]} : vector<6x256xf32> to vector<1x256xf32>
    %4 = vector.extract_strided_slice %0 {offsets = [3, 0], sizes = [1, 256], strides = [1, 1]} : vector<6x256xf32> to vector<1x256xf32>
    %5 = vector.extract_strided_slice %0 {offsets = [4, 0], sizes = [1, 256], strides = [1, 1]} : vector<6x256xf32> to vector<1x256xf32>
    %6 = vector.extract_strided_slice %0 {offsets = [5, 0], sizes = [1, 256], strides = [1, 1]} : vector<6x256xf32> to vector<1x256xf32>
    %c0_1 = arith.constant 0 : index
    %c0_2 = arith.constant 0 : index
    %7 = vector.load %arg2[%c0_1, %c0_2] : memref<256x256xbf16, #tpu.memory_space<vmem>>, vector<64x256xbf16>
    %c64 = arith.constant 64 : index
    %c0_3 = arith.constant 0 : index
    %8 = vector.load %arg2[%c64, %c0_3] : memref<256x256xbf16, #tpu.memory_space<vmem>>, vector<64x256xbf16>
    %c128 = arith.constant 128 : index
    %c0_4 = arith.constant 0 : index
    %9 = vector.load %arg2[%c128, %c0_4] : memref<256x256xbf16, #tpu.memory_space<vmem>>, vector<64x256xbf16>
    %c192 = arith.constant 192 : index
    %c0_5 = arith.constant 0 : index
    %10 = vector.load %arg2[%c192, %c0_5] : memref<256x256xbf16, #tpu.memory_space<vmem>>, vector<64x256xbf16>
    %c0_6 = arith.constant 0 : index
    %c0_7 = arith.constant 0 : index
    %c0_8 = arith.constant 0 : index
    %11 = vector.load %arg0[%c0_6, %c0_7, %c0_8] : memref<8x2x1xf32, #tpu.memory_space<vmem>>, vector<1x2x1xf32>
    %12 = vector.shape_cast %11 : vector<1x2x1xf32> to vector<2x1xf32>
    %13 = vector.broadcast %12 : vector<2x1xf32> to vector<2x256xf32>
    %14 = vector.broadcast %1 : vector<1x256xf32> to vector<2x256xf32>
    %15 = arith.mulf %13, %14 : vector<2x256xf32>
    %c7 = arith.constant 7 : index
    %c0_9 = arith.constant 0 : index
    %c0_10 = arith.constant 0 : index
    %16 = vector.load %arg0[%c7, %c0_9, %c0_10] : memref<8x2x1xf32, #tpu.memory_space<vmem>>, vector<1x2x1xf32>
    %17 = vector.shape_cast %16 : vector<1x2x1xf32> to vector<2x1xf32>
    %18 = vector.broadcast %17 : vector<2x1xf32> to vector<2x256xf32>
    %19 = vector.broadcast %2 : vector<1x256xf32> to vector<2x256xf32>
    %20 = arith.mulf %18, %19 : vector<2x256xf32>
    %21 = arith.addf %15, %20 : vector<2x256xf32>
    %22 = vector.broadcast %3 : vector<1x256xf32> to vector<2x256xf32>
    %23 = arith.addf %21, %22 : vector<2x256xf32>
    %c0_11 = arith.constant 0 : index
    %c0_12 = arith.constant 0 : index
    %c0_13 = arith.constant 0 : index
    %24 = vector.load %arg6[%c0_11, %c0_12, %c0_13] : memref<8x2x256xf32, #tpu.memory_space<vmem>>, vector<1x2x256xf32>
    %25 = vector.shape_cast %24 : vector<1x2x256xf32> to vector<2x256xf32>
    %26 = vector.shape_cast %23 : vector<2x256xf32> to vector<1x2x256xf32>
    tpu.vector_store %arg6[%c0_11, %c0_12, %c0_13], %26 {strides = array<i32>} : memref<8x2x256xf32, #tpu.memory_space<vmem>>, vector<1x2x256xf32>,
    %c1 = arith.constant 1 : index
    %c0_14 = arith.constant 0 : index
    %c0_15 = arith.constant 0 : index
    %27 = vector.load %arg0[%c1, %c0_14, %c0_15] : memref<8x2x1xf32, #tpu.memory_space<vmem>>, vector<1x2x1xf32>
    %28 = vector.shape_cast %27 : vector<1x2x1xf32> to vector<2x1xf32>
    %29 = vector.broadcast %28 : vector<2x1xf32> to vector<2x256xf32>
    %30 = vector.broadcast %1 : vector<1x256xf32> to vector<2x256xf32>
    %31 = arith.mulf %29, %30 : vector<2x256xf32>
    %c6 = arith.constant 6 : index
    %c0_16 = arith.constant 0 : index
    %c0_17 = arith.constant 0 : index
    %32 = vector.load %arg0[%c6, %c0_16, %c0_17] : memref<8x2x1xf32, #tpu.memory_space<vmem>>, vector<1x2x1xf32>
    %33 = vector.shape_cast %32 : vector<1x2x1xf32> to vector<2x1xf32>
    %34 = vector.broadcast %33 : vector<2x1xf32> to vector<2x256xf32>
    %35 = vector.broadcast %2 : vector<1x256xf32> to vector<2x256xf32>
    %36 = arith.mulf %34, %35 : vector<2x256xf32>
    %37 = arith.addf %31, %36 : vector<2x256xf32>
    %38 = vector.broadcast %3 : vector<1x256xf32> to vector<2x256xf32>
    %39 = arith.addf %37, %38 : vector<2x256xf32>
    %c1_18 = arith.constant 1 : index
    %c0_19 = arith.constant 0 : index
    %c0_20 = arith.constant 0 : index
    %40 = vector.load %arg6[%c1_18, %c0_19, %c0_20] : memref<8x2x256xf32, #tpu.memory_space<vmem>>, vector<1x2x256xf32>
    %41 = vector.shape_cast %40 : vector<1x2x256xf32> to vector<2x256xf32>
    %42 = vector.shape_cast %39 : vector<2x256xf32> to vector<1x2x256xf32>
    tpu.vector_store %arg6[%c1_18, %c0_19, %c0_20], %42 {strides = array<i32>} : memref<8x2x256xf32, #tpu.memory_space<vmem>>, vector<1x2x256xf32>,
    %c2 = arith.constant 2 : index
    %c0_21 = arith.constant 0 : index
    %c0_22 = arith.constant 0 : index
    %43 = vector.load %arg0[%c2, %c0_21, %c0_22] : memref<8x2x1xf32, #tpu.memory_space<vmem>>, vector<1x2x1xf32>
    %44 = vector.shape_cast %43 : vector<1x2x1xf32> to vector<2x1xf32>
    %45 = vector.broadcast %44 : vector<2x1xf32> to vector<2x256xf32>
    %46 = vector.broadcast %1 : vector<1x256xf32> to vector<2x256xf32>
    %47 = arith.mulf %45, %46 : vector<2x256xf32>
    %c5 = arith.constant 5 : index
    %c0_23 = arith.constant 0 : index
    %c0_24 = arith.constant 0 : index
    %48 = vector.load %arg0[%c5, %c0_23, %c0_24] : memref<8x2x1xf32, #tpu.memory_space<vmem>>, vector<1x2x1xf32>
    %49 = vector.shape_cast %48 : vector<1x2x1xf32> to vector<2x1xf32>
    %50 = vector.broadcast %49 : vector<2x1xf32> to vector<2x256xf32>
    %51 = vector.broadcast %2 : vector<1x256xf32> to vector<2x256xf32>
    %52 = arith.mulf %50, %51 : vector<2x256xf32>
    %53 = arith.addf %47, %52 : vector<2x256xf32>
    %54 = vector.broadcast %3 : vector<1x256xf32> to vector<2x256xf32>
    %55 = arith.addf %53, %54 : vector<2x256xf32>
    %c2_25 = arith.constant 2 : index
    %c0_26 = arith.constant 0 : index
    %c0_27 = arith.constant 0 : index
    %56 = vector.load %arg6[%c2_25, %c0_26, %c0_27] : memref<8x2x256xf32, #tpu.memory_space<vmem>>, vector<1x2x256xf32>
    %57 = vector.shape_cast %56 : vector<1x2x256xf32> to vector<2x256xf32>
    %58 = vector.shape_cast %55 : vector<2x256xf32> to vector<1x2x256xf32>
    tpu.vector_store %arg6[%c2_25, %c0_26, %c0_27], %58 {strides = array<i32>} : memref<8x2x256xf32, #tpu.memory_space<vmem>>, vector<1x2x256xf32>,
    %c3 = arith.constant 3 : index
    %c0_28 = arith.constant 0 : index
    %c0_29 = arith.constant 0 : index
    %59 = vector.load %arg0[%c3, %c0_28, %c0_29] : memref<8x2x1xf32, #tpu.memory_space<vmem>>, vector<1x2x1xf32>
    %60 = vector.shape_cast %59 : vector<1x2x1xf32> to vector<2x1xf32>
    %61 = vector.broadcast %60 : vector<2x1xf32> to vector<2x256xf32>
    %62 = vector.broadcast %1 : vector<1x256xf32> to vector<2x256xf32>
    %63 = arith.mulf %61, %62 : vector<2x256xf32>
    %c4 = arith.constant 4 : index
    %c0_30 = arith.constant 0 : index
    %c0_31 = arith.constant 0 : index
    %64 = vector.load %arg0[%c4, %c0_30, %c0_31] : memref<8x2x1xf32, #tpu.memory_space<vmem>>, vector<1x2x1xf32>
    %65 = vector.shape_cast %64 : vector<1x2x1xf32> to vector<2x1xf32>
    %66 = vector.broadcast %65 : vector<2x1xf32> to vector<2x256xf32>
    %67 = vector.broadcast %2 : vector<1x256xf32> to vector<2x256xf32>
    %68 = arith.mulf %66, %67 : vector<2x256xf32>
    %69 = arith.addf %63, %68 : vector<2x256xf32>
    %70 = vector.broadcast %3 : vector<1x256xf32> to vector<2x256xf32>
    %71 = arith.addf %69, %70 : vector<2x256xf32>
    %c3_32 = arith.constant 3 : index
    %c0_33 = arith.constant 0 : index
    %c0_34 = arith.constant 0 : index
    %72 = vector.load %arg6[%c3_32, %c0_33, %c0_34] : memref<8x2x256xf32, #tpu.memory_space<vmem>>, vector<1x2x256xf32>
    %73 = vector.shape_cast %72 : vector<1x2x256xf32> to vector<2x256xf32>
    %74 = vector.shape_cast %71 : vector<2x256xf32> to vector<1x2x256xf32>
    tpu.vector_store %arg6[%c3_32, %c0_33, %c0_34], %74 {strides = array<i32>} : memref<8x2x256xf32, #tpu.memory_space<vmem>>, vector<1x2x256xf32>,
    %c4_35 = arith.constant 4 : index
    %c0_36 = arith.constant 0 : index
    %c0_37 = arith.constant 0 : index
    %75 = vector.load %arg0[%c4_35, %c0_36, %c0_37] : memref<8x2x1xf32, #tpu.memory_space<vmem>>, vector<1x2x1xf32>
    %76 = vector.shape_cast %75 : vector<1x2x1xf32> to vector<2x1xf32>
    %77 = vector.broadcast %76 : vector<2x1xf32> to vector<2x256xf32>
    %78 = vector.broadcast %1 : vector<1x256xf32> to vector<2x256xf32>
    %79 = arith.mulf %77, %78 : vector<2x256xf32>
    %c3_38 = arith.constant 3 : index
    %c0_39 = arith.constant 0 : index
    %c0_40 = arith.constant 0 : index
    %80 = vector.load %arg0[%c3_38, %c0_39, %c0_40] : memref<8x2x1xf32, #tpu.memory_space<vmem>>, vector<1x2x1xf32>
    %81 = vector.shape_cast %80 : vector<1x2x1xf32> to vector<2x1xf32>
    %82 = vector.broadcast %81 : vector<2x1xf32> to vector<2x256xf32>
    %83 = vector.broadcast %2 : vector<1x256xf32> to vector<2x256xf32>
    %84 = arith.mulf %82, %83 : vector<2x256xf32>
    %85 = arith.addf %79, %84 : vector<2x256xf32>
    %86 = vector.broadcast %3 : vector<1x256xf32> to vector<2x256xf32>
    %87 = arith.addf %85, %86 : vector<2x256xf32>
    %c4_41 = arith.constant 4 : index
    %c0_42 = arith.constant 0 : index
    %c0_43 = arith.constant 0 : index
    %88 = vector.load %arg6[%c4_41, %c0_42, %c0_43] : memref<8x2x256xf32, #tpu.memory_space<vmem>>, vector<1x2x256xf32>
    %89 = vector.shape_cast %88 : vector<1x2x256xf32> to vector<2x256xf32>
    %90 = vector.shape_cast %87 : vector<2x256xf32> to vector<1x2x256xf32>
    tpu.vector_store %arg6[%c4_41, %c0_42, %c0_43], %90 {strides = array<i32>} : memref<8x2x256xf32, #tpu.memory_space<vmem>>, vector<1x2x256xf32>,
    %c5_44 = arith.constant 5 : index
    %c0_45 = arith.constant 0 : index
    %c0_46 = arith.constant 0 : index
    %91 = vector.load %arg0[%c5_44, %c0_45, %c0_46] : memref<8x2x1xf32, #tpu.memory_space<vmem>>, vector<1x2x1xf32>
    %92 = vector.shape_cast %91 : vector<1x2x1xf32> to vector<2x1xf32>
    %93 = vector.broadcast %92 : vector<2x1xf32> to vector<2x256xf32>
    %94 = vector.broadcast %1 : vector<1x256xf32> to vector<2x256xf32>
    %95 = arith.mulf %93, %94 : vector<2x256xf32>
    %c2_47 = arith.constant 2 : index
    %c0_48 = arith.constant 0 : index
    %c0_49 = arith.constant 0 : index
    %96 = vector.load %arg0[%c2_47, %c0_48, %c0_49] : memref<8x2x1xf32, #tpu.memory_space<vmem>>, vector<1x2x1xf32>
    %97 = vector.shape_cast %96 : vector<1x2x1xf32> to vector<2x1xf32>
    %98 = vector.broadcast %97 : vector<2x1xf32> to vector<2x256xf32>
    %99 = vector.broadcast %2 : vector<1x256xf32> to vector<2x256xf32>
    %100 = arith.mulf %98, %99 : vector<2x256xf32>
    %101 = arith.addf %95, %100 : vector<2x256xf32>
    %102 = vector.broadcast %3 : vector<1x256xf32> to vector<2x256xf32>
    %103 = arith.addf %101, %102 : vector<2x256xf32>
    %c5_50 = arith.constant 5 : index
    %c0_51 = arith.constant 0 : index
    %c0_52 = arith.constant 0 : index
    %104 = vector.load %arg6[%c5_50, %c0_51, %c0_52] : memref<8x2x256xf32, #tpu.memory_space<vmem>>, vector<1x2x256xf32>
    %105 = vector.shape_cast %104 : vector<1x2x256xf32> to vector<2x256xf32>
    %106 = vector.shape_cast %103 : vector<2x256xf32> to vector<1x2x256xf32>
    tpu.vector_store %arg6[%c5_50, %c0_51, %c0_52], %106 {strides = array<i32>} : memref<8x2x256xf32, #tpu.memory_space<vmem>>, vector<1x2x256xf32>,
    %c6_53 = arith.constant 6 : index
    %c0_54 = arith.constant 0 : index
    %c0_55 = arith.constant 0 : index
    %107 = vector.load %arg0[%c6_53, %c0_54, %c0_55] : memref<8x2x1xf32, #tpu.memory_space<vmem>>, vector<1x2x1xf32>
    %108 = vector.shape_cast %107 : vector<1x2x1xf32> to vector<2x1xf32>
    %109 = vector.broadcast %108 : vector<2x1xf32> to vector<2x256xf32>
    %110 = vector.broadcast %1 : vector<1x256xf32> to vector<2x256xf32>
    %111 = arith.mulf %109, %110 : vector<2x256xf32>
    %c1_56 = arith.constant 1 : index
    %c0_57 = arith.constant 0 : index
    %c0_58 = arith.constant 0 : index
    %112 = vector.load %arg0[%c1_56, %c0_57, %c0_58] : memref<8x2x1xf32, #tpu.memory_space<vmem>>, vector<1x2x1xf32>
    %113 = vector.shape_cast %112 : vector<1x2x1xf32> to vector<2x1xf32>
    %114 = vector.broadcast %113 : vector<2x1xf32> to vector<2x256xf32>
    %115 = vector.broadcast %2 : vector<1x256xf32> to vector<2x256xf32>
    %116 = arith.mulf %114, %115 : vector<2x256xf32>
    %117 = arith.addf %111, %116 : vector<2x256xf32>
    %118 = vector.broadcast %3 : vector<1x256xf32> to vector<2x256xf32>
    %119 = arith.addf %117, %118 : vector<2x256xf32>
    %c6_59 = arith.constant 6 : index
    %c0_60 = arith.constant 0 : index
    %c0_61 = arith.constant 0 : index
    %120 = vector.load %arg6[%c6_59, %c0_60, %c0_61] : memref<8x2x256xf32, #tpu.memory_space<vmem>>, vector<1x2x256xf32>
    %121 = vector.shape_cast %120 : vector<1x2x256xf32> to vector<2x256xf32>
    %122 = vector.shape_cast %119 : vector<2x256xf32> to vector<1x2x256xf32>
    tpu.vector_store %arg6[%c6_59, %c0_60, %c0_61], %122 {strides = array<i32>} : memref<8x2x256xf32, #tpu.memory_space<vmem>>, vector<1x2x256xf32>,
    %c7_62 = arith.constant 7 : index
    %c0_63 = arith.constant 0 : index
    %c0_64 = arith.constant 0 : index
    %123 = vector.load %arg0[%c7_62, %c0_63, %c0_64] : memref<8x2x1xf32, #tpu.memory_space<vmem>>, vector<1x2x1xf32>
    %124 = vector.shape_cast %123 : vector<1x2x1xf32> to vector<2x1xf32>
    %125 = vector.broadcast %124 : vector<2x1xf32> to vector<2x256xf32>
    %126 = vector.broadcast %1 : vector<1x256xf32> to vector<2x256xf32>
    %127 = arith.mulf %125, %126 : vector<2x256xf32>
    %c0_65 = arith.constant 0 : index
    %c0_66 = arith.constant 0 : index
    %c0_67 = arith.constant 0 : index
    %128 = vector.load %arg0[%c0_65, %c0_66, %c0_67] : memref<8x2x1xf32, #tpu.memory_space<vmem>>, vector<1x2x1xf32>
    %129 = vector.shape_cast %128 : vector<1x2x1xf32> to vector<2x1xf32>
    %130 = vector.broadcast %129 : vector<2x1xf32> to vector<2x256xf32>
    %131 = vector.broadcast %2 : vector<1x256xf32> to vector<2x256xf32>
    %132 = arith.mulf %130, %131 : vector<2x256xf32>
    %133 = arith.addf %127, %132 : vector<2x256xf32>
    %134 = vector.broadcast %3 : vector<1x256xf32> to vector<2x256xf32>
    %135 = arith.addf %133, %134 : vector<2x256xf32>
    %c7_68 = arith.constant 7 : index
    %c0_69 = arith.constant 0 : index
    %c0_70 = arith.constant 0 : index
    %136 = vector.load %arg6[%c7_68, %c0_69, %c0_70] : memref<8x2x256xf32, #tpu.memory_space<vmem>>, vector<1x2x256xf32>
    %137 = vector.shape_cast %136 : vector<1x2x256xf32> to vector<2x256xf32>
    %138 = vector.shape_cast %135 : vector<2x256xf32> to vector<1x2x256xf32>
    tpu.vector_store %arg6[%c7_68, %c0_69, %c0_70], %138 {strides = array<i32>} : memref<8x2x256xf32, #tpu.memory_space<vmem>>, vector<1x2x256xf32>,
    %cst = arith.constant 0.000000e+00 : f32
    %139 = vector.broadcast %cst : f32 to vector<2x64xf32>
    %c0_71 = arith.constant 0 : index
    %c0_72 = arith.constant 0 : index
    %c0_73 = arith.constant 0 : index
    %140 = vector.load %arg6[%c0_71, %c0_72, %c0_73] : memref<8x2x256xf32, #tpu.memory_space<vmem>>, vector<1x2x256xf32>
    %141 = vector.shape_cast %140 : vector<1x2x256xf32> to vector<2x256xf32>
    %142 = math.tanh %141 : vector<2x256xf32>
    %143 = vector.broadcast %5 : vector<1x256xf32> to vector<2x256xf32>
    %144 = arith.mulf %142, %143 : vector<2x256xf32>
    %145 = vector.broadcast %6 : vector<1x256xf32> to vector<2x256xf32>
    %146 = arith.addf %144, %145 : vector<2x256xf32>
    %147 = vector.extract_strided_slice %146 {offsets = [0, 0], sizes = [2, 64], strides = [1, 1]} : vector<2x256xf32> to vector<2x64xf32>
    %148 = vector.extract_strided_slice %146 {offsets = [0, 64], sizes = [2, 64], strides = [1, 1]} : vector<2x256xf32> to vector<2x64xf32>
    %149 = vector.extract_strided_slice %146 {offsets = [0, 128], sizes = [2, 64], strides = [1, 1]} : vector<2x256xf32> to vector<2x64xf32>
    %150 = vector.extract_strided_slice %146 {offsets = [0, 192], sizes = [2, 64], strides = [1, 1]} : vector<2x256xf32> to vector<2x64xf32>
    %151 = arith.mulf %148, %139 : vector<2x64xf32>
    %152 = arith.mulf %147, %149 : vector<2x64xf32>
    %153 = arith.addf %151, %152 : vector<2x64xf32>
    %154 = math.tanh %153 : vector<2x64xf32>
    %155 = arith.mulf %150, %154 : vector<2x64xf32>
    %c1_74 = arith.constant 1 : index
    %c0_75 = arith.constant 0 : index
    %c0_76 = arith.constant 0 : index
    %156 = vector.load %arg6[%c1_74, %c0_75, %c0_76] : memref<8x2x256xf32, #tpu.memory_space<vmem>>, vector<1x2x256xf32>
    %157 = vector.shape_cast %156 : vector<1x2x256xf32> to vector<2x256xf32>
    %158 = arith.truncf %155 : vector<2x64xf32> to vector<2x64xbf16>
    %cst_77 = arith.constant dense<0.000000e+00> : vector<2x256xf32>
    %159 = tpu.matmul %158, %7, %cst_77 {dimension_numbers = #tpu.dot_dimension_numbers<[1], [0], [0], [1], [0, 0, 1, 1], [], []>} : vector<2x64xbf16>, vector<64x256xbf16>, vector<2x256xf32> -> vector<2x256xf32>
    %160 = arith.addf %157, %159 : vector<2x256xf32>
    %161 = math.tanh %160 : vector<2x256xf32>
    %162 = vector.broadcast %5 : vector<1x256xf32> to vector<2x256xf32>
    %163 = arith.mulf %161, %162 : vector<2x256xf32>
    %164 = vector.broadcast %6 : vector<1x256xf32> to vector<2x256xf32>
    %165 = arith.addf %163, %164 : vector<2x256xf32>
    %166 = vector.extract_strided_slice %165 {offsets = [0, 0], sizes = [2, 64], strides = [1, 1]} : vector<2x256xf32> to vector<2x64xf32>
    %167 = vector.extract_strided_slice %165 {offsets = [0, 64], sizes = [2, 64], strides = [1, 1]} : vector<2x256xf32> to vector<2x64xf32>
    %168 = vector.extract_strided_slice %165 {offsets = [0, 128], sizes = [2, 64], strides = [1, 1]} : vector<2x256xf32> to vector<2x64xf32>
    %169 = vector.extract_strided_slice %165 {offsets = [0, 192], sizes = [2, 64], strides = [1, 1]} : vector<2x256xf32> to vector<2x64xf32>
    %170 = arith.mulf %167, %153 : vector<2x64xf32>
    %171 = arith.mulf %166, %168 : vector<2x64xf32>
    %172 = arith.addf %170, %171 : vector<2x64xf32>
    %173 = math.tanh %172 : vector<2x64xf32>
    %174 = arith.mulf %169, %173 : vector<2x64xf32>
    %c2_78 = arith.constant 2 : index
    %c0_79 = arith.constant 0 : index
    %c0_80 = arith.constant 0 : index
    %175 = vector.load %arg6[%c2_78, %c0_79, %c0_80] : memref<8x2x256xf32, #tpu.memory_space<vmem>>, vector<1x2x256xf32>
    %176 = vector.shape_cast %175 : vector<1x2x256xf32> to vector<2x256xf32>
    %177 = arith.truncf %174 : vector<2x64xf32> to vector<2x64xbf16>
    %cst_81 = arith.constant dense<0.000000e+00> : vector<2x256xf32>
    %178 = tpu.matmul %177, %7, %cst_81 {dimension_numbers = #tpu.dot_dimension_numbers<[1], [0], [0], [1], [0, 0, 1, 1], [], []>} : vector<2x64xbf16>, vector<64x256xbf16>, vector<2x256xf32> -> vector<2x256xf32>
    %179 = arith.addf %176, %178 : vector<2x256xf32>
    %180 = math.tanh %179 : vector<2x256xf32>
    %181 = vector.broadcast %5 : vector<1x256xf32> to vector<2x256xf32>
    %182 = arith.mulf %180, %181 : vector<2x256xf32>
    %183 = vector.broadcast %6 : vector<1x256xf32> to vector<2x256xf32>
    %184 = arith.addf %182, %183 : vector<2x256xf32>
    %185 = vector.extract_strided_slice %184 {offsets = [0, 0], sizes = [2, 64], strides = [1, 1]} : vector<2x256xf32> to vector<2x64xf32>
    %186 = vector.extract_strided_slice %184 {offsets = [0, 64], sizes = [2, 64], strides = [1, 1]} : vector<2x256xf32> to vector<2x64xf32>
    %187 = vector.extract_strided_slice %184 {offsets = [0, 128], sizes = [2, 64], strides = [1, 1]} : vector<2x256xf32> to vector<2x64xf32>
    %188 = vector.extract_strided_slice %184 {offsets = [0, 192], sizes = [2, 64], strides = [1, 1]} : vector<2x256xf32> to vector<2x64xf32>
    %189 = arith.mulf %186, %172 : vector<2x64xf32>
    %190 = arith.mulf %185, %187 : vector<2x64xf32>
    %191 = arith.addf %189, %190 : vector<2x64xf32>
    %192 = math.tanh %191 : vector<2x64xf32>
    %193 = arith.mulf %188, %192 : vector<2x64xf32>
    %c3_82 = arith.constant 3 : index
    %c0_83 = arith.constant 0 : index
    %c0_84 = arith.constant 0 : index
    %194 = vector.load %arg6[%c3_82, %c0_83, %c0_84] : memref<8x2x256xf32, #tpu.memory_space<vmem>>, vector<1x2x256xf32>
    %195 = vector.shape_cast %194 : vector<1x2x256xf32> to vector<2x256xf32>
    %196 = arith.truncf %193 : vector<2x64xf32> to vector<2x64xbf16>
    %cst_85 = arith.constant dense<0.000000e+00> : vector<2x256xf32>
    %197 = tpu.matmul %196, %7, %cst_85 {dimension_numbers = #tpu.dot_dimension_numbers<[1], [0], [0], [1], [0, 0, 1, 1], [], []>} : vector<2x64xbf16>, vector<64x256xbf16>, vector<2x256xf32> -> vector<2x256xf32>
    %198 = arith.addf %195, %197 : vector<2x256xf32>
    %199 = math.tanh %198 : vector<2x256xf32>
    %200 = vector.broadcast %5 : vector<1x256xf32> to vector<2x256xf32>
    %201 = arith.mulf %199, %200 : vector<2x256xf32>
    %202 = vector.broadcast %6 : vector<1x256xf32> to vector<2x256xf32>
    %203 = arith.addf %201, %202 : vector<2x256xf32>
    %204 = vector.extract_strided_slice %203 {offsets = [0, 0], sizes = [2, 64], strides = [1, 1]} : vector<2x256xf32> to vector<2x64xf32>
    %205 = vector.extract_strided_slice %203 {offsets = [0, 64], sizes = [2, 64], strides = [1, 1]} : vector<2x256xf32> to vector<2x64xf32>
    %206 = vector.extract_strided_slice %203 {offsets = [0, 128], sizes = [2, 64], strides = [1, 1]} : vector<2x256xf32> to vector<2x64xf32>
    %207 = vector.extract_strided_slice %203 {offsets = [0, 192], sizes = [2, 64], strides = [1, 1]} : vector<2x256xf32> to vector<2x64xf32>
    %208 = arith.mulf %205, %191 : vector<2x64xf32>
    %209 = arith.mulf %204, %206 : vector<2x64xf32>
    %210 = arith.addf %208, %209 : vector<2x64xf32>
    %211 = math.tanh %210 : vector<2x64xf32>
    %212 = arith.mulf %207, %211 : vector<2x64xf32>
    %c4_86 = arith.constant 4 : index
    %c0_87 = arith.constant 0 : index
    %c0_88 = arith.constant 0 : index
    %213 = vector.load %arg6[%c4_86, %c0_87, %c0_88] : memref<8x2x256xf32, #tpu.memory_space<vmem>>, vector<1x2x256xf32>
    %214 = vector.shape_cast %213 : vector<1x2x256xf32> to vector<2x256xf32>
    %215 = arith.truncf %212 : vector<2x64xf32> to vector<2x64xbf16>
    %cst_89 = arith.constant dense<0.000000e+00> : vector<2x256xf32>
    %216 = tpu.matmul %215, %7, %cst_89 {dimension_numbers = #tpu.dot_dimension_numbers<[1], [0], [0], [1], [0, 0, 1, 1], [], []>} : vector<2x64xbf16>, vector<64x256xbf16>, vector<2x256xf32> -> vector<2x256xf32>
    %217 = arith.addf %214, %216 : vector<2x256xf32>
    %218 = math.tanh %217 : vector<2x256xf32>
    %219 = vector.broadcast %5 : vector<1x256xf32> to vector<2x256xf32>
    %220 = arith.mulf %218, %219 : vector<2x256xf32>
    %221 = vector.broadcast %6 : vector<1x256xf32> to vector<2x256xf32>
    %222 = arith.addf %220, %221 : vector<2x256xf32>
    %223 = vector.extract_strided_slice %222 {offsets = [0, 0], sizes = [2, 64], strides = [1, 1]} : vector<2x256xf32> to vector<2x64xf32>
    %224 = vector.extract_strided_slice %222 {offsets = [0, 64], sizes = [2, 64], strides = [1, 1]} : vector<2x256xf32> to vector<2x64xf32>
    %225 = vector.extract_strided_slice %222 {offsets = [0, 128], sizes = [2, 64], strides = [1, 1]} : vector<2x256xf32> to vector<2x64xf32>
    %226 = vector.extract_strided_slice %222 {offsets = [0, 192], sizes = [2, 64], strides = [1, 1]} : vector<2x256xf32> to vector<2x64xf32>
    %227 = arith.mulf %224, %210 : vector<2x64xf32>
    %228 = arith.mulf %223, %225 : vector<2x64xf32>
    %229 = arith.addf %227, %228 : vector<2x64xf32>
    %230 = math.tanh %229 : vector<2x64xf32>
    %231 = arith.mulf %226, %230 : vector<2x64xf32>
    %c5_90 = arith.constant 5 : index
    %c0_91 = arith.constant 0 : index
    %c0_92 = arith.constant 0 : index
    %232 = vector.load %arg6[%c5_90, %c0_91, %c0_92] : memref<8x2x256xf32, #tpu.memory_space<vmem>>, vector<1x2x256xf32>
    %233 = vector.shape_cast %232 : vector<1x2x256xf32> to vector<2x256xf32>
    %234 = arith.truncf %231 : vector<2x64xf32> to vector<2x64xbf16>
    %cst_93 = arith.constant dense<0.000000e+00> : vector<2x256xf32>
    %235 = tpu.matmul %234, %7, %cst_93 {dimension_numbers = #tpu.dot_dimension_numbers<[1], [0], [0], [1], [0, 0, 1, 1], [], []>} : vector<2x64xbf16>, vector<64x256xbf16>, vector<2x256xf32> -> vector<2x256xf32>
    %236 = arith.addf %233, %235 : vector<2x256xf32>
    %237 = math.tanh %236 : vector<2x256xf32>
    %238 = vector.broadcast %5 : vector<1x256xf32> to vector<2x256xf32>
    %239 = arith.mulf %237, %238 : vector<2x256xf32>
    %240 = vector.broadcast %6 : vector<1x256xf32> to vector<2x256xf32>
    %241 = arith.addf %239, %240 : vector<2x256xf32>
    %242 = vector.extract_strided_slice %241 {offsets = [0, 0], sizes = [2, 64], strides = [1, 1]} : vector<2x256xf32> to vector<2x64xf32>
    %243 = vector.extract_strided_slice %241 {offsets = [0, 64], sizes = [2, 64], strides = [1, 1]} : vector<2x256xf32> to vector<2x64xf32>
    %244 = vector.extract_strided_slice %241 {offsets = [0, 128], sizes = [2, 64], strides = [1, 1]} : vector<2x256xf32> to vector<2x64xf32>
    %245 = vector.extract_strided_slice %241 {offsets = [0, 192], sizes = [2, 64], strides = [1, 1]} : vector<2x256xf32> to vector<2x64xf32>
    %246 = arith.mulf %243, %229 : vector<2x64xf32>
    %247 = arith.mulf %242, %244 : vector<2x64xf32>
    %248 = arith.addf %246, %247 : vector<2x64xf32>
    %249 = math.tanh %248 : vector<2x64xf32>
    %250 = arith.mulf %245, %249 : vector<2x64xf32>
    %c6_94 = arith.constant 6 : index
    %c0_95 = arith.constant 0 : index
    %c0_96 = arith.constant 0 : index
    %251 = vector.load %arg6[%c6_94, %c0_95, %c0_96] : memref<8x2x256xf32, #tpu.memory_space<vmem>>, vector<1x2x256xf32>
    %252 = vector.shape_cast %251 : vector<1x2x256xf32> to vector<2x256xf32>
    %253 = arith.truncf %250 : vector<2x64xf32> to vector<2x64xbf16>
    %cst_97 = arith.constant dense<0.000000e+00> : vector<2x256xf32>
    %254 = tpu.matmul %253, %7, %cst_97 {dimension_numbers = #tpu.dot_dimension_numbers<[1], [0], [0], [1], [0, 0, 1, 1], [], []>} : vector<2x64xbf16>, vector<64x256xbf16>, vector<2x256xf32> -> vector<2x256xf32>
    %255 = arith.addf %252, %254 : vector<2x256xf32>
    %256 = math.tanh %255 : vector<2x256xf32>
    %257 = vector.broadcast %5 : vector<1x256xf32> to vector<2x256xf32>
    %258 = arith.mulf %256, %257 : vector<2x256xf32>
    %259 = vector.broadcast %6 : vector<1x256xf32> to vector<2x256xf32>
    %260 = arith.addf %258, %259 : vector<2x256xf32>
    %261 = vector.extract_strided_slice %260 {offsets = [0, 0], sizes = [2, 64], strides = [1, 1]} : vector<2x256xf32> to vector<2x64xf32>
    %262 = vector.extract_strided_slice %260 {offsets = [0, 64], sizes = [2, 64], strides = [1, 1]} : vector<2x256xf32> to vector<2x64xf32>
    %263 = vector.extract_strided_slice %260 {offsets = [0, 128], sizes = [2, 64], strides = [1, 1]} : vector<2x256xf32> to vector<2x64xf32>
    %264 = vector.extract_strided_slice %260 {offsets = [0, 192], sizes = [2, 64], strides = [1, 1]} : vector<2x256xf32> to vector<2x64xf32>
    %265 = arith.mulf %262, %248 : vector<2x64xf32>
    %266 = arith.mulf %261, %263 : vector<2x64xf32>
    %267 = arith.addf %265, %266 : vector<2x64xf32>
    %268 = math.tanh %267 : vector<2x64xf32>
    %269 = arith.mulf %264, %268 : vector<2x64xf32>
    %c7_98 = arith.constant 7 : index
    %c0_99 = arith.constant 0 : index
    %c0_100 = arith.constant 0 : index
    %270 = vector.load %arg6[%c7_98, %c0_99, %c0_100] : memref<8x2x256xf32, #tpu.memory_space<vmem>>, vector<1x2x256xf32>
    %271 = vector.shape_cast %270 : vector<1x2x256xf32> to vector<2x256xf32>
    %272 = arith.truncf %269 : vector<2x64xf32> to vector<2x64xbf16>
    %cst_101 = arith.constant dense<0.000000e+00> : vector<2x256xf32>
    %273 = tpu.matmul %272, %7, %cst_101 {dimension_numbers = #tpu.dot_dimension_numbers<[1], [0], [0], [1], [0, 0, 1, 1], [], []>} : vector<2x64xbf16>, vector<64x256xbf16>, vector<2x256xf32> -> vector<2x256xf32>
    %274 = arith.addf %271, %273 : vector<2x256xf32>
    %275 = math.tanh %274 : vector<2x256xf32>
    %276 = vector.broadcast %5 : vector<1x256xf32> to vector<2x256xf32>
    %277 = arith.mulf %275, %276 : vector<2x256xf32>
    %278 = vector.broadcast %6 : vector<1x256xf32> to vector<2x256xf32>
    %279 = arith.addf %277, %278 : vector<2x256xf32>
    %280 = vector.extract_strided_slice %279 {offsets = [0, 0], sizes = [2, 64], strides = [1, 1]} : vector<2x256xf32> to vector<2x64xf32>
    %281 = vector.extract_strided_slice %279 {offsets = [0, 64], sizes = [2, 64], strides = [1, 1]} : vector<2x256xf32> to vector<2x64xf32>
    %282 = vector.extract_strided_slice %279 {offsets = [0, 128], sizes = [2, 64], strides = [1, 1]} : vector<2x256xf32> to vector<2x64xf32>
    %283 = vector.extract_strided_slice %279 {offsets = [0, 192], sizes = [2, 64], strides = [1, 1]} : vector<2x256xf32> to vector<2x64xf32>
    %284 = arith.mulf %281, %267 : vector<2x64xf32>
    %285 = arith.mulf %280, %282 : vector<2x64xf32>
    %286 = arith.addf %284, %285 : vector<2x64xf32>
    %287 = math.tanh %286 : vector<2x64xf32>
    %288 = arith.mulf %283, %287 : vector<2x64xf32>
    %289 = arith.truncf %155 : vector<2x64xf32> to vector<2x64xbf16>
    %290 = arith.truncf %174 : vector<2x64xf32> to vector<2x64xbf16>
    %291 = arith.truncf %193 : vector<2x64xf32> to vector<2x64xbf16>
    %292 = arith.truncf %212 : vector<2x64xf32> to vector<2x64xbf16>
    %293 = arith.truncf %231 : vector<2x64xf32> to vector<2x64xbf16>
    %294 = arith.truncf %250 : vector<2x64xf32> to vector<2x64xbf16>
    %295 = arith.truncf %269 : vector<2x64xf32> to vector<2x64xbf16>
    %296 = arith.truncf %288 : vector<2x64xf32> to vector<2x64xbf16>
    %cst_102 = arith.constant dense<0.000000e+00> : vector<2x256xf32>
    %297 = tpu.matmul %289, %9, %cst_102 {dimension_numbers = #tpu.dot_dimension_numbers<[1], [0], [0], [1], [0, 0, 1, 1], [], []>} : vector<2x64xbf16>, vector<64x256xbf16>, vector<2x256xf32> -> vector<2x256xf32>
    %cst_103 = arith.constant dense<0.000000e+00> : vector<2x256xf32>
    %298 = tpu.matmul %296, %10, %cst_103 {dimension_numbers = #tpu.dot_dimension_numbers<[1], [0], [0], [1], [0, 0, 1, 1], [], []>} : vector<2x64xbf16>, vector<64x256xbf16>, vector<2x256xf32> -> vector<2x256xf32>
    %299 = arith.addf %297, %298 : vector<2x256xf32>
    %300 = vector.broadcast %4 : vector<1x256xf32> to vector<2x256xf32>
    %301 = arith.addf %299, %300 : vector<2x256xf32>
    %c0_104 = arith.constant 0 : index
    %c0_105 = arith.constant 0 : index
    %c0_106 = arith.constant 0 : index
    %302 = vector.load %arg6[%c0_104, %c0_105, %c0_106] : memref<8x2x256xf32, #tpu.memory_space<vmem>>, vector<1x2x256xf32>
    %303 = vector.shape_cast %302 : vector<1x2x256xf32> to vector<2x256xf32>
    %304 = vector.shape_cast %301 : vector<2x256xf32> to vector<1x2x256xf32>
    tpu.vector_store %arg6[%c0_104, %c0_105, %c0_106], %304 {strides = array<i32>} : memref<8x2x256xf32, #tpu.memory_space<vmem>>, vector<1x2x256xf32>,
    %cst_107 = arith.constant dense<0.000000e+00> : vector<2x256xf32>
    %305 = tpu.matmul %290, %9, %cst_107 {dimension_numbers = #tpu.dot_dimension_numbers<[1], [0], [0], [1], [0, 0, 1, 1], [], []>} : vector<2x64xbf16>, vector<64x256xbf16>, vector<2x256xf32> -> vector<2x256xf32>
    %cst_108 = arith.constant dense<0.000000e+00> : vector<2x256xf32>
    %306 = tpu.matmul %295, %10, %cst_108 {dimension_numbers = #tpu.dot_dimension_numbers<[1], [0], [0], [1], [0, 0, 1, 1], [], []>} : vector<2x64xbf16>, vector<64x256xbf16>, vector<2x256xf32> -> vector<2x256xf32>
    %307 = arith.addf %305, %306 : vector<2x256xf32>
    %308 = vector.broadcast %4 : vector<1x256xf32> to vector<2x256xf32>
    %309 = arith.addf %307, %308 : vector<2x256xf32>
    %c1_109 = arith.constant 1 : index
    %c0_110 = arith.constant 0 : index
    %c0_111 = arith.constant 0 : index
    %310 = vector.load %arg6[%c1_109, %c0_110, %c0_111] : memref<8x2x256xf32, #tpu.memory_space<vmem>>, vector<1x2x256xf32>
    %311 = vector.shape_cast %310 : vector<1x2x256xf32> to vector<2x256xf32>
    %312 = vector.shape_cast %309 : vector<2x256xf32> to vector<1x2x256xf32>
    tpu.vector_store %arg6[%c1_109, %c0_110, %c0_111], %312 {strides = array<i32>} : memref<8x2x256xf32, #tpu.memory_space<vmem>>, vector<1x2x256xf32>,
    %cst_112 = arith.constant dense<0.000000e+00> : vector<2x256xf32>
    %313 = tpu.matmul %291, %9, %cst_112 {dimension_numbers = #tpu.dot_dimension_numbers<[1], [0], [0], [1], [0, 0, 1, 1], [], []>} : vector<2x64xbf16>, vector<64x256xbf16>, vector<2x256xf32> -> vector<2x256xf32>
    %cst_113 = arith.constant dense<0.000000e+00> : vector<2x256xf32>
    %314 = tpu.matmul %294, %10, %cst_113 {dimension_numbers = #tpu.dot_dimension_numbers<[1], [0], [0], [1], [0, 0, 1, 1], [], []>} : vector<2x64xbf16>, vector<64x256xbf16>, vector<2x256xf32> -> vector<2x256xf32>
    %315 = arith.addf %313, %314 : vector<2x256xf32>
    %316 = vector.broadcast %4 : vector<1x256xf32> to vector<2x256xf32>
    %317 = arith.addf %315, %316 : vector<2x256xf32>
    %c2_114 = arith.constant 2 : index
    %c0_115 = arith.constant 0 : index
    %c0_116 = arith.constant 0 : index
    %318 = vector.load %arg6[%c2_114, %c0_115, %c0_116] : memref<8x2x256xf32, #tpu.memory_space<vmem>>, vector<1x2x256xf32>
    %319 = vector.shape_cast %318 : vector<1x2x256xf32> to vector<2x256xf32>
    %320 = vector.shape_cast %317 : vector<2x256xf32> to vector<1x2x256xf32>
    tpu.vector_store %arg6[%c2_114, %c0_115, %c0_116], %320 {strides = array<i32>} : memref<8x2x256xf32, #tpu.memory_space<vmem>>, vector<1x2x256xf32>,
    %cst_117 = arith.constant dense<0.000000e+00> : vector<2x256xf32>
    %321 = tpu.matmul %292, %9, %cst_117 {dimension_numbers = #tpu.dot_dimension_numbers<[1], [0], [0], [1], [0, 0, 1, 1], [], []>} : vector<2x64xbf16>, vector<64x256xbf16>, vector<2x256xf32> -> vector<2x256xf32>
    %cst_118 = arith.constant dense<0.000000e+00> : vector<2x256xf32>
    %322 = tpu.matmul %293, %10, %cst_118 {dimension_numbers = #tpu.dot_dimension_numbers<[1], [0], [0], [1], [0, 0, 1, 1], [], []>} : vector<2x64xbf16>, vector<64x256xbf16>, vector<2x256xf32> -> vector<2x256xf32>
    %323 = arith.addf %321, %322 : vector<2x256xf32>
    %324 = vector.broadcast %4 : vector<1x256xf32> to vector<2x256xf32>
    %325 = arith.addf %323, %324 : vector<2x256xf32>
    %c3_119 = arith.constant 3 : index
    %c0_120 = arith.constant 0 : index
    %c0_121 = arith.constant 0 : index
    %326 = vector.load %arg6[%c3_119, %c0_120, %c0_121] : memref<8x2x256xf32, #tpu.memory_space<vmem>>, vector<1x2x256xf32>
    %327 = vector.shape_cast %326 : vector<1x2x256xf32> to vector<2x256xf32>
    %328 = vector.shape_cast %325 : vector<2x256xf32> to vector<1x2x256xf32>
    tpu.vector_store %arg6[%c3_119, %c0_120, %c0_121], %328 {strides = array<i32>} : memref<8x2x256xf32, #tpu.memory_space<vmem>>, vector<1x2x256xf32>,
    %cst_122 = arith.constant dense<0.000000e+00> : vector<2x256xf32>
    %329 = tpu.matmul %293, %9, %cst_122 {dimension_numbers = #tpu.dot_dimension_numbers<[1], [0], [0], [1], [0, 0, 1, 1], [], []>} : vector<2x64xbf16>, vector<64x256xbf16>, vector<2x256xf32> -> vector<2x256xf32>
    %cst_123 = arith.constant dense<0.000000e+00> : vector<2x256xf32>
    %330 = tpu.matmul %292, %10, %cst_123 {dimension_numbers = #tpu.dot_dimension_numbers<[1], [0], [0], [1], [0, 0, 1, 1], [], []>} : vector<2x64xbf16>, vector<64x256xbf16>, vector<2x256xf32> -> vector<2x256xf32>
    %331 = arith.addf %329, %330 : vector<2x256xf32>
    %332 = vector.broadcast %4 : vector<1x256xf32> to vector<2x256xf32>
    %333 = arith.addf %331, %332 : vector<2x256xf32>
    %c4_124 = arith.constant 4 : index
    %c0_125 = arith.constant 0 : index
    %c0_126 = arith.constant 0 : index
    %334 = vector.load %arg6[%c4_124, %c0_125, %c0_126] : memref<8x2x256xf32, #tpu.memory_space<vmem>>, vector<1x2x256xf32>
    %335 = vector.shape_cast %334 : vector<1x2x256xf32> to vector<2x256xf32>
    %336 = vector.shape_cast %333 : vector<2x256xf32> to vector<1x2x256xf32>
    tpu.vector_store %arg6[%c4_124, %c0_125, %c0_126], %336 {strides = array<i32>} : memref<8x2x256xf32, #tpu.memory_space<vmem>>, vector<1x2x256xf32>,
    %cst_127 = arith.constant dense<0.000000e+00> : vector<2x256xf32>
    %337 = tpu.matmul %294, %9, %cst_127 {dimension_numbers = #tpu.dot_dimension_numbers<[1], [0], [0], [1], [0, 0, 1, 1], [], []>} : vector<2x64xbf16>, vector<64x256xbf16>, vector<2x256xf32> -> vector<2x256xf32>
    %cst_128 = arith.constant dense<0.000000e+00> : vector<2x256xf32>
    %338 = tpu.matmul %291, %10, %cst_128 {dimension_numbers = #tpu.dot_dimension_numbers<[1], [0], [0], [1], [0, 0, 1, 1], [], []>} : vector<2x64xbf16>, vector<64x256xbf16>, vector<2x256xf32> -> vector<2x256xf32>
    %339 = arith.addf %337, %338 : vector<2x256xf32>
    %340 = vector.broadcast %4 : vector<1x256xf32> to vector<2x256xf32>
    %341 = arith.addf %339, %340 : vector<2x256xf32>
    %c5_129 = arith.constant 5 : index
    %c0_130 = arith.constant 0 : index
    %c0_131 = arith.constant 0 : index
    %342 = vector.load %arg6[%c5_129, %c0_130, %c0_131] : memref<8x2x256xf32, #tpu.memory_space<vmem>>, vector<1x2x256xf32>
    %343 = vector.shape_cast %342 : vector<1x2x256xf32> to vector<2x256xf32>
    %344 = vector.shape_cast %341 : vector<2x256xf32> to vector<1x2x256xf32>
    tpu.vector_store %arg6[%c5_129, %c0_130, %c0_131], %344 {strides = array<i32>} : memref<8x2x256xf32, #tpu.memory_space<vmem>>, vector<1x2x256xf32>,
    %cst_132 = arith.constant dense<0.000000e+00> : vector<2x256xf32>
    %345 = tpu.matmul %295, %9, %cst_132 {dimension_numbers = #tpu.dot_dimension_numbers<[1], [0], [0], [1], [0, 0, 1, 1], [], []>} : vector<2x64xbf16>, vector<64x256xbf16>, vector<2x256xf32> -> vector<2x256xf32>
    %cst_133 = arith.constant dense<0.000000e+00> : vector<2x256xf32>
    %346 = tpu.matmul %290, %10, %cst_133 {dimension_numbers = #tpu.dot_dimension_numbers<[1], [0], [0], [1], [0, 0, 1, 1], [], []>} : vector<2x64xbf16>, vector<64x256xbf16>, vector<2x256xf32> -> vector<2x256xf32>
    %347 = arith.addf %345, %346 : vector<2x256xf32>
    %348 = vector.broadcast %4 : vector<1x256xf32> to vector<2x256xf32>
    %349 = arith.addf %347, %348 : vector<2x256xf32>
    %c6_134 = arith.constant 6 : index
    %c0_135 = arith.constant 0 : index
    %c0_136 = arith.constant 0 : index
    %350 = vector.load %arg6[%c6_134, %c0_135, %c0_136] : memref<8x2x256xf32, #tpu.memory_space<vmem>>, vector<1x2x256xf32>
    %351 = vector.shape_cast %350 : vector<1x2x256xf32> to vector<2x256xf32>
    %352 = vector.shape_cast %349 : vector<2x256xf32> to vector<1x2x256xf32>
    tpu.vector_store %arg6[%c6_134, %c0_135, %c0_136], %352 {strides = array<i32>} : memref<8x2x256xf32, #tpu.memory_space<vmem>>, vector<1x2x256xf32>,
    %cst_137 = arith.constant dense<0.000000e+00> : vector<2x256xf32>
    %353 = tpu.matmul %296, %9, %cst_137 {dimension_numbers = #tpu.dot_dimension_numbers<[1], [0], [0], [1], [0, 0, 1, 1], [], []>} : vector<2x64xbf16>, vector<64x256xbf16>, vector<2x256xf32> -> vector<2x256xf32>
    %cst_138 = arith.constant dense<0.000000e+00> : vector<2x256xf32>
    %354 = tpu.matmul %289, %10, %cst_138 {dimension_numbers = #tpu.dot_dimension_numbers<[1], [0], [0], [1], [0, 0, 1, 1], [], []>} : vector<2x64xbf16>, vector<64x256xbf16>, vector<2x256xf32> -> vector<2x256xf32>
    %355 = arith.addf %353, %354 : vector<2x256xf32>
    %356 = vector.broadcast %4 : vector<1x256xf32> to vector<2x256xf32>
    %357 = arith.addf %355, %356 : vector<2x256xf32>
    %c7_139 = arith.constant 7 : index
    %c0_140 = arith.constant 0 : index
    %c0_141 = arith.constant 0 : index
    %358 = vector.load %arg6[%c7_139, %c0_140, %c0_141] : memref<8x2x256xf32, #tpu.memory_space<vmem>>, vector<1x2x256xf32>
    %359 = vector.shape_cast %358 : vector<1x2x256xf32> to vector<2x256xf32>
    %360 = vector.shape_cast %357 : vector<2x256xf32> to vector<1x2x256xf32>
    tpu.vector_store %arg6[%c7_139, %c0_140, %c0_141], %360 {strides = array<i32>} : memref<8x2x256xf32, #tpu.memory_space<vmem>>, vector<1x2x256xf32>,
    %cst_142 = arith.constant 0.000000e+00 : f32
    %361 = vector.broadcast %cst_142 : f32 to vector<2x64xf32>
    %c0_143 = arith.constant 0 : index
    %c0_144 = arith.constant 0 : index
    %c0_145 = arith.constant 0 : index
    %362 = vector.load %arg6[%c0_143, %c0_144, %c0_145] : memref<8x2x256xf32, #tpu.memory_space<vmem>>, vector<1x2x256xf32>
    %363 = vector.shape_cast %362 : vector<1x2x256xf32> to vector<2x256xf32>
    %364 = math.tanh %363 : vector<2x256xf32>
    %365 = vector.broadcast %5 : vector<1x256xf32> to vector<2x256xf32>
    %366 = arith.mulf %364, %365 : vector<2x256xf32>
    %367 = vector.broadcast %6 : vector<1x256xf32> to vector<2x256xf32>
    %368 = arith.addf %366, %367 : vector<2x256xf32>
    %369 = vector.extract_strided_slice %368 {offsets = [0, 0], sizes = [2, 64], strides = [1, 1]} : vector<2x256xf32> to vector<2x64xf32>
    %370 = vector.extract_strided_slice %368 {offsets = [0, 64], sizes = [2, 64], strides = [1, 1]} : vector<2x256xf32> to vector<2x64xf32>
    %371 = vector.extract_strided_slice %368 {offsets = [0, 128], sizes = [2, 64], strides = [1, 1]} : vector<2x256xf32> to vector<2x64xf32>
    %372 = vector.extract_strided_slice %368 {offsets = [0, 192], sizes = [2, 64], strides = [1, 1]} : vector<2x256xf32> to vector<2x64xf32>
    %373 = arith.mulf %370, %361 : vector<2x64xf32>
    %374 = arith.mulf %369, %371 : vector<2x64xf32>
    %375 = arith.addf %373, %374 : vector<2x64xf32>
    %376 = math.tanh %375 : vector<2x64xf32>
    %377 = arith.mulf %372, %376 : vector<2x64xf32>
    %c1_146 = arith.constant 1 : index
    %c0_147 = arith.constant 0 : index
    %c0_148 = arith.constant 0 : index
    %378 = vector.load %arg6[%c1_146, %c0_147, %c0_148] : memref<8x2x256xf32, #tpu.memory_space<vmem>>, vector<1x2x256xf32>
    %379 = vector.shape_cast %378 : vector<1x2x256xf32> to vector<2x256xf32>
    %380 = arith.truncf %377 : vector<2x64xf32> to vector<2x64xbf16>
    %cst_149 = arith.constant dense<0.000000e+00> : vector<2x256xf32>
    %381 = tpu.matmul %380, %8, %cst_149 {dimension_numbers = #tpu.dot_dimension_numbers<[1], [0], [0], [1], [0, 0, 1, 1], [], []>} : vector<2x64xbf16>, vector<64x256xbf16>, vector<2x256xf32> -> vector<2x256xf32>
    %382 = arith.addf %379, %381 : vector<2x256xf32>
    %383 = math.tanh %382 : vector<2x256xf32>
    %384 = vector.broadcast %5 : vector<1x256xf32> to vector<2x256xf32>
    %385 = arith.mulf %383, %384 : vector<2x256xf32>
    %386 = vector.broadcast %6 : vector<1x256xf32> to vector<2x256xf32>
    %387 = arith.addf %385, %386 : vector<2x256xf32>
    %388 = vector.extract_strided_slice %387 {offsets = [0, 0], sizes = [2, 64], strides = [1, 1]} : vector<2x256xf32> to vector<2x64xf32>
    %389 = vector.extract_strided_slice %387 {offsets = [0, 64], sizes = [2, 64], strides = [1, 1]} : vector<2x256xf32> to vector<2x64xf32>
    %390 = vector.extract_strided_slice %387 {offsets = [0, 128], sizes = [2, 64], strides = [1, 1]} : vector<2x256xf32> to vector<2x64xf32>
    %391 = vector.extract_strided_slice %387 {offsets = [0, 192], sizes = [2, 64], strides = [1, 1]} : vector<2x256xf32> to vector<2x64xf32>
    %392 = arith.mulf %389, %375 : vector<2x64xf32>
    %393 = arith.mulf %388, %390 : vector<2x64xf32>
    %394 = arith.addf %392, %393 : vector<2x64xf32>
    %395 = math.tanh %394 : vector<2x64xf32>
    %396 = arith.mulf %391, %395 : vector<2x64xf32>
    %c2_150 = arith.constant 2 : index
    %c0_151 = arith.constant 0 : index
    %c0_152 = arith.constant 0 : index
    %397 = vector.load %arg6[%c2_150, %c0_151, %c0_152] : memref<8x2x256xf32, #tpu.memory_space<vmem>>, vector<1x2x256xf32>
    %398 = vector.shape_cast %397 : vector<1x2x256xf32> to vector<2x256xf32>
    %399 = arith.truncf %396 : vector<2x64xf32> to vector<2x64xbf16>
    %cst_153 = arith.constant dense<0.000000e+00> : vector<2x256xf32>
    %400 = tpu.matmul %399, %8, %cst_153 {dimension_numbers = #tpu.dot_dimension_numbers<[1], [0], [0], [1], [0, 0, 1, 1], [], []>} : vector<2x64xbf16>, vector<64x256xbf16>, vector<2x256xf32> -> vector<2x256xf32>
    %401 = arith.addf %398, %400 : vector<2x256xf32>
    %402 = math.tanh %401 : vector<2x256xf32>
    %403 = vector.broadcast %5 : vector<1x256xf32> to vector<2x256xf32>
    %404 = arith.mulf %402, %403 : vector<2x256xf32>
    %405 = vector.broadcast %6 : vector<1x256xf32> to vector<2x256xf32>
    %406 = arith.addf %404, %405 : vector<2x256xf32>
    %407 = vector.extract_strided_slice %406 {offsets = [0, 0], sizes = [2, 64], strides = [1, 1]} : vector<2x256xf32> to vector<2x64xf32>
    %408 = vector.extract_strided_slice %406 {offsets = [0, 64], sizes = [2, 64], strides = [1, 1]} : vector<2x256xf32> to vector<2x64xf32>
    %409 = vector.extract_strided_slice %406 {offsets = [0, 128], sizes = [2, 64], strides = [1, 1]} : vector<2x256xf32> to vector<2x64xf32>
    %410 = vector.extract_strided_slice %406 {offsets = [0, 192], sizes = [2, 64], strides = [1, 1]} : vector<2x256xf32> to vector<2x64xf32>
    %411 = arith.mulf %408, %394 : vector<2x64xf32>
    %412 = arith.mulf %407, %409 : vector<2x64xf32>
    %413 = arith.addf %411, %412 : vector<2x64xf32>
    %414 = math.tanh %413 : vector<2x64xf32>
    %415 = arith.mulf %410, %414 : vector<2x64xf32>
    %c3_154 = arith.constant 3 : index
    %c0_155 = arith.constant 0 : index
    %c0_156 = arith.constant 0 : index
    %416 = vector.load %arg6[%c3_154, %c0_155, %c0_156] : memref<8x2x256xf32, #tpu.memory_space<vmem>>, vector<1x2x256xf32>
    %417 = vector.shape_cast %416 : vector<1x2x256xf32> to vector<2x256xf32>
    %418 = arith.truncf %415 : vector<2x64xf32> to vector<2x64xbf16>
    %cst_157 = arith.constant dense<0.000000e+00> : vector<2x256xf32>
    %419 = tpu.matmul %418, %8, %cst_157 {dimension_numbers = #tpu.dot_dimension_numbers<[1], [0], [0], [1], [0, 0, 1, 1], [], []>} : vector<2x64xbf16>, vector<64x256xbf16>, vector<2x256xf32> -> vector<2x256xf32>
    %420 = arith.addf %417, %419 : vector<2x256xf32>
    %421 = math.tanh %420 : vector<2x256xf32>
    %422 = vector.broadcast %5 : vector<1x256xf32> to vector<2x256xf32>
    %423 = arith.mulf %421, %422 : vector<2x256xf32>
    %424 = vector.broadcast %6 : vector<1x256xf32> to vector<2x256xf32>
    %425 = arith.addf %423, %424 : vector<2x256xf32>
    %426 = vector.extract_strided_slice %425 {offsets = [0, 0], sizes = [2, 64], strides = [1, 1]} : vector<2x256xf32> to vector<2x64xf32>
    %427 = vector.extract_strided_slice %425 {offsets = [0, 64], sizes = [2, 64], strides = [1, 1]} : vector<2x256xf32> to vector<2x64xf32>
    %428 = vector.extract_strided_slice %425 {offsets = [0, 128], sizes = [2, 64], strides = [1, 1]} : vector<2x256xf32> to vector<2x64xf32>
    %429 = vector.extract_strided_slice %425 {offsets = [0, 192], sizes = [2, 64], strides = [1, 1]} : vector<2x256xf32> to vector<2x64xf32>
    %430 = arith.mulf %427, %413 : vector<2x64xf32>
    %431 = arith.mulf %426, %428 : vector<2x64xf32>
    %432 = arith.addf %430, %431 : vector<2x64xf32>
    %433 = math.tanh %432 : vector<2x64xf32>
    %434 = arith.mulf %429, %433 : vector<2x64xf32>
    %c4_158 = arith.constant 4 : index
    %c0_159 = arith.constant 0 : index
    %c0_160 = arith.constant 0 : index
    %435 = vector.load %arg6[%c4_158, %c0_159, %c0_160] : memref<8x2x256xf32, #tpu.memory_space<vmem>>, vector<1x2x256xf32>
    %436 = vector.shape_cast %435 : vector<1x2x256xf32> to vector<2x256xf32>
    %437 = arith.truncf %434 : vector<2x64xf32> to vector<2x64xbf16>
    %cst_161 = arith.constant dense<0.000000e+00> : vector<2x256xf32>
    %438 = tpu.matmul %437, %8, %cst_161 {dimension_numbers = #tpu.dot_dimension_numbers<[1], [0], [0], [1], [0, 0, 1, 1], [], []>} : vector<2x64xbf16>, vector<64x256xbf16>, vector<2x256xf32> -> vector<2x256xf32>
    %439 = arith.addf %436, %438 : vector<2x256xf32>
    %440 = math.tanh %439 : vector<2x256xf32>
    %441 = vector.broadcast %5 : vector<1x256xf32> to vector<2x256xf32>
    %442 = arith.mulf %440, %441 : vector<2x256xf32>
    %443 = vector.broadcast %6 : vector<1x256xf32> to vector<2x256xf32>
    %444 = arith.addf %442, %443 : vector<2x256xf32>
    %445 = vector.extract_strided_slice %444 {offsets = [0, 0], sizes = [2, 64], strides = [1, 1]} : vector<2x256xf32> to vector<2x64xf32>
    %446 = vector.extract_strided_slice %444 {offsets = [0, 64], sizes = [2, 64], strides = [1, 1]} : vector<2x256xf32> to vector<2x64xf32>
    %447 = vector.extract_strided_slice %444 {offsets = [0, 128], sizes = [2, 64], strides = [1, 1]} : vector<2x256xf32> to vector<2x64xf32>
    %448 = vector.extract_strided_slice %444 {offsets = [0, 192], sizes = [2, 64], strides = [1, 1]} : vector<2x256xf32> to vector<2x64xf32>
    %449 = arith.mulf %446, %432 : vector<2x64xf32>
    %450 = arith.mulf %445, %447 : vector<2x64xf32>
    %451 = arith.addf %449, %450 : vector<2x64xf32>
    %452 = math.tanh %451 : vector<2x64xf32>
    %453 = arith.mulf %448, %452 : vector<2x64xf32>
    %c5_162 = arith.constant 5 : index
    %c0_163 = arith.constant 0 : index
    %c0_164 = arith.constant 0 : index
    %454 = vector.load %arg6[%c5_162, %c0_163, %c0_164] : memref<8x2x256xf32, #tpu.memory_space<vmem>>, vector<1x2x256xf32>
    %455 = vector.shape_cast %454 : vector<1x2x256xf32> to vector<2x256xf32>
    %456 = arith.truncf %453 : vector<2x64xf32> to vector<2x64xbf16>
    %cst_165 = arith.constant dense<0.000000e+00> : vector<2x256xf32>
    %457 = tpu.matmul %456, %8, %cst_165 {dimension_numbers = #tpu.dot_dimension_numbers<[1], [0], [0], [1], [0, 0, 1, 1], [], []>} : vector<2x64xbf16>, vector<64x256xbf16>, vector<2x256xf32> -> vector<2x256xf32>
    %458 = arith.addf %455, %457 : vector<2x256xf32>
    %459 = math.tanh %458 : vector<2x256xf32>
    %460 = vector.broadcast %5 : vector<1x256xf32> to vector<2x256xf32>
    %461 = arith.mulf %459, %460 : vector<2x256xf32>
    %462 = vector.broadcast %6 : vector<1x256xf32> to vector<2x256xf32>
    %463 = arith.addf %461, %462 : vector<2x256xf32>
    %464 = vector.extract_strided_slice %463 {offsets = [0, 0], sizes = [2, 64], strides = [1, 1]} : vector<2x256xf32> to vector<2x64xf32>
    %465 = vector.extract_strided_slice %463 {offsets = [0, 64], sizes = [2, 64], strides = [1, 1]} : vector<2x256xf32> to vector<2x64xf32>
    %466 = vector.extract_strided_slice %463 {offsets = [0, 128], sizes = [2, 64], strides = [1, 1]} : vector<2x256xf32> to vector<2x64xf32>
    %467 = vector.extract_strided_slice %463 {offsets = [0, 192], sizes = [2, 64], strides = [1, 1]} : vector<2x256xf32> to vector<2x64xf32>
    %468 = arith.mulf %465, %451 : vector<2x64xf32>
    %469 = arith.mulf %464, %466 : vector<2x64xf32>
    %470 = arith.addf %468, %469 : vector<2x64xf32>
    %471 = math.tanh %470 : vector<2x64xf32>
    %472 = arith.mulf %467, %471 : vector<2x64xf32>
    %c6_166 = arith.constant 6 : index
    %c0_167 = arith.constant 0 : index
    %c0_168 = arith.constant 0 : index
    %473 = vector.load %arg6[%c6_166, %c0_167, %c0_168] : memref<8x2x256xf32, #tpu.memory_space<vmem>>, vector<1x2x256xf32>
    %474 = vector.shape_cast %473 : vector<1x2x256xf32> to vector<2x256xf32>
    %475 = arith.truncf %472 : vector<2x64xf32> to vector<2x64xbf16>
    %cst_169 = arith.constant dense<0.000000e+00> : vector<2x256xf32>
    %476 = tpu.matmul %475, %8, %cst_169 {dimension_numbers = #tpu.dot_dimension_numbers<[1], [0], [0], [1], [0, 0, 1, 1], [], []>} : vector<2x64xbf16>, vector<64x256xbf16>, vector<2x256xf32> -> vector<2x256xf32>
    %477 = arith.addf %474, %476 : vector<2x256xf32>
    %478 = math.tanh %477 : vector<2x256xf32>
    %479 = vector.broadcast %5 : vector<1x256xf32> to vector<2x256xf32>
    %480 = arith.mulf %478, %479 : vector<2x256xf32>
    %481 = vector.broadcast %6 : vector<1x256xf32> to vector<2x256xf32>
    %482 = arith.addf %480, %481 : vector<2x256xf32>
    %483 = vector.extract_strided_slice %482 {offsets = [0, 0], sizes = [2, 64], strides = [1, 1]} : vector<2x256xf32> to vector<2x64xf32>
    %484 = vector.extract_strided_slice %482 {offsets = [0, 64], sizes = [2, 64], strides = [1, 1]} : vector<2x256xf32> to vector<2x64xf32>
    %485 = vector.extract_strided_slice %482 {offsets = [0, 128], sizes = [2, 64], strides = [1, 1]} : vector<2x256xf32> to vector<2x64xf32>
    %486 = vector.extract_strided_slice %482 {offsets = [0, 192], sizes = [2, 64], strides = [1, 1]} : vector<2x256xf32> to vector<2x64xf32>
    %487 = arith.mulf %484, %470 : vector<2x64xf32>
    %488 = arith.mulf %483, %485 : vector<2x64xf32>
    %489 = arith.addf %487, %488 : vector<2x64xf32>
    %490 = math.tanh %489 : vector<2x64xf32>
    %491 = arith.mulf %486, %490 : vector<2x64xf32>
    %c7_170 = arith.constant 7 : index
    %c0_171 = arith.constant 0 : index
    %c0_172 = arith.constant 0 : index
    %492 = vector.load %arg6[%c7_170, %c0_171, %c0_172] : memref<8x2x256xf32, #tpu.memory_space<vmem>>, vector<1x2x256xf32>
    %493 = vector.shape_cast %492 : vector<1x2x256xf32> to vector<2x256xf32>
    %494 = arith.truncf %491 : vector<2x64xf32> to vector<2x64xbf16>
    %cst_173 = arith.constant dense<0.000000e+00> : vector<2x256xf32>
    %495 = tpu.matmul %494, %8, %cst_173 {dimension_numbers = #tpu.dot_dimension_numbers<[1], [0], [0], [1], [0, 0, 1, 1], [], []>} : vector<2x64xbf16>, vector<64x256xbf16>, vector<2x256xf32> -> vector<2x256xf32>
    %496 = arith.addf %493, %495 : vector<2x256xf32>
    %497 = math.tanh %496 : vector<2x256xf32>
    %498 = vector.broadcast %5 : vector<1x256xf32> to vector<2x256xf32>
    %499 = arith.mulf %497, %498 : vector<2x256xf32>
    %500 = vector.broadcast %6 : vector<1x256xf32> to vector<2x256xf32>
    %501 = arith.addf %499, %500 : vector<2x256xf32>
    %502 = vector.extract_strided_slice %501 {offsets = [0, 0], sizes = [2, 64], strides = [1, 1]} : vector<2x256xf32> to vector<2x64xf32>
    %503 = vector.extract_strided_slice %501 {offsets = [0, 64], sizes = [2, 64], strides = [1, 1]} : vector<2x256xf32> to vector<2x64xf32>
    %504 = vector.extract_strided_slice %501 {offsets = [0, 128], sizes = [2, 64], strides = [1, 1]} : vector<2x256xf32> to vector<2x64xf32>
    %505 = vector.extract_strided_slice %501 {offsets = [0, 192], sizes = [2, 64], strides = [1, 1]} : vector<2x256xf32> to vector<2x64xf32>
    %506 = arith.mulf %503, %489 : vector<2x64xf32>
    %507 = arith.mulf %502, %504 : vector<2x64xf32>
    %508 = arith.addf %506, %507 : vector<2x64xf32>
    %509 = math.tanh %508 : vector<2x64xf32>
    %510 = arith.mulf %505, %509 : vector<2x64xf32>
    %511 = tpu.iota {dimensions = array<i32: 1>} : vector<2x64xi32>
    %c32_i32 = arith.constant 32 : i32
    %512 = vector.broadcast %c32_i32 : i32 to vector<2x64xi32>
    %513 = arith.cmpi slt, %511, %512 : vector<2x64xi32>
    %514 = arith.select %513, %377, %510 : vector<2x64xi1>, vector<2x64xf32>
    %515 = arith.select %513, %396, %491 : vector<2x64xi1>, vector<2x64xf32>
    %516 = arith.select %513, %415, %472 : vector<2x64xi1>, vector<2x64xf32>
    %517 = arith.select %513, %434, %453 : vector<2x64xi1>, vector<2x64xf32>
    %518 = arith.select %513, %453, %434 : vector<2x64xi1>, vector<2x64xf32>
    %519 = arith.select %513, %472, %415 : vector<2x64xi1>, vector<2x64xf32>
    %520 = arith.select %513, %491, %396 : vector<2x64xi1>, vector<2x64xf32>
    %521 = arith.select %513, %510, %377 : vector<2x64xi1>, vector<2x64xf32>
    %c0_174 = arith.constant 0 : index
    %c0_175 = arith.constant 0 : index
    %522 = vector.load %arg3[%c0_174, %c0_175] : memref<8x64xf32, #tpu.memory_space<vmem>>, vector<8x64xf32>
    %523 = vector.extract_strided_slice %522 {offsets = [0, 0], sizes = [1, 64], strides = [1, 1]} : vector<8x64xf32> to vector<1x64xf32>
    %524 = vector.broadcast %523 : vector<1x64xf32> to vector<2x64xf32>
    %525 = arith.mulf %514, %524 : vector<2x64xf32>
    %cst_176 = arith.constant dense<0.000000e+00> : vector<2xf32>
    %526 = vector.multi_reduction <add>, %525, %cst_176 [1] : vector<2x64xf32> to vector<2xf32>
    %527 = vector.shape_cast %526 : vector<2xf32> to vector<2x1xf32>
    %528 = vector.broadcast %523 : vector<1x64xf32> to vector<2x64xf32>
    %529 = arith.mulf %515, %528 : vector<2x64xf32>
    %cst_177 = arith.constant dense<0.000000e+00> : vector<2xf32>
    %530 = vector.multi_reduction <add>, %529, %cst_177 [1] : vector<2x64xf32> to vector<2xf32>
    %531 = vector.shape_cast %530 : vector<2xf32> to vector<2x1xf32>
    %532 = vector.broadcast %523 : vector<1x64xf32> to vector<2x64xf32>
    %533 = arith.mulf %516, %532 : vector<2x64xf32>
    %cst_178 = arith.constant dense<0.000000e+00> : vector<2xf32>
    %534 = vector.multi_reduction <add>, %533, %cst_178 [1] : vector<2x64xf32> to vector<2xf32>
    %535 = vector.shape_cast %534 : vector<2xf32> to vector<2x1xf32>
    %536 = vector.broadcast %523 : vector<1x64xf32> to vector<2x64xf32>
    %537 = arith.mulf %517, %536 : vector<2x64xf32>
    %cst_179 = arith.constant dense<0.000000e+00> : vector<2xf32>
    %538 = vector.multi_reduction <add>, %537, %cst_179 [1] : vector<2x64xf32> to vector<2xf32>
    %539 = vector.shape_cast %538 : vector<2xf32> to vector<2x1xf32>
    %540 = vector.broadcast %523 : vector<1x64xf32> to vector<2x64xf32>
    %541 = arith.mulf %518, %540 : vector<2x64xf32>
    %cst_180 = arith.constant dense<0.000000e+00> : vector<2xf32>
    %542 = vector.multi_reduction <add>, %541, %cst_180 [1] : vector<2x64xf32> to vector<2xf32>
    %543 = vector.shape_cast %542 : vector<2xf32> to vector<2x1xf32>
    %544 = vector.broadcast %523 : vector<1x64xf32> to vector<2x64xf32>
    %545 = arith.mulf %519, %544 : vector<2x64xf32>
    %cst_181 = arith.constant dense<0.000000e+00> : vector<2xf32>
    %546 = vector.multi_reduction <add>, %545, %cst_181 [1] : vector<2x64xf32> to vector<2xf32>
    %547 = vector.shape_cast %546 : vector<2xf32> to vector<2x1xf32>
    %548 = vector.broadcast %523 : vector<1x64xf32> to vector<2x64xf32>
    %549 = arith.mulf %520, %548 : vector<2x64xf32>
    %cst_182 = arith.constant dense<0.000000e+00> : vector<2xf32>
    %550 = vector.multi_reduction <add>, %549, %cst_182 [1] : vector<2x64xf32> to vector<2xf32>
    %551 = vector.shape_cast %550 : vector<2xf32> to vector<2x1xf32>
    %552 = vector.broadcast %523 : vector<1x64xf32> to vector<2x64xf32>
    %553 = arith.mulf %521, %552 : vector<2x64xf32>
    %cst_183 = arith.constant dense<0.000000e+00> : vector<2xf32>
    %554 = vector.multi_reduction <add>, %553, %cst_183 [1] : vector<2x64xf32> to vector<2xf32>
    %555 = vector.shape_cast %554 : vector<2xf32> to vector<2x1xf32>
    %556 = tpu.concatenate %527, %531, %535, %539, %543, %547, %551, %555 in 1 : vector<2x1xf32>, vector<2x1xf32>, vector<2x1xf32>, vector<2x1xf32>, vector<2x1xf32>, vector<2x1xf32>, vector<2x1xf32>, vector<2x1xf32> -> vector<2x8xf32>
    %cst_184 = arith.constant dense<0xFF800000> : vector<2xf32>
    %557 = vector.multi_reduction <maximumf>, %556, %cst_184 [1] : vector<2x8xf32> to vector<2xf32>
    %558 = vector.shape_cast %557 : vector<2xf32> to vector<2x1xf32>
    %559 = vector.broadcast %558 : vector<2x1xf32> to vector<2x8xf32>
    %560 = arith.subf %556, %559 : vector<2x8xf32>
    %561 = math.exp %560 : vector<2x8xf32>
    %cst_185 = arith.constant dense<0.000000e+00> : vector<2xf32>
    %562 = vector.multi_reduction <add>, %561, %cst_185 [1] : vector<2x8xf32> to vector<2xf32>
    %563 = vector.shape_cast %562 : vector<2xf32> to vector<2x1xf32>
    %564 = tpu.reciprocal %563 {approx = true} : vector<2x1xf32> -> vector<2x1xf32>
    %565 = vector.broadcast %564 : vector<2x1xf32> to vector<2x8xf32>
    %566 = arith.mulf %561, %565 : vector<2x8xf32>
    %c0_186 = arith.constant 0 : index
    %c0_187 = arith.constant 0 : index
    %567 = vector.load %arg5[%c0_186, %c0_187] : memref<2x8xf32, #tpu.memory_space<vmem>>, vector<2x8xf32>
    tpu.vector_store %arg5[%c0_186, %c0_187], %566 {strides = array<i32>} : memref<2x8xf32, #tpu.memory_space<vmem>>, vector<2x8xf32>,
    %568 = vector.extract_strided_slice %566 {offsets = [0, 0], sizes = [2, 1], strides = [1, 1]} : vector<2x8xf32> to vector<2x1xf32>
    %569 = vector.broadcast %568 : vector<2x1xf32> to vector<2x64xf32>
    %570 = arith.mulf %514, %569 : vector<2x64xf32>
    %571 = vector.extract_strided_slice %566 {offsets = [0, 1], sizes = [2, 1], strides = [1, 1]} : vector<2x8xf32> to vector<2x1xf32>
    %572 = vector.broadcast %571 : vector<2x1xf32> to vector<2x64xf32>
    %573 = arith.mulf %515, %572 : vector<2x64xf32>
    %574 = arith.addf %570, %573 : vector<2x64xf32>
    %575 = vector.extract_strided_slice %566 {offsets = [0, 2], sizes = [2, 1], strides = [1, 1]} : vector<2x8xf32> to vector<2x1xf32>
    %576 = vector.broadcast %575 : vector<2x1xf32> to vector<2x64xf32>
    %577 = arith.mulf %516, %576 : vector<2x64xf32>
    %578 = arith.addf %574, %577 : vector<2x64xf32>
    %579 = vector.extract_strided_slice %566 {offsets = [0, 3], sizes = [2, 1], strides = [1, 1]} : vector<2x8xf32> to vector<2x1xf32>
    %580 = vector.broadcast %579 : vector<2x1xf32> to vector<2x64xf32>
    %581 = arith.mulf %517, %580 : vector<2x64xf32>
    %582 = arith.addf %578, %581 : vector<2x64xf32>
    %583 = vector.extract_strided_slice %566 {offsets = [0, 4], sizes = [2, 1], strides = [1, 1]} : vector<2x8xf32> to vector<2x1xf32>
    %584 = vector.broadcast %583 : vector<2x1xf32> to vector<2x64xf32>
    %585 = arith.mulf %518, %584 : vector<2x64xf32>
    %586 = arith.addf %582, %585 : vector<2x64xf32>
    %587 = vector.extract_strided_slice %566 {offsets = [0, 5], sizes = [2, 1], strides = [1, 1]} : vector<2x8xf32> to vector<2x1xf32>
    %588 = vector.broadcast %587 : vector<2x1xf32> to vector<2x64xf32>
    %589 = arith.mulf %519, %588 : vector<2x64xf32>
    %590 = arith.addf %586, %589 : vector<2x64xf32>
    %591 = vector.extract_strided_slice %566 {offsets = [0, 6], sizes = [2, 1], strides = [1, 1]} : vector<2x8xf32> to vector<2x1xf32>
    %592 = vector.broadcast %591 : vector<2x1xf32> to vector<2x64xf32>
    %593 = arith.mulf %520, %592 : vector<2x64xf32>
    %594 = arith.addf %590, %593 : vector<2x64xf32>
    %595 = vector.extract_strided_slice %566 {offsets = [0, 7], sizes = [2, 1], strides = [1, 1]} : vector<2x8xf32> to vector<2x1xf32>
    %596 = vector.broadcast %595 : vector<2x1xf32> to vector<2x64xf32>
    %597 = arith.mulf %521, %596 : vector<2x64xf32>
    %598 = arith.addf %594, %597 : vector<2x64xf32>
    %599 = vector.extract_strided_slice %522 {offsets = [1, 0], sizes = [1, 64], strides = [1, 1]} : vector<8x64xf32> to vector<1x64xf32>
    %600 = vector.broadcast %599 : vector<1x64xf32> to vector<2x64xf32>
    %601 = arith.mulf %598, %600 : vector<2x64xf32>
    %602 = vector.extract_strided_slice %522 {offsets = [2, 0], sizes = [1, 64], strides = [1, 1]} : vector<8x64xf32> to vector<1x64xf32>
    %603 = vector.broadcast %602 : vector<1x64xf32> to vector<2x64xf32>
    %604 = arith.addf %601, %603 : vector<2x64xf32>
    %605 = vector.extract_strided_slice %522 {offsets = [3, 0], sizes = [1, 64], strides = [1, 1]} : vector<8x64xf32> to vector<1x64xf32>
    %606 = vector.broadcast %605 : vector<1x64xf32> to vector<2x64xf32>
    %607 = arith.mulf %604, %606 : vector<2x64xf32>
    %cst_188 = arith.constant dense<0.000000e+00> : vector<2xf32>
    %608 = vector.multi_reduction <add>, %607, %cst_188 [1] : vector<2x64xf32> to vector<2xf32>
    %609 = vector.shape_cast %608 : vector<2xf32> to vector<2x1xf32>
    %610 = vector.extract_strided_slice %522 {offsets = [6, 0], sizes = [1, 1], strides = [1, 1]} : vector<8x64xf32> to vector<1x1xf32>
    %611 = vector.broadcast %610 : vector<1x1xf32> to vector<2x1xf32>
    %612 = arith.addf %609, %611 : vector<2x1xf32>
    %613 = vector.extract_strided_slice %522 {offsets = [4, 0], sizes = [1, 64], strides = [1, 1]} : vector<8x64xf32> to vector<1x64xf32>
    %614 = vector.broadcast %613 : vector<1x64xf32> to vector<2x64xf32>
    %615 = arith.mulf %604, %614 : vector<2x64xf32>
    %cst_189 = arith.constant dense<0.000000e+00> : vector<2xf32>
    %616 = vector.multi_reduction <add>, %615, %cst_189 [1] : vector<2x64xf32> to vector<2xf32>
    %617 = vector.shape_cast %616 : vector<2xf32> to vector<2x1xf32>
    %618 = vector.extract_strided_slice %522 {offsets = [6, 1], sizes = [1, 1], strides = [1, 1]} : vector<8x64xf32> to vector<1x1xf32>
    %619 = vector.broadcast %618 : vector<1x1xf32> to vector<2x1xf32>
    %620 = arith.addf %617, %619 : vector<2x1xf32>
    %621 = vector.extract_strided_slice %522 {offsets = [5, 0], sizes = [1, 64], strides = [1, 1]} : vector<8x64xf32> to vector<1x64xf32>
    %622 = vector.broadcast %621 : vector<1x64xf32> to vector<2x64xf32>
    %623 = arith.mulf %604, %622 : vector<2x64xf32>
    %cst_190 = arith.constant dense<0.000000e+00> : vector<2xf32>
    %624 = vector.multi_reduction <add>, %623, %cst_190 [1] : vector<2x64xf32> to vector<2xf32>
    %625 = vector.shape_cast %624 : vector<2xf32> to vector<2x1xf32>
    %626 = vector.extract_strided_slice %522 {offsets = [6, 2], sizes = [1, 1], strides = [1, 1]} : vector<8x64xf32> to vector<1x1xf32>
    %627 = vector.broadcast %626 : vector<1x1xf32> to vector<2x1xf32>
    %628 = arith.addf %625, %627 : vector<2x1xf32>
    %629 = math.tanh %620 : vector<2x1xf32>
    %cst_191 = arith.constant 5.000000e-01 : f32
    %630 = vector.broadcast %cst_191 : f32 to vector<2x1xf32>
    %631 = arith.mulf %630, %628 : vector<2x1xf32>
    %632 = math.tanh %631 : vector<2x1xf32>
    %cst_192 = arith.constant 5.000000e-01 : f32
    %633 = vector.broadcast %cst_192 : f32 to vector<2x1xf32>
    %634 = arith.mulf %633, %632 : vector<2x1xf32>
    %cst_193 = arith.constant 5.000000e-01 : f32
    %635 = vector.broadcast %cst_193 : f32 to vector<2x1xf32>
    %636 = arith.addf %634, %635 : vector<2x1xf32>
    %cst_194 = arith.constant 4.000000e-01 : f32
    %637 = vector.broadcast %cst_194 : f32 to vector<2x1xf32>
    %638 = arith.mulf %612, %637 : vector<2x1xf32>
    %639 = arith.mulf %629, %636 : vector<2x1xf32>
    %cst_195 = arith.constant 6.000000e-01 : f32
    %640 = vector.broadcast %cst_195 : f32 to vector<2x1xf32>
    %641 = arith.mulf %639, %640 : vector<2x1xf32>
    %642 = arith.addf %638, %641 : vector<2x1xf32>
    %c0_196 = arith.constant 0 : index
    %c0_197 = arith.constant 0 : index
    %643 = vector.load %arg4[%c0_196, %c0_197] : memref<2x1xf32, #tpu.memory_space<vmem>>, vector<2x1xf32>
    tpu.vector_store %arg4[%c0_196, %c0_197], %642 {strides = array<i32>} : memref<2x1xf32, #tpu.memory_space<vmem>>, vector<2x1xf32>,
    return
  }
}

</mosaic_0001>

<llo_original>
// kernel: simple_lstm_forward.1
$region0: #{simple_lstm_forward.1}
  #allocation0 [shape = 'u32[]', space=smem, size = 0x4, offset = 0x4, fixed_abs, tag = 'smem constant byte address 0x4 - core index']
  #allocation1 [shape = 'u32[72,128]{1,0:T(1,128)}', space=vmem, size = 0x9000, scoped, tag = 'internal scratch']
  #allocation2 [shape = 'f32[8,2,256]{2,1,0:T(2,128)}', space=vmem, size = 0x4000, scoped, tag = 'scratch operand']
  %s0 = inlined_call_operand.vmem [shape: f32[8,2,1], index: 0, kind: input, shape index: {}]
  %s1 = inlined_call_operand.vmem [shape: f32[6,256], index: 1, kind: input, shape index: {}]
  %s2 = inlined_call_operand.hbm [shape: bf16[256,256], index: 2, kind: input, shape index: {}]
  %s3 = inlined_call_operand.hbm [shape: f32[8,64], index: 3, kind: input, shape index: {}]
  %s4 = inlined_call_operand.vmem [shape: f32[2,1], index: 4, kind: output, shape index: {0}]
  %s5 = inlined_call_operand.hbm [shape: f32[2,8], index: 5, kind: output, shape index: {1}]
  %6 = xla_tuple %s4, %s5
  %s7 = sld [smem:[#allocation0]]
  $region42: #{simple_lstm_forward.1} parent=0
    _
  %s9 = ssub.s32 1, %s7
  %s10 = scalar_select 0, %s9, %s7
  $region1: #{simple_lstm_forward.1} parent=0
    #allocation3 [shape = 'u8[131072]{0}', space=vmem, size = 0x20000, scoped, tag = 'input window, operand 2, single buffered']
    #allocation4 [shape = 's32[1]{0}', space=sflag, size = 0x4, scoped, tag = 'scoped memory for simple_lstm_forward.1']
    #allocation5 [shape = 's32[1]{0}', space=sflag, size = 0x4, scoped, tag = 'scoped memory for simple_lstm_forward.1']
    #allocation6 [shape = 'u8[4096]{0}', space=vmem, size = 0x1000, scoped, tag = 'input window, operand 3, single buffered']
    #allocation7 [shape = 's32[1]{0}', space=sflag, size = 0x4, scoped, tag = 'scoped memory for simple_lstm_forward.1']
    #allocation8 [shape = 'u8[1024]{0}', space=vmem, size = 0x400, scoped, tag = 'output window, operand 1, single buffered']
    %11 = vsyncpa [#allocation4], 0
    %12 = vsyncpa [#allocation7], 0
    %13 = vsyncpa [#allocation5], 0
    // Predicated region
    $region2: #{simple_lstm_forward.1} parent=1 // pred_check
      _
    $region3: #{simple_lstm_forward.1} parent=1 // pred_check_branch
      %15 = sbr.rel (0) target = $region5
    $region4: #{simple_lstm_forward.1} parent=1 // pred_region
      _
    $region5: #{simple_lstm_forward.1} parent=1 // pred_fallthru
      _
    // Predicated region
    $region6: #{simple_lstm_forward.1} parent=1 // pred_check
      _
    $region7: #{simple_lstm_forward.1} parent=1 // pred_check_branch
      %17 = sbr.rel (0) target = $region9
    $region8: #{simple_lstm_forward.1} parent=1 // pred_region
      _
    $region9: #{simple_lstm_forward.1} parent=1 // pred_fallthru
      _
    // Predicated region
    $region10: #{simple_lstm_forward.1} parent=1 // pred_check
      _
    $region11: #{simple_lstm_forward.1} parent=1 // pred_check_branch
      %19 = sbr.rel (0) target = $region13
    $region12: #{simple_lstm_forward.1} parent=1 // pred_region
      %21 = vsyncadd [#allocation4], 0
      %s22 = sshll.u32 %s2, 4
      %s23 = int_to_ptr.hbm [resolvable:$true] %s22
      %s24 = sshll.u32 [#allocation3], 4
      %s25 = int_to_ptr.vmem [resolvable:$true] %s24
      %30 = dma.hbm_to_vmem [thread:$0]  %s23, 4096, %s25, [#allocation4], 128, 128, 8
    $region13: #{simple_lstm_forward.1} parent=1 // pred_fallthru
      _
    // Predicated region
    $region14: #{simple_lstm_forward.1} parent=1 // pred_check
      _
    $region15: #{simple_lstm_forward.1} parent=1 // pred_check_branch
      %32 = sbr.rel (0) target = $region17
    $region16: #{simple_lstm_forward.1} parent=1 // pred_region
      %34 = vsyncadd [#allocation7], 0
      %s36 = sshll.u32 %s3, 4
      %s37 = int_to_ptr.hbm [resolvable:$true] %s36
      %s38 = sshll.u32 [#allocation6], 4
      %s39 = int_to_ptr.vmem [resolvable:$true] %s38
      %41 = dma.hbm_to_vmem [thread:$0]  %s37, 128, %s39, [#allocation7]
    $region17: #{simple_lstm_forward.1} parent=1 // pred_fallthru
      _
    // Predicated region
    $region18: #{simple_lstm_forward.1} parent=1 // pred_check
      _
    $region19: #{simple_lstm_forward.1} parent=1 // pred_check_branch
      %43 = sbr.rel (0) target = $region21
    $region20: #{simple_lstm_forward.1} parent=1 // pred_region
      %45 = dma.done [#allocation4], 4096
    $region21: #{simple_lstm_forward.1} parent=1 // pred_fallthru
      _
    // Predicated region
    $region22: #{simple_lstm_forward.1} parent=1 // pred_check
      _
    $region23: #{simple_lstm_forward.1} parent=1 // pred_check_branch
      %47 = sbr.rel (0) target = $region25
    $region24: #{simple_lstm_forward.1} parent=1 // pred_region
      %49 = dma.done [#allocation7], 128
    $region25: #{simple_lstm_forward.1} parent=1 // pred_fallthru
      _
    %v51 = vld [vmem:[%s1] sm:$0x3f]
    %v52 = vld [vmem:[%s1 + $0x8] sm:$0x3f]
    %v53 = vld [vmem:[#allocation3] sm:$0xff]
    %v54 = vld [vmem:[#allocation3 + $0x8] sm:$0xff]
    %v55 = vld [vmem:[#allocation3 + $0x10] sm:$0xff]
    %v56 = vld [vmem:[#allocation3 + $0x18] sm:$0xff]
    %v57 = vld [vmem:[#allocation3 + $0x20] sm:$0xff]
    %v58 = vld [vmem:[#allocation3 + $0x28] sm:$0xff]
    %v59 = vld [vmem:[#allocation3 + $0x30] sm:$0xff]
    %v60 = vld [vmem:[#allocation3 + $0x38] sm:$0xff]
    %v61 = vld [vmem:[#allocation3 + $0x40] sm:$0xff]
    %v62 = vld [vmem:[#allocation3 + $0x48] sm:$0xff]
    %v63 = vld [vmem:[#allocation3 + $0x50] sm:$0xff]
    %v64 = vld [vmem:[#allocation3 + $0x58] sm:$0xff]
    %v65 = vld [vmem:[#allocation3 + $0x60] sm:$0xff]
    %v66 = vld [vmem:[#allocation3 + $0x68] sm:$0xff]
    %v67 = vld [vmem:[#allocation3 + $0x70] sm:$0xff]
    %v68 = vld [vmem:[#allocation3 + $0x78] sm:$0xff]
    %v69 = vld [vmem:[#allocation3 + $0x80] sm:$0xff]
    %v70 = vld [vmem:[#allocation3 + $0x88] sm:$0xff]
    %v71 = vld [vmem:[#allocation3 + $0x90] sm:$0xff]
    %v72 = vld [vmem:[#allocation3 + $0x98] sm:$0xff]
    %v73 = vld [vmem:[#allocation3 + $0xa0] sm:$0xff]
    %v74 = vld [vmem:[#allocation3 + $0xa8] sm:$0xff]
    %v75 = vld [vmem:[#allocation3 + $0xb0] sm:$0xff]
    %v76 = vld [vmem:[#allocation3 + $0xb8] sm:$0xff]
    %v77 = vld [vmem:[#allocation3 + $0xc0] sm:$0xff]
    %v78 = vld [vmem:[#allocation3 + $0xc8] sm:$0xff]
    %v79 = vld [vmem:[#allocation3 + $0xd0] sm:$0xff]
    %v80 = vld [vmem:[#allocation3 + $0xd8] sm:$0xff]
    %v81 = vld [vmem:[#allocation3 + $0xe0] sm:$0xff]
    %v82 = vld [vmem:[#allocation3 + $0xe8] sm:$0xff]
    %v83 = vld [vmem:[#allocation3 + $0xf0] sm:$0xff]
    %v84 = vld [vmem:[#allocation3 + $0xf8] sm:$0xff]
    %v85 = vld [vmem:[%s0] sm:$0x3]
    %87 = vset.pattern.permute.xlu0 0
    %88 = vperm.xlu0 %87, %v85
    %v89 = vpop.permute.xlu0 %88
    %v91 = vperm.slane %v51, 0
    %v92 = vperm.slane %v52, 0
    %v93 = vmul.f32 %v89, %v91
    %v94 = vmul.f32 %v89, %v92
    %s95 = scalar_lea.vmem %s0, 14
    %v96 = vld [vmem:[%s95] sm:$0x3]
    %98 = vset.pattern.permute.xlu0 0
    %99 = vperm.xlu0 %98, %v96
    %v100 = vpop.permute.xlu0 %99
    %v102 = vperm.slane %v51, 1
    %v103 = vperm.slane %v52, 1
    %v104 = vmul.f32 %v100, %v102
    %v105 = vmul.f32 %v100, %v103
    %v106 = vadd.f32 %v93, %v104
    %v107 = vadd.f32 %v94, %v105
    %v108 = vperm.slane %v51, 2
    %v109 = vperm.slane %v52, 2
    %v110 = vadd.f32 %v106, %v108
    %v111 = vadd.f32 %v107, %v109
    %v114 = vrot.slane %v111, 6
    %vm115 = vcmask 1041408
    %v116 = vsel %vm115, %v110, %v114
    %118 = vst [vmem:[#allocation2] sm:$0xf] %v116
    %s119 = scalar_lea.vmem %s0, 2
    %v120 = vld [vmem:[%s119] sm:$0x3]
    %122 = vset.pattern.permute.xlu0 0
    %123 = vperm.xlu0 %122, %v120
    %v124 = vpop.permute.xlu0 %123
    %v126 = vmul.f32 %v124, %v91
    %v127 = vmul.f32 %v124, %v92
    %s128 = scalar_lea.vmem %s0, 12
    %v129 = vld [vmem:[%s128] sm:$0x3]
    %131 = vset.pattern.permute.xlu0 0
    %132 = vperm.xlu0 %131, %v129
    %v133 = vpop.permute.xlu0 %132
    %v135 = vmul.f32 %v133, %v102
    %v136 = vmul.f32 %v133, %v103
    %v137 = vadd.f32 %v126, %v135
    %v138 = vadd.f32 %v127, %v136
    %v139 = vadd.f32 %v137, %v108
    %v140 = vadd.f32 %v138, %v109
    %v143 = vrot.slane %v140, 6
    %v144 = vsel %vm115, %v139, %v143
    %s146 = scalar_lea.vmem [#allocation2], 4
    %147 = vst [vmem:[%s146] sm:$0xf] %v144
    %s148 = scalar_lea.vmem %s0, 4
    %v149 = vld [vmem:[%s148] sm:$0x3]
    %151 = vset.pattern.permute.xlu0 0
    %152 = vperm.xlu0 %151, %v149
    %v153 = vpop.permute.xlu0 %152
    %v155 = vmul.f32 %v153, %v91
    %v156 = vmul.f32 %v153, %v92
    %s157 = scalar_lea.vmem %s0, 10
    %v158 = vld [vmem:[%s157] sm:$0x3]
    %160 = vset.pattern.permute.xlu0 0
    %161 = vperm.xlu0 %160, %v158
    %v162 = vpop.permute.xlu0 %161
    %v164 = vmul.f32 %v162, %v102
    %v165 = vmul.f32 %v162, %v103
    %v166 = vadd.f32 %v155, %v164
    %v167 = vadd.f32 %v156, %v165
    %v168 = vadd.f32 %v166, %v108
    %v169 = vadd.f32 %v167, %v109
    %v172 = vrot.slane %v169, 6
    %v173 = vsel %vm115, %v168, %v172
    %s175 = scalar_lea.vmem [#allocation2], 8
    %176 = vst [vmem:[%s175] sm:$0xf] %v173
    %s177 = scalar_lea.vmem %s0, 6
    %v178 = vld [vmem:[%s177] sm:$0x3]
    %180 = vset.pattern.permute.xlu0 0
    %181 = vperm.xlu0 %180, %v178
    %v182 = vpop.permute.xlu0 %181
    %v184 = vmul.f32 %v182, %v91
    %v185 = vmul.f32 %v182, %v92
    %s186 = scalar_lea.vmem %s0, 8
    %v187 = vld [vmem:[%s186] sm:$0x3]
    %189 = vset.pattern.permute.xlu0 0
    %190 = vperm.xlu0 %189, %v187
    %v191 = vpop.permute.xlu0 %190
    %v193 = vmul.f32 %v191, %v102
    %v194 = vmul.f32 %v191, %v103
    %v195 = vadd.f32 %v184, %v193
    %v196 = vadd.f32 %v185, %v194
    %v197 = vadd.f32 %v195, %v108
    %v198 = vadd.f32 %v196, %v109
    %v201 = vrot.slane %v198, 6
    %v202 = vsel %vm115, %v197, %v201
    %s204 = scalar_lea.vmem [#allocation2], 12
    %205 = vst [vmem:[%s204] sm:$0xf] %v202
    %v206 = vld [vmem:[%s186] sm:$0x3]
    %208 = vset.pattern.permute.xlu0 0
    %209 = vperm.xlu0 %208, %v206
    %v210 = vpop.permute.xlu0 %209
    %v212 = vmul.f32 %v210, %v91
    %v213 = vmul.f32 %v210, %v92
    %v214 = vld [vmem:[%s177] sm:$0x3]
    %216 = vset.pattern.permute.xlu0 0
    %217 = vperm.xlu0 %216, %v214
    %v218 = vpop.permute.xlu0 %217
    %v220 = vmul.f32 %v218, %v102
    %v221 = vmul.f32 %v218, %v103
    %v222 = vadd.f32 %v212, %v220
    %v223 = vadd.f32 %v213, %v221
    %v224 = vadd.f32 %v222, %v108
    %v225 = vadd.f32 %v223, %v109
    %v228 = vrot.slane %v225, 6
    %v229 = vsel %vm115, %v224, %v228
    %s231 = scalar_lea.vmem [#allocation2], 16
    %232 = vst [vmem:[%s231] sm:$0xf] %v229
    %v233 = vld [vmem:[%s157] sm:$0x3]
    %235 = vset.pattern.permute.xlu0 0
    %236 = vperm.xlu0 %235, %v233
    %v237 = vpop.permute.xlu0 %236
    %v239 = vmul.f32 %v237, %v91
    %v240 = vmul.f32 %v237, %v92
    %v241 = vld [vmem:[%s148] sm:$0x3]
    %243 = vset.pattern.permute.xlu0 0
    %244 = vperm.xlu0 %243, %v241
    %v245 = vpop.permute.xlu0 %244
    %v247 = vmul.f32 %v245, %v102
    %v248 = vmul.f32 %v245, %v103
    %v249 = vadd.f32 %v239, %v247
    %v250 = vadd.f32 %v240, %v248
    %v251 = vadd.f32 %v249, %v108
    %v252 = vadd.f32 %v250, %v109
    %v255 = vrot.slane %v252, 6
    %v256 = vsel %vm115, %v251, %v255
    %s258 = scalar_lea.vmem [#allocation2], 20
    %259 = vst [vmem:[%s258] sm:$0xf] %v256
    %v260 = vld [vmem:[%s128] sm:$0x3]
    %262 = vset.pattern.permute.xlu0 0
    %263 = vperm.xlu0 %262, %v260
    %v264 = vpop.permute.xlu0 %263
    %v266 = vmul.f32 %v264, %v91
    %v267 = vmul.f32 %v264, %v92
    %v268 = vld [vmem:[%s119] sm:$0x3]
    %270 = vset.pattern.permute.xlu0 0
    %271 = vperm.xlu0 %270, %v268
    %v272 = vpop.permute.xlu0 %271
    %v274 = vmul.f32 %v272, %v102
    %v275 = vmul.f32 %v272, %v103
    %v276 = vadd.f32 %v266, %v274
    %v277 = vadd.f32 %v267, %v275
    %v278 = vadd.f32 %v276, %v108
    %v279 = vadd.f32 %v277, %v109
    %v282 = vrot.slane %v279, 6
    %v283 = vsel %vm115, %v278, %v282
    %s285 = scalar_lea.vmem [#allocation2], 24
    %286 = vst [vmem:[%s285] sm:$0xf] %v283
    %v287 = vld [vmem:[%s95] sm:$0x3]
    %289 = vset.pattern.permute.xlu0 0
    %290 = vperm.xlu0 %289, %v287
    %v291 = vpop.permute.xlu0 %290
    %v293 = vmul.f32 %v291, %v91
    %v294 = vmul.f32 %v291, %v92
    %v295 = vld [vmem:[%s0] sm:$0x3]
    %297 = vset.pattern.permute.xlu0 0
    %298 = vperm.xlu0 %297, %v295
    %v299 = vpop.permute.xlu0 %298
    %v301 = vmul.f32 %v299, %v102
    %v302 = vmul.f32 %v299, %v103
    %v303 = vadd.f32 %v293, %v301
    %v304 = vadd.f32 %v294, %v302
    %v305 = vadd.f32 %v303, %v108
    %v306 = vadd.f32 %v304, %v109
    %v309 = vrot.slane %v306, 6
    %v310 = vsel %vm115, %v305, %v309
    %s312 = scalar_lea.vmem [#allocation2], 28
    %313 = vst [vmem:[%s312] sm:$0xf] %v310
    %v314 = vld [vmem:[#allocation2] sm:$0xf]
    %v315 = vtanh.pop %v314
    %v316 = vperm.slane %v51, 4
    %v317 = vperm.slane %v52, 4
    %v320 = vrot.slane %v317, 6
    %v321 = vsel %vm115, %v316, %v320
    %v323 = vmul.f32 %v315, %v321
    %v324 = vperm.slane %v51, 5
    %v325 = vperm.slane %v52, 5
    %v328 = vrot.slane %v325, 6
    %v329 = vsel %vm115, %v324, %v328
    %v331 = vadd.f32 %v323, %v329
    %v332 = vmul.f32 %v331, 0.0
    %v334 = vrot.slane %v331, 2
    %v336 = vmul.f32 %v331, %v334
    %338 = vrot.lane.b32.xlu0 %v336, 64
    %v339 = vpop.permute.xlu0 %338
    %v341 = vadd.f32 %v332, %v339
    %v342 = vtanh.pop %v341
    %343 = vrot.lane.b32.xlu0 %v331, 64
    %v344 = vpop.permute.xlu0 %343
    %v345 = vrot.slane %v344, 2
    %348 = vrot.lane.b32.xlu0 %v342, 64
    %v349 = vpop.permute.xlu0 %348
    %v351 = vmul.f32 %v345, %v349
    %v352 = vld [vmem:[%s146] sm:$0xf]
    %v353 = vpack.c.bf16 %v351, %v351
    %v362 = vunpack.c.l.b16 %v53
    %v363 = vunpack.c.h.b16 %v53
    %v364 = vunpack.c.l.b16 %v54
    %v365 = vunpack.c.h.b16 %v54
    %v366 = vunpack.c.l.b16 %v55
    %v367 = vunpack.c.h.b16 %v55
    %v368 = vunpack.c.l.b16 %v56
    %v369 = vunpack.c.h.b16 %v56
    %v370 = vunpack.c.l.b16 %v57
    %v371 = vunpack.c.h.b16 %v57
    %v372 = vunpack.c.l.b16 %v58
    %v373 = vunpack.c.h.b16 %v58
    %v374 = vunpack.c.l.b16 %v59
    %v375 = vunpack.c.h.b16 %v59
    %v376 = vunpack.c.l.b16 %v60
    %v377 = vunpack.c.h.b16 %v60
    %v378 = vpack.c.b16 %v364, %v362
    %v379 = vpack.c.b16 %v365, %v363
    %v380 = vpack.c.b16 %v368, %v366
    %v381 = vpack.c.b16 %v369, %v367
    %v382 = vpack.c.b16 %v372, %v370
    %v383 = vpack.c.b16 %v373, %v371
    %v384 = vpack.c.b16 %v376, %v374
    %v385 = vpack.c.b16 %v377, %v375
    %vm394 = vcmask 523264
    %v396 = vsel %vm394, %v353, 0
    %398 = vmatpush.bf16.msra.mxu0 0
    %399 = vmatpush.bf16.msra.mxu0 0
    %400 = vmatpush.bf16.msra.mxu0 0
    %401 = vmatpush.bf16.msra.mxu0 0
    %402 = vmatpush.bf16.msra.mxu0 %v384
    %403 = vmatpush.bf16.msra.mxu0 %v382
    %404 = vmatpush.bf16.msra.mxu0 %v380
    %405 = vmatpush.bf16.msra.mxu0 %v378
    %406 = vmatmul.bf16.gmra.mxu0 %v396
    %v407 = vpop.f32.mrf.mxu0
    %v408 = vadd.f32 0.0, %v407
    %v409 = vpop.f32.mrf.mxu0
    %410 = vdwg.mxu0
    %411 = vmatpush.bf16.msra.mxu0 0
    %412 = vmatpush.bf16.msra.mxu0 0
    %413 = vmatpush.bf16.msra.mxu0 0
    %414 = vmatpush.bf16.msra.mxu0 0
    %415 = vmatpush.bf16.msra.mxu0 %v385
    %416 = vmatpush.bf16.msra.mxu0 %v383
    %417 = vmatpush.bf16.msra.mxu0 %v381
    %418 = vmatpush.bf16.msra.mxu0 %v379
    %419 = vmatmul.bf16.gmra.mxu0 %v396
    %v420 = vpop.f32.mrf.mxu0
    %v421 = vadd.f32 0.0, %v420
    %v422 = vpop.f32.mrf.mxu0
    %423 = vdwg.mxu0
    %v426 = vrot.slane %v421, 6
    %v427 = vsel %vm115, %v408, %v426
    %v429 = vadd.f32 %v352, %v427
    %v430 = vtanh.pop %v429
    %v431 = vmul.f32 %v430, %v321
    %v432 = vadd.f32 %v431, %v329
    %v433 = vmul.f32 %v432, %v341
    %v435 = vrot.slane %v432, 2
    %v437 = vmul.f32 %v432, %v435
    %439 = vrot.lane.b32.xlu0 %v437, 64
    %v440 = vpop.permute.xlu0 %439
    %v442 = vadd.f32 %v433, %v440
    %v443 = vtanh.pop %v442
    %444 = vrot.lane.b32.xlu0 %v432, 64
    %v445 = vpop.permute.xlu0 %444
    %v446 = vrot.slane %v445, 2
    %449 = vrot.lane.b32.xlu0 %v443, 64
    %v450 = vpop.permute.xlu0 %449
    %v452 = vmul.f32 %v446, %v450
    %v453 = vld [vmem:[%s175] sm:$0xf]
    %v454 = vpack.c.bf16 %v452, %v452
    %v456 = vsel %vm394, %v454, 0
    %458 = vmatpush.bf16.msra.mxu0 0
    %459 = vmatpush.bf16.msra.mxu0 0
    %460 = vmatpush.bf16.msra.mxu0 0
    %461 = vmatpush.bf16.msra.mxu0 0
    %462 = vmatpush.bf16.msra.mxu0 %v384
    %463 = vmatpush.bf16.msra.mxu0 %v382
    %464 = vmatpush.bf16.msra.mxu0 %v380
    %465 = vmatpush.bf16.msra.mxu0 %v378
    %466 = vmatmul.bf16.gmra.mxu0 %v456
    %v467 = vpop.f32.mrf.mxu0
    %v468 = vadd.f32 0.0, %v467
    %v469 = vpop.f32.mrf.mxu0
    %470 = vdwg.mxu0
    %471 = vmatpush.bf16.msra.mxu0 0
    %472 = vmatpush.bf16.msra.mxu0 0
    %473 = vmatpush.bf16.msra.mxu0 0
    %474 = vmatpush.bf16.msra.mxu0 0
    %475 = vmatpush.bf16.msra.mxu0 %v385
    %476 = vmatpush.bf16.msra.mxu0 %v383
    %477 = vmatpush.bf16.msra.mxu0 %v381
    %478 = vmatpush.bf16.msra.mxu0 %v379
    %479 = vmatmul.bf16.gmra.mxu0 %v456
    %v480 = vpop.f32.mrf.mxu0
    %v481 = vadd.f32 0.0, %v480
    %v482 = vpop.f32.mrf.mxu0
    %483 = vdwg.mxu0
    %v486 = vrot.slane %v481, 6
    %v487 = vsel %vm115, %v468, %v486
    %v489 = vadd.f32 %v453, %v487
    %v490 = vtanh.pop %v489
    %v491 = vmul.f32 %v490, %v321
    %v492 = vadd.f32 %v491, %v329
    %v493 = vmul.f32 %v492, %v442
    %v495 = vrot.slane %v492, 2
    %v497 = vmul.f32 %v492, %v495
    %499 = vrot.lane.b32.xlu0 %v497, 64
    %v500 = vpop.permute.xlu0 %499
    %v502 = vadd.f32 %v493, %v500
    %v503 = vtanh.pop %v502
    %504 = vrot.lane.b32.xlu0 %v492, 64
    %v505 = vpop.permute.xlu0 %504
    %v506 = vrot.slane %v505, 2
    %509 = vrot.lane.b32.xlu0 %v503, 64
    %v510 = vpop.permute.xlu0 %509
    %v512 = vmul.f32 %v506, %v510
    %v513 = vld [vmem:[%s204] sm:$0xf]
    %v514 = vpack.c.bf16 %v512, %v512
    %v516 = vsel %vm394, %v514, 0
    %518 = vmatpush.bf16.msra.mxu0 0
    %519 = vmatpush.bf16.msra.mxu0 0
    %520 = vmatpush.bf16.msra.mxu0 0
    %521 = vmatpush.bf16.msra.mxu0 0
    %522 = vmatpush.bf16.msra.mxu0 %v384
    %523 = vmatpush.bf16.msra.mxu0 %v382
    %524 = vmatpush.bf16.msra.mxu0 %v380
    %525 = vmatpush.bf16.msra.mxu0 %v378
    %526 = vmatmul.bf16.gmra.mxu0 %v516
    %v527 = vpop.f32.mrf.mxu0
    %v528 = vadd.f32 0.0, %v527
    %v529 = vpop.f32.mrf.mxu0
    %530 = vdwg.mxu0
    %531 = vmatpush.bf16.msra.mxu0 0
    %532 = vmatpush.bf16.msra.mxu0 0
    %533 = vmatpush.bf16.msra.mxu0 0
    %534 = vmatpush.bf16.msra.mxu0 0
    %535 = vmatpush.bf16.msra.mxu0 %v385
    %536 = vmatpush.bf16.msra.mxu0 %v383
    %537 = vmatpush.bf16.msra.mxu0 %v381
    %538 = vmatpush.bf16.msra.mxu0 %v379
    %539 = vmatmul.bf16.gmra.mxu0 %v516
    %v540 = vpop.f32.mrf.mxu0
    %v541 = vadd.f32 0.0, %v540
    %v542 = vpop.f32.mrf.mxu0
    %543 = vdwg.mxu0
    %v546 = vrot.slane %v541, 6
    %v547 = vsel %vm115, %v528, %v546
    %v549 = vadd.f32 %v513, %v547
    %v550 = vtanh.pop %v549
    %v551 = vmul.f32 %v550, %v321
    %v552 = vadd.f32 %v551, %v329
    %v553 = vmul.f32 %v552, %v502
    %v555 = vrot.slane %v552, 2
    %v557 = vmul.f32 %v552, %v555
    %559 = vrot.lane.b32.xlu0 %v557, 64
    %v560 = vpop.permute.xlu0 %559
    %v562 = vadd.f32 %v553, %v560
    %v563 = vtanh.pop %v562
    %564 = vrot.lane.b32.xlu0 %v552, 64
    %v565 = vpop.permute.xlu0 %564
    %v566 = vrot.slane %v565, 2
    %569 = vrot.lane.b32.xlu0 %v563, 64
    %v570 = vpop.permute.xlu0 %569
    %v572 = vmul.f32 %v566, %v570
    %v573 = vld [vmem:[%s231] sm:$0xf]
    %v574 = vpack.c.bf16 %v572, %v572
    %v576 = vsel %vm394, %v574, 0
    %578 = vmatpush.bf16.msra.mxu0 0
    %579 = vmatpush.bf16.msra.mxu0 0
    %580 = vmatpush.bf16.msra.mxu0 0
    %581 = vmatpush.bf16.msra.mxu0 0
    %582 = vmatpush.bf16.msra.mxu0 %v384
    %583 = vmatpush.bf16.msra.mxu0 %v382
    %584 = vmatpush.bf16.msra.mxu0 %v380
    %585 = vmatpush.bf16.msra.mxu0 %v378
    %586 = vmatmul.bf16.gmra.mxu0 %v576
    %v587 = vpop.f32.mrf.mxu0
    %v588 = vadd.f32 0.0, %v587
    %v589 = vpop.f32.mrf.mxu0
    %590 = vdwg.mxu0
    %591 = vmatpush.bf16.msra.mxu0 0
    %592 = vmatpush.bf16.msra.mxu0 0
    %593 = vmatpush.bf16.msra.mxu0 0
    %594 = vmatpush.bf16.msra.mxu0 0
    %595 = vmatpush.bf16.msra.mxu0 %v385
    %596 = vmatpush.bf16.msra.mxu0 %v383
    %597 = vmatpush.bf16.msra.mxu0 %v381
    %598 = vmatpush.bf16.msra.mxu0 %v379
    %599 = vmatmul.bf16.gmra.mxu0 %v576
    %v600 = vpop.f32.mrf.mxu0
    %v601 = vadd.f32 0.0, %v600
    %v602 = vpop.f32.mrf.mxu0
    %603 = vdwg.mxu0
    %v606 = vrot.slane %v601, 6
    %v607 = vsel %vm115, %v588, %v606
    %v609 = vadd.f32 %v573, %v607
    %v610 = vtanh.pop %v609
    %v611 = vmul.f32 %v610, %v321
    %v612 = vadd.f32 %v611, %v329
    %v613 = vmul.f32 %v612, %v562
    %v615 = vrot.slane %v612, 2
    %v617 = vmul.f32 %v612, %v615
    %619 = vrot.lane.b32.xlu0 %v617, 64
    %v620 = vpop.permute.xlu0 %619
    %v622 = vadd.f32 %v613, %v620
    %v623 = vtanh.pop %v622
    %624 = vrot.lane.b32.xlu0 %v612, 64
    %v625 = vpop.permute.xlu0 %624
    %v626 = vrot.slane %v625, 2
    %629 = vrot.lane.b32.xlu0 %v623, 64
    %v630 = vpop.permute.xlu0 %629
    %v632 = vmul.f32 %v626, %v630
    %v633 = vld [vmem:[%s258] sm:$0xf]
    %v634 = vpack.c.bf16 %v632, %v632
    %v636 = vsel %vm394, %v634, 0
    %638 = vmatpush.bf16.msra.mxu0 0
    %639 = vmatpush.bf16.msra.mxu0 0
    %640 = vmatpush.bf16.msra.mxu0 0
    %641 = vmatpush.bf16.msra.mxu0 0
    %642 = vmatpush.bf16.msra.mxu0 %v384
    %643 = vmatpush.bf16.msra.mxu0 %v382
    %644 = vmatpush.bf16.msra.mxu0 %v380
    %645 = vmatpush.bf16.msra.mxu0 %v378
    %646 = vmatmul.bf16.gmra.mxu0 %v636
    %v647 = vpop.f32.mrf.mxu0
    %v648 = vadd.f32 0.0, %v647
    %v649 = vpop.f32.mrf.mxu0
    %650 = vdwg.mxu0
    %651 = vmatpush.bf16.msra.mxu0 0
    %652 = vmatpush.bf16.msra.mxu0 0
    %653 = vmatpush.bf16.msra.mxu0 0
    %654 = vmatpush.bf16.msra.mxu0 0
    %655 = vmatpush.bf16.msra.mxu0 %v385
    %656 = vmatpush.bf16.msra.mxu0 %v383
    %657 = vmatpush.bf16.msra.mxu0 %v381
    %658 = vmatpush.bf16.msra.mxu0 %v379
    %659 = vmatmul.bf16.gmra.mxu0 %v636
    %v660 = vpop.f32.mrf.mxu0
    %v661 = vadd.f32 0.0, %v660
    %v662 = vpop.f32.mrf.mxu0
    %663 = vdwg.mxu0
    %v666 = vrot.slane %v661, 6
    %v667 = vsel %vm115, %v648, %v666
    %v669 = vadd.f32 %v633, %v667
    %v670 = vtanh.pop %v669
    %v671 = vmul.f32 %v670, %v321
    %v672 = vadd.f32 %v671, %v329
    %v673 = vmul.f32 %v672, %v622
    %v675 = vrot.slane %v672, 2
    %v677 = vmul.f32 %v672, %v675
    %679 = vrot.lane.b32.xlu0 %v677, 64
    %v680 = vpop.permute.xlu0 %679
    %v682 = vadd.f32 %v673, %v680
    %v683 = vtanh.pop %v682
    %684 = vrot.lane.b32.xlu0 %v672, 64
    %v685 = vpop.permute.xlu0 %684
    %v686 = vrot.slane %v685, 2
    %689 = vrot.lane.b32.xlu0 %v683, 64
    %v690 = vpop.permute.xlu0 %689
    %v692 = vmul.f32 %v686, %v690
    %v693 = vld [vmem:[%s285] sm:$0xf]
    %v694 = vpack.c.bf16 %v692, %v692
    %v696 = vsel %vm394, %v694, 0
    %698 = vmatpush.bf16.msra.mxu0 0
    %699 = vmatpush.bf16.msra.mxu0 0
    %700 = vmatpush.bf16.msra.mxu0 0
    %701 = vmatpush.bf16.msra.mxu0 0
    %702 = vmatpush.bf16.msra.mxu0 %v384
    %703 = vmatpush.bf16.msra.mxu0 %v382
    %704 = vmatpush.bf16.msra.mxu0 %v380
    %705 = vmatpush.bf16.msra.mxu0 %v378
    %706 = vmatmul.bf16.gmra.mxu0 %v696
    %v707 = vpop.f32.mrf.mxu0
    %v708 = vadd.f32 0.0, %v707
    %v709 = vpop.f32.mrf.mxu0
    %710 = vdwg.mxu0
    %711 = vmatpush.bf16.msra.mxu0 0
    %712 = vmatpush.bf16.msra.mxu0 0
    %713 = vmatpush.bf16.msra.mxu0 0
    %714 = vmatpush.bf16.msra.mxu0 0
    %715 = vmatpush.bf16.msra.mxu0 %v385
    %716 = vmatpush.bf16.msra.mxu0 %v383
    %717 = vmatpush.bf16.msra.mxu0 %v381
    %718 = vmatpush.bf16.msra.mxu0 %v379
    %719 = vmatmul.bf16.gmra.mxu0 %v696
    %v720 = vpop.f32.mrf.mxu0
    %v721 = vadd.f32 0.0, %v720
    %v722 = vpop.f32.mrf.mxu0
    %723 = vdwg.mxu0
    %v726 = vrot.slane %v721, 6
    %v727 = vsel %vm115, %v708, %v726
    %v729 = vadd.f32 %v693, %v727
    %v730 = vtanh.pop %v729
    %v731 = vmul.f32 %v730, %v321
    %v732 = vadd.f32 %v731, %v329
    %v733 = vmul.f32 %v732, %v682
    %v735 = vrot.slane %v732, 2
    %v737 = vmul.f32 %v732, %v735
    %739 = vrot.lane.b32.xlu0 %v737, 64
    %v740 = vpop.permute.xlu0 %739
    %v742 = vadd.f32 %v733, %v740
    %v743 = vtanh.pop %v742
    %744 = vrot.lane.b32.xlu0 %v732, 64
    %v745 = vpop.permute.xlu0 %744
    %v746 = vrot.slane %v745, 2
    %749 = vrot.lane.b32.xlu0 %v743, 64
    %v750 = vpop.permute.xlu0 %749
    %v752 = vmul.f32 %v746, %v750
    %v753 = vld [vmem:[%s312] sm:$0xf]
    %v754 = vpack.c.bf16 %v752, %v752
    %v756 = vsel %vm394, %v754, 0
    %758 = vmatpush.bf16.msra.mxu0 0
    %759 = vmatpush.bf16.msra.mxu0 0
    %760 = vmatpush.bf16.msra.mxu0 0
    %761 = vmatpush.bf16.msra.mxu0 0
    %762 = vmatpush.bf16.msra.mxu0 %v384
    %763 = vmatpush.bf16.msra.mxu0 %v382
    %764 = vmatpush.bf16.msra.mxu0 %v380
    %765 = vmatpush.bf16.msra.mxu0 %v378
    %766 = vmatmul.bf16.gmra.mxu0 %v756
    %v767 = vpop.f32.mrf.mxu0
    %v768 = vadd.f32 0.0, %v767
    %v769 = vpop.f32.mrf.mxu0
    %770 = vdwg.mxu0
    %771 = vmatpush.bf16.msra.mxu0 0
    %772 = vmatpush.bf16.msra.mxu0 0
    %773 = vmatpush.bf16.msra.mxu0 0
    %774 = vmatpush.bf16.msra.mxu0 0
    %775 = vmatpush.bf16.msra.mxu0 %v385
    %776 = vmatpush.bf16.msra.mxu0 %v383
    %777 = vmatpush.bf16.msra.mxu0 %v381
    %778 = vmatpush.bf16.msra.mxu0 %v379
    %779 = vmatmul.bf16.gmra.mxu0 %v756
    %v780 = vpop.f32.mrf.mxu0
    %v781 = vadd.f32 0.0, %v780
    %v782 = vpop.f32.mrf.mxu0
    %783 = vdwg.mxu0
    %v786 = vrot.slane %v781, 6
    %v787 = vsel %vm115, %v768, %v786
    %v789 = vadd.f32 %v753, %v787
    %v790 = vtanh.pop %v789
    %v791 = vmul.f32 %v790, %v321
    %v792 = vadd.f32 %v791, %v329
    %v793 = vmul.f32 %v792, %v742
    %v795 = vrot.slane %v792, 2
    %v797 = vmul.f32 %v792, %v795
    %799 = vrot.lane.b32.xlu0 %v797, 64
    %v800 = vpop.permute.xlu0 %799
    %v802 = vadd.f32 %v793, %v800
    %v803 = vtanh.pop %v802
    %804 = vrot.lane.b32.xlu0 %v792, 64
    %v805 = vpop.permute.xlu0 %804
    %v806 = vrot.slane %v805, 2
    %809 = vrot.lane.b32.xlu0 %v803, 64
    %v810 = vpop.permute.xlu0 %809
    %v812 = vmul.f32 %v806, %v810
    %v813 = vpack.c.bf16 %v812, %v812
    %v822 = vunpack.c.l.b16 %v77
    %v823 = vunpack.c.h.b16 %v77
    %v824 = vunpack.c.l.b16 %v78
    %v825 = vunpack.c.h.b16 %v78
    %v826 = vunpack.c.l.b16 %v79
    %v827 = vunpack.c.h.b16 %v79
    %v828 = vunpack.c.l.b16 %v80
    %v829 = vunpack.c.h.b16 %v80
    %v830 = vunpack.c.l.b16 %v81
    %v831 = vunpack.c.h.b16 %v81
    %v832 = vunpack.c.l.b16 %v82
    %v833 = vunpack.c.h.b16 %v82
    %v834 = vunpack.c.l.b16 %v83
    %v835 = vunpack.c.h.b16 %v83
    %v836 = vunpack.c.l.b16 %v84
    %v837 = vunpack.c.h.b16 %v84
    %v838 = vpack.c.b16 %v824, %v822
    %v839 = vpack.c.b16 %v825, %v823
    %v840 = vpack.c.b16 %v828, %v826
    %v841 = vpack.c.b16 %v829, %v827
    %v842 = vpack.c.b16 %v832, %v830
    %v843 = vpack.c.b16 %v833, %v831
    %v844 = vpack.c.b16 %v836, %v834
    %v845 = vpack.c.b16 %v837, %v835
    %v855 = vsel %vm394, %v813, 0
    %857 = vmatpush.bf16.msra.mxu0 0
    %858 = vmatpush.bf16.msra.mxu0 0
    %859 = vmatpush.bf16.msra.mxu0 0
    %860 = vmatpush.bf16.msra.mxu0 0
    %861 = vmatpush.bf16.msra.mxu0 %v844
    %862 = vmatpush.bf16.msra.mxu0 %v842
    %863 = vmatpush.bf16.msra.mxu0 %v840
    %864 = vmatpush.bf16.msra.mxu0 %v838
    %865 = vmatmul.bf16.gmra.mxu0 %v855
    %v866 = vpop.f32.mrf.mxu0
    %v867 = vadd.f32 0.0, %v866
    %v868 = vpop.f32.mrf.mxu0
    %869 = vdwg.mxu0
    %870 = vmatpush.bf16.msra.mxu0 0
    %871 = vmatpush.bf16.msra.mxu0 0
    %872 = vmatpush.bf16.msra.mxu0 0
    %873 = vmatpush.bf16.msra.mxu0 0
    %874 = vmatpush.bf16.msra.mxu0 %v845
    %875 = vmatpush.bf16.msra.mxu0 %v843
    %876 = vmatpush.bf16.msra.mxu0 %v841
    %877 = vmatpush.bf16.msra.mxu0 %v839
    %878 = vmatmul.bf16.gmra.mxu0 %v855
    %v879 = vpop.f32.mrf.mxu0
    %v880 = vadd.f32 0.0, %v879
    %v881 = vpop.f32.mrf.mxu0
    %882 = vdwg.mxu0
    %v891 = vunpack.c.l.b16 %v69
    %v892 = vunpack.c.h.b16 %v69
    %v893 = vunpack.c.l.b16 %v70
    %v894 = vunpack.c.h.b16 %v70
    %v895 = vunpack.c.l.b16 %v71
    %v896 = vunpack.c.h.b16 %v71
    %v897 = vunpack.c.l.b16 %v72
    %v898 = vunpack.c.h.b16 %v72
    %v899 = vunpack.c.l.b16 %v73
    %v900 = vunpack.c.h.b16 %v73
    %v901 = vunpack.c.l.b16 %v74
    %v902 = vunpack.c.h.b16 %v74
    %v903 = vunpack.c.l.b16 %v75
    %v904 = vunpack.c.h.b16 %v75
    %v905 = vunpack.c.l.b16 %v76
    %v906 = vunpack.c.h.b16 %v76
    %v907 = vpack.c.b16 %v893, %v891
    %v908 = vpack.c.b16 %v894, %v892
    %v909 = vpack.c.b16 %v897, %v895
    %v910 = vpack.c.b16 %v898, %v896
    %v911 = vpack.c.b16 %v901, %v899
    %v912 = vpack.c.b16 %v902, %v900
    %v913 = vpack.c.b16 %v905, %v903
    %v914 = vpack.c.b16 %v906, %v904
    %923 = vmatpush.bf16.msra.mxu0 0
    %924 = vmatpush.bf16.msra.mxu0 0
    %925 = vmatpush.bf16.msra.mxu0 0
    %926 = vmatpush.bf16.msra.mxu0 0
    %927 = vmatpush.bf16.msra.mxu0 %v913
    %928 = vmatpush.bf16.msra.mxu0 %v911
    %929 = vmatpush.bf16.msra.mxu0 %v909
    %930 = vmatpush.bf16.msra.mxu0 %v907
    %931 = vmatmul.bf16.gmra.mxu0 %v396
    %v932 = vpop.f32.mrf.mxu0
    %v933 = vadd.f32 %v867, %v932
    %v934 = vpop.f32.mrf.mxu0
    %935 = vdwg.mxu0
    %936 = vmatpush.bf16.msra.mxu0 0
    %937 = vmatpush.bf16.msra.mxu0 0
    %938 = vmatpush.bf16.msra.mxu0 0
    %939 = vmatpush.bf16.msra.mxu0 0
    %940 = vmatpush.bf16.msra.mxu0 %v914
    %941 = vmatpush.bf16.msra.mxu0 %v912
    %942 = vmatpush.bf16.msra.mxu0 %v910
    %943 = vmatpush.bf16.msra.mxu0 %v908
    %944 = vmatmul.bf16.gmra.mxu0 %v396
    %v945 = vpop.f32.mrf.mxu0
    %v946 = vadd.f32 %v880, %v945
    %v947 = vpop.f32.mrf.mxu0
    %948 = vdwg.mxu0
    %v949 = vperm.slane %v51, 3
    %v950 = vperm.slane %v52, 3
    %v951 = vadd.f32 %v933, %v949
    %v952 = vadd.f32 %v946, %v950
    %v955 = vrot.slane %v952, 6
    %v956 = vsel %vm115, %v951, %v955
    %958 = vst [vmem:[#allocation2] sm:$0xf] %v956
    %959 = vmatpush.bf16.msra.mxu0 0
    %960 = vmatpush.bf16.msra.mxu0 0
    %961 = vmatpush.bf16.msra.mxu0 0
    %962 = vmatpush.bf16.msra.mxu0 0
    %963 = vmatpush.bf16.msra.mxu0 %v844
    %964 = vmatpush.bf16.msra.mxu0 %v842
    %965 = vmatpush.bf16.msra.mxu0 %v840
    %966 = vmatpush.bf16.msra.mxu0 %v838
    %967 = vmatmul.bf16.gmra.mxu0 %v756
    %v968 = vpop.f32.mrf.mxu0
    %v969 = vadd.f32 0.0, %v968
    %v970 = vpop.f32.mrf.mxu0
    %971 = vdwg.mxu0
    %972 = vmatpush.bf16.msra.mxu0 0
    %973 = vmatpush.bf16.msra.mxu0 0
    %974 = vmatpush.bf16.msra.mxu0 0
    %975 = vmatpush.bf16.msra.mxu0 0
    %976 = vmatpush.bf16.msra.mxu0 %v845
    %977 = vmatpush.bf16.msra.mxu0 %v843
    %978 = vmatpush.bf16.msra.mxu0 %v841
    %979 = vmatpush.bf16.msra.mxu0 %v839
    %980 = vmatmul.bf16.gmra.mxu0 %v756
    %v981 = vpop.f32.mrf.mxu0
    %v982 = vadd.f32 0.0, %v981
    %v983 = vpop.f32.mrf.mxu0
    %984 = vdwg.mxu0
    %985 = vmatpush.bf16.msra.mxu0 0
    %986 = vmatpush.bf16.msra.mxu0 0
    %987 = vmatpush.bf16.msra.mxu0 0
    %988 = vmatpush.bf16.msra.mxu0 0
    %989 = vmatpush.bf16.msra.mxu0 %v913
    %990 = vmatpush.bf16.msra.mxu0 %v911
    %991 = vmatpush.bf16.msra.mxu0 %v909
    %992 = vmatpush.bf16.msra.mxu0 %v907
    %993 = vmatmul.bf16.gmra.mxu0 %v456
    %v994 = vpop.f32.mrf.mxu0
    %v995 = vadd.f32 %v969, %v994
    %v996 = vpop.f32.mrf.mxu0
    %997 = vdwg.mxu0
    %998 = vmatpush.bf16.msra.mxu0 0
    %999 = vmatpush.bf16.msra.mxu0 0
    %1000 = vmatpush.bf16.msra.mxu0 0
    %1001 = vmatpush.bf16.msra.mxu0 0
    %1002 = vmatpush.bf16.msra.mxu0 %v914
    %1003 = vmatpush.bf16.msra.mxu0 %v912
    %1004 = vmatpush.bf16.msra.mxu0 %v910
    %1005 = vmatpush.bf16.msra.mxu0 %v908
    %1006 = vmatmul.bf16.gmra.mxu0 %v456
    %v1007 = vpop.f32.mrf.mxu0
    %v1008 = vadd.f32 %v982, %v1007
    %v1009 = vpop.f32.mrf.mxu0
    %1010 = vdwg.mxu0
    %v1011 = vadd.f32 %v995, %v949
    %v1012 = vadd.f32 %v1008, %v950
    %v1015 = vrot.slane %v1012, 6
    %v1016 = vsel %vm115, %v1011, %v1015
    %1018 = vst [vmem:[%s146] sm:$0xf] %v1016
    %1019 = vmatpush.bf16.msra.mxu0 0
    %1020 = vmatpush.bf16.msra.mxu0 0
    %1021 = vmatpush.bf16.msra.mxu0 0
    %1022 = vmatpush.bf16.msra.mxu0 0
    %1023 = vmatpush.bf16.msra.mxu0 %v844
    %1024 = vmatpush.bf16.msra.mxu0 %v842
    %1025 = vmatpush.bf16.msra.mxu0 %v840
    %1026 = vmatpush.bf16.msra.mxu0 %v838
    %1027 = vmatmul.bf16.gmra.mxu0 %v696
    %v1028 = vpop.f32.mrf.mxu0
    %v1029 = vadd.f32 0.0, %v1028
    %v1030 = vpop.f32.mrf.mxu0
    %1031 = vdwg.mxu0
    %1032 = vmatpush.bf16.msra.mxu0 0
    %1033 = vmatpush.bf16.msra.mxu0 0
    %1034 = vmatpush.bf16.msra.mxu0 0
    %1035 = vmatpush.bf16.msra.mxu0 0
    %1036 = vmatpush.bf16.msra.mxu0 %v845
    %1037 = vmatpush.bf16.msra.mxu0 %v843
    %1038 = vmatpush.bf16.msra.mxu0 %v841
    %1039 = vmatpush.bf16.msra.mxu0 %v839
    %1040 = vmatmul.bf16.gmra.mxu0 %v696
    %v1041 = vpop.f32.mrf.mxu0
    %v1042 = vadd.f32 0.0, %v1041
    %v1043 = vpop.f32.mrf.mxu0
    %1044 = vdwg.mxu0
    %1045 = vmatpush.bf16.msra.mxu0 0
    %1046 = vmatpush.bf16.msra.mxu0 0
    %1047 = vmatpush.bf16.msra.mxu0 0
    %1048 = vmatpush.bf16.msra.mxu0 0
    %1049 = vmatpush.bf16.msra.mxu0 %v913
    %1050 = vmatpush.bf16.msra.mxu0 %v911
    %1051 = vmatpush.bf16.msra.mxu0 %v909
    %1052 = vmatpush.bf16.msra.mxu0 %v907
    %1053 = vmatmul.bf16.gmra.mxu0 %v516
    %v1054 = vpop.f32.mrf.mxu0
    %v1055 = vadd.f32 %v1029, %v1054
    %v1056 = vpop.f32.mrf.mxu0
    %1057 = vdwg.mxu0
    %1058 = vmatpush.bf16.msra.mxu0 0
    %1059 = vmatpush.bf16.msra.mxu0 0
    %1060 = vmatpush.bf16.msra.mxu0 0
    %1061 = vmatpush.bf16.msra.mxu0 0
    %1062 = vmatpush.bf16.msra.mxu0 %v914
    %1063 = vmatpush.bf16.msra.mxu0 %v912
    %1064 = vmatpush.bf16.msra.mxu0 %v910
    %1065 = vmatpush.bf16.msra.mxu0 %v908
    %1066 = vmatmul.bf16.gmra.mxu0 %v516
    %v1067 = vpop.f32.mrf.mxu0
    %v1068 = vadd.f32 %v1042, %v1067
    %v1069 = vpop.f32.mrf.mxu0
    %1070 = vdwg.mxu0
    %v1071 = vadd.f32 %v1055, %v949
    %v1072 = vadd.f32 %v1068, %v950
    %v1075 = vrot.slane %v1072, 6
    %v1076 = vsel %vm115, %v1071, %v1075
    %1078 = vst [vmem:[%s175] sm:$0xf] %v1076
    %1079 = vmatpush.bf16.msra.mxu0 0
    %1080 = vmatpush.bf16.msra.mxu0 0
    %1081 = vmatpush.bf16.msra.mxu0 0
    %1082 = vmatpush.bf16.msra.mxu0 0
    %1083 = vmatpush.bf16.msra.mxu0 %v844
    %1084 = vmatpush.bf16.msra.mxu0 %v842
    %1085 = vmatpush.bf16.msra.mxu0 %v840
    %1086 = vmatpush.bf16.msra.mxu0 %v838
    %1087 = vmatmul.bf16.gmra.mxu0 %v636
    %v1088 = vpop.f32.mrf.mxu0
    %v1089 = vadd.f32 0.0, %v1088
    %v1090 = vpop.f32.mrf.mxu0
    %1091 = vdwg.mxu0
    %1092 = vmatpush.bf16.msra.mxu0 0
    %1093 = vmatpush.bf16.msra.mxu0 0
    %1094 = vmatpush.bf16.msra.mxu0 0
    %1095 = vmatpush.bf16.msra.mxu0 0
    %1096 = vmatpush.bf16.msra.mxu0 %v845
    %1097 = vmatpush.bf16.msra.mxu0 %v843
    %1098 = vmatpush.bf16.msra.mxu0 %v841
    %1099 = vmatpush.bf16.msra.mxu0 %v839
    %1100 = vmatmul.bf16.gmra.mxu0 %v636
    %v1101 = vpop.f32.mrf.mxu0
    %v1102 = vadd.f32 0.0, %v1101
    %v1103 = vpop.f32.mrf.mxu0
    %1104 = vdwg.mxu0
    %1105 = vmatpush.bf16.msra.mxu0 0
    %1106 = vmatpush.bf16.msra.mxu0 0
    %1107 = vmatpush.bf16.msra.mxu0 0
    %1108 = vmatpush.bf16.msra.mxu0 0
    %1109 = vmatpush.bf16.msra.mxu0 %v913
    %1110 = vmatpush.bf16.msra.mxu0 %v911
    %1111 = vmatpush.bf16.msra.mxu0 %v909
    %1112 = vmatpush.bf16.msra.mxu0 %v907
    %1113 = vmatmul.bf16.gmra.mxu0 %v576
    %v1114 = vpop.f32.mrf.mxu0
    %v1115 = vadd.f32 %v1089, %v1114
    %v1116 = vpop.f32.mrf.mxu0
    %1117 = vdwg.mxu0
    %1118 = vmatpush.bf16.msra.mxu0 0
    %1119 = vmatpush.bf16.msra.mxu0 0
    %1120 = vmatpush.bf16.msra.mxu0 0
    %1121 = vmatpush.bf16.msra.mxu0 0
    %1122 = vmatpush.bf16.msra.mxu0 %v914
    %1123 = vmatpush.bf16.msra.mxu0 %v912
    %1124 = vmatpush.bf16.msra.mxu0 %v910
    %1125 = vmatpush.bf16.msra.mxu0 %v908
    %1126 = vmatmul.bf16.gmra.mxu0 %v576
    %v1127 = vpop.f32.mrf.mxu0
    %v1128 = vadd.f32 %v1102, %v1127
    %v1129 = vpop.f32.mrf.mxu0
    %1130 = vdwg.mxu0
    %v1131 = vadd.f32 %v1115, %v949
    %v1132 = vadd.f32 %v1128, %v950
    %v1135 = vrot.slane %v1132, 6
    %v1136 = vsel %vm115, %v1131, %v1135
    %1138 = vst [vmem:[%s204] sm:$0xf] %v1136
    %1139 = vmatpush.bf16.msra.mxu0 0
    %1140 = vmatpush.bf16.msra.mxu0 0
    %1141 = vmatpush.bf16.msra.mxu0 0
    %1142 = vmatpush.bf16.msra.mxu0 0
    %1143 = vmatpush.bf16.msra.mxu0 %v844
    %1144 = vmatpush.bf16.msra.mxu0 %v842
    %1145 = vmatpush.bf16.msra.mxu0 %v840
    %1146 = vmatpush.bf16.msra.mxu0 %v838
    %1147 = vmatmul.bf16.gmra.mxu0 %v576
    %v1148 = vpop.f32.mrf.mxu0
    %v1149 = vadd.f32 0.0, %v1148
    %v1150 = vpop.f32.mrf.mxu0
    %1151 = vdwg.mxu0
    %1152 = vmatpush.bf16.msra.mxu0 0
    %1153 = vmatpush.bf16.msra.mxu0 0
    %1154 = vmatpush.bf16.msra.mxu0 0
    %1155 = vmatpush.bf16.msra.mxu0 0
    %1156 = vmatpush.bf16.msra.mxu0 %v845
    %1157 = vmatpush.bf16.msra.mxu0 %v843
    %1158 = vmatpush.bf16.msra.mxu0 %v841
    %1159 = vmatpush.bf16.msra.mxu0 %v839
    %1160 = vmatmul.bf16.gmra.mxu0 %v576
    %v1161 = vpop.f32.mrf.mxu0
    %v1162 = vadd.f32 0.0, %v1161
    %v1163 = vpop.f32.mrf.mxu0
    %1164 = vdwg.mxu0
    %1165 = vmatpush.bf16.msra.mxu0 0
    %1166 = vmatpush.bf16.msra.mxu0 0
    %1167 = vmatpush.bf16.msra.mxu0 0
    %1168 = vmatpush.bf16.msra.mxu0 0
    %1169 = vmatpush.bf16.msra.mxu0 %v913
    %1170 = vmatpush.bf16.msra.mxu0 %v911
    %1171 = vmatpush.bf16.msra.mxu0 %v909
    %1172 = vmatpush.bf16.msra.mxu0 %v907
    %1173 = vmatmul.bf16.gmra.mxu0 %v636
    %v1174 = vpop.f32.mrf.mxu0
    %v1175 = vadd.f32 %v1149, %v1174
    %v1176 = vpop.f32.mrf.mxu0
    %1177 = vdwg.mxu0
    %1178 = vmatpush.bf16.msra.mxu0 0
    %1179 = vmatpush.bf16.msra.mxu0 0
    %1180 = vmatpush.bf16.msra.mxu0 0
    %1181 = vmatpush.bf16.msra.mxu0 0
    %1182 = vmatpush.bf16.msra.mxu0 %v914
    %1183 = vmatpush.bf16.msra.mxu0 %v912
    %1184 = vmatpush.bf16.msra.mxu0 %v910
    %1185 = vmatpush.bf16.msra.mxu0 %v908
    %1186 = vmatmul.bf16.gmra.mxu0 %v636
    %v1187 = vpop.f32.mrf.mxu0
    %v1188 = vadd.f32 %v1162, %v1187
    %v1189 = vpop.f32.mrf.mxu0
    %1190 = vdwg.mxu0
    %v1191 = vadd.f32 %v1175, %v949
    %v1192 = vadd.f32 %v1188, %v950
    %v1195 = vrot.slane %v1192, 6
    %v1196 = vsel %vm115, %v1191, %v1195
    %1198 = vst [vmem:[%s231] sm:$0xf] %v1196
    %1199 = vmatpush.bf16.msra.mxu0 0
    %1200 = vmatpush.bf16.msra.mxu0 0
    %1201 = vmatpush.bf16.msra.mxu0 0
    %1202 = vmatpush.bf16.msra.mxu0 0
    %1203 = vmatpush.bf16.msra.mxu0 %v844
    %1204 = vmatpush.bf16.msra.mxu0 %v842
    %1205 = vmatpush.bf16.msra.mxu0 %v840
    %1206 = vmatpush.bf16.msra.mxu0 %v838
    %1207 = vmatmul.bf16.gmra.mxu0 %v516
    %v1208 = vpop.f32.mrf.mxu0
    %v1209 = vadd.f32 0.0, %v1208
    %v1210 = vpop.f32.mrf.mxu0
    %1211 = vdwg.mxu0
    %1212 = vmatpush.bf16.msra.mxu0 0
    %1213 = vmatpush.bf16.msra.mxu0 0
    %1214 = vmatpush.bf16.msra.mxu0 0
    %1215 = vmatpush.bf16.msra.mxu0 0
    %1216 = vmatpush.bf16.msra.mxu0 %v845
    %1217 = vmatpush.bf16.msra.mxu0 %v843
    %1218 = vmatpush.bf16.msra.mxu0 %v841
    %1219 = vmatpush.bf16.msra.mxu0 %v839
    %1220 = vmatmul.bf16.gmra.mxu0 %v516
    %v1221 = vpop.f32.mrf.mxu0
    %v1222 = vadd.f32 0.0, %v1221
    %v1223 = vpop.f32.mrf.mxu0
    %1224 = vdwg.mxu0
    %1225 = vmatpush.bf16.msra.mxu0 0
    %1226 = vmatpush.bf16.msra.mxu0 0
    %1227 = vmatpush.bf16.msra.mxu0 0
    %1228 = vmatpush.bf16.msra.mxu0 0
    %1229 = vmatpush.bf16.msra.mxu0 %v913
    %1230 = vmatpush.bf16.msra.mxu0 %v911
    %1231 = vmatpush.bf16.msra.mxu0 %v909
    %1232 = vmatpush.bf16.msra.mxu0 %v907
    %1233 = vmatmul.bf16.gmra.mxu0 %v696
    %v1234 = vpop.f32.mrf.mxu0
    %v1235 = vadd.f32 %v1209, %v1234
    %v1236 = vpop.f32.mrf.mxu0
    %1237 = vdwg.mxu0
    %1238 = vmatpush.bf16.msra.mxu0 0
    %1239 = vmatpush.bf16.msra.mxu0 0
    %1240 = vmatpush.bf16.msra.mxu0 0
    %1241 = vmatpush.bf16.msra.mxu0 0
    %1242 = vmatpush.bf16.msra.mxu0 %v914
    %1243 = vmatpush.bf16.msra.mxu0 %v912
    %1244 = vmatpush.bf16.msra.mxu0 %v910
    %1245 = vmatpush.bf16.msra.mxu0 %v908
    %1246 = vmatmul.bf16.gmra.mxu0 %v696
    %v1247 = vpop.f32.mrf.mxu0
    %v1248 = vadd.f32 %v1222, %v1247
    %v1249 = vpop.f32.mrf.mxu0
    %1250 = vdwg.mxu0
    %v1251 = vadd.f32 %v1235, %v949
    %v1252 = vadd.f32 %v1248, %v950
    %v1255 = vrot.slane %v1252, 6
    %v1256 = vsel %vm115, %v1251, %v1255
    %1258 = vst [vmem:[%s258] sm:$0xf] %v1256
    %1259 = vmatpush.bf16.msra.mxu0 0
    %1260 = vmatpush.bf16.msra.mxu0 0
    %1261 = vmatpush.bf16.msra.mxu0 0
    %1262 = vmatpush.bf16.msra.mxu0 0
    %1263 = vmatpush.bf16.msra.mxu0 %v844
    %1264 = vmatpush.bf16.msra.mxu0 %v842
    %1265 = vmatpush.bf16.msra.mxu0 %v840
    %1266 = vmatpush.bf16.msra.mxu0 %v838
    %1267 = vmatmul.bf16.gmra.mxu0 %v456
    %v1268 = vpop.f32.mrf.mxu0
    %v1269 = vadd.f32 0.0, %v1268
    %v1270 = vpop.f32.mrf.mxu0
    %1271 = vdwg.mxu0
    %1272 = vmatpush.bf16.msra.mxu0 0
    %1273 = vmatpush.bf16.msra.mxu0 0
    %1274 = vmatpush.bf16.msra.mxu0 0
    %1275 = vmatpush.bf16.msra.mxu0 0
    %1276 = vmatpush.bf16.msra.mxu0 %v845
    %1277 = vmatpush.bf16.msra.mxu0 %v843
    %1278 = vmatpush.bf16.msra.mxu0 %v841
    %1279 = vmatpush.bf16.msra.mxu0 %v839
    %1280 = vmatmul.bf16.gmra.mxu0 %v456
    %v1281 = vpop.f32.mrf.mxu0
    %v1282 = vadd.f32 0.0, %v1281
    %v1283 = vpop.f32.mrf.mxu0
    %1284 = vdwg.mxu0
    %1285 = vmatpush.bf16.msra.mxu0 0
    %1286 = vmatpush.bf16.msra.mxu0 0
    %1287 = vmatpush.bf16.msra.mxu0 0
    %1288 = vmatpush.bf16.msra.mxu0 0
    %1289 = vmatpush.bf16.msra.mxu0 %v913
    %1290 = vmatpush.bf16.msra.mxu0 %v911
    %1291 = vmatpush.bf16.msra.mxu0 %v909
    %1292 = vmatpush.bf16.msra.mxu0 %v907
    %1293 = vmatmul.bf16.gmra.mxu0 %v756
    %v1294 = vpop.f32.mrf.mxu0
    %v1295 = vadd.f32 %v1269, %v1294
    %v1296 = vpop.f32.mrf.mxu0
    %1297 = vdwg.mxu0
    %1298 = vmatpush.bf16.msra.mxu0 0
    %1299 = vmatpush.bf16.msra.mxu0 0
    %1300 = vmatpush.bf16.msra.mxu0 0
    %1301 = vmatpush.bf16.msra.mxu0 0
    %1302 = vmatpush.bf16.msra.mxu0 %v914
    %1303 = vmatpush.bf16.msra.mxu0 %v912
    %1304 = vmatpush.bf16.msra.mxu0 %v910
    %1305 = vmatpush.bf16.msra.mxu0 %v908
    %1306 = vmatmul.bf16.gmra.mxu0 %v756
    %v1307 = vpop.f32.mrf.mxu0
    %v1308 = vadd.f32 %v1282, %v1307
    %v1309 = vpop.f32.mrf.mxu0
    %1310 = vdwg.mxu0
    %v1311 = vadd.f32 %v1295, %v949
    %v1312 = vadd.f32 %v1308, %v950
    %v1315 = vrot.slane %v1312, 6
    %v1316 = vsel %vm115, %v1311, %v1315
    %1318 = vst [vmem:[%s285] sm:$0xf] %v1316
    %1319 = vmatpush.bf16.msra.mxu0 0
    %1320 = vmatpush.bf16.msra.mxu0 0
    %1321 = vmatpush.bf16.msra.mxu0 0
    %1322 = vmatpush.bf16.msra.mxu0 0
    %1323 = vmatpush.bf16.msra.mxu0 %v844
    %1324 = vmatpush.bf16.msra.mxu0 %v842
    %1325 = vmatpush.bf16.msra.mxu0 %v840
    %1326 = vmatpush.bf16.msra.mxu0 %v838
    %1327 = vmatmul.bf16.gmra.mxu0 %v396
    %v1328 = vpop.f32.mrf.mxu0
    %v1329 = vadd.f32 0.0, %v1328
    %v1330 = vpop.f32.mrf.mxu0
    %1331 = vdwg.mxu0
    %1332 = vmatpush.bf16.msra.mxu0 0
    %1333 = vmatpush.bf16.msra.mxu0 0
    %1334 = vmatpush.bf16.msra.mxu0 0
    %1335 = vmatpush.bf16.msra.mxu0 0
    %1336 = vmatpush.bf16.msra.mxu0 %v845
    %1337 = vmatpush.bf16.msra.mxu0 %v843
    %1338 = vmatpush.bf16.msra.mxu0 %v841
    %1339 = vmatpush.bf16.msra.mxu0 %v839
    %1340 = vmatmul.bf16.gmra.mxu0 %v396
    %v1341 = vpop.f32.mrf.mxu0
    %v1342 = vadd.f32 0.0, %v1341
    %v1343 = vpop.f32.mrf.mxu0
    %1344 = vdwg.mxu0
    %1345 = vmatpush.bf16.msra.mxu0 0
    %1346 = vmatpush.bf16.msra.mxu0 0
    %1347 = vmatpush.bf16.msra.mxu0 0
    %1348 = vmatpush.bf16.msra.mxu0 0
    %1349 = vmatpush.bf16.msra.mxu0 %v913
    %1350 = vmatpush.bf16.msra.mxu0 %v911
    %1351 = vmatpush.bf16.msra.mxu0 %v909
    %1352 = vmatpush.bf16.msra.mxu0 %v907
    %1353 = vmatmul.bf16.gmra.mxu0 %v855
    %v1354 = vpop.f32.mrf.mxu0
    %v1355 = vadd.f32 %v1329, %v1354
    %v1356 = vpop.f32.mrf.mxu0
    %1357 = vdwg.mxu0
    %1358 = vmatpush.bf16.msra.mxu0 0
    %1359 = vmatpush.bf16.msra.mxu0 0
    %1360 = vmatpush.bf16.msra.mxu0 0
    %1361 = vmatpush.bf16.msra.mxu0 0
    %1362 = vmatpush.bf16.msra.mxu0 %v914
    %1363 = vmatpush.bf16.msra.mxu0 %v912
    %1364 = vmatpush.bf16.msra.mxu0 %v910
    %1365 = vmatpush.bf16.msra.mxu0 %v908
    %1366 = vmatmul.bf16.gmra.mxu0 %v855
    %v1367 = vpop.f32.mrf.mxu0
    %v1368 = vadd.f32 %v1342, %v1367
    %v1369 = vpop.f32.mrf.mxu0
    %1370 = vdwg.mxu0
    %v1371 = vadd.f32 %v1355, %v949
    %v1372 = vadd.f32 %v1368, %v950
    %v1375 = vrot.slane %v1372, 6
    %v1376 = vsel %vm115, %v1371, %v1375
    %1378 = vst [vmem:[%s312] sm:$0xf] %v1376
    %v1379 = vld [vmem:[#allocation2] sm:$0xf]
    %v1380 = vtanh.pop %v1379
    %v1381 = vmul.f32 %v1380, %v321
    %v1382 = vadd.f32 %v1381, %v329
    %v1383 = vmul.f32 %v1382, 0.0
    %v1385 = vrot.slane %v1382, 2
    %v1387 = vmul.f32 %v1382, %v1385
    %1389 = vrot.lane.b32.xlu0 %v1387, 64
    %v1390 = vpop.permute.xlu0 %1389
    %v1392 = vadd.f32 %v1383, %v1390
    %v1393 = vtanh.pop %v1392
    %1394 = vrot.lane.b32.xlu0 %v1382, 64
    %v1395 = vpop.permute.xlu0 %1394
    %v1396 = vrot.slane %v1395, 2
    %1399 = vrot.lane.b32.xlu0 %v1393, 64
    %v1400 = vpop.permute.xlu0 %1399
    %v1402 = vmul.f32 %v1396, %v1400
    %v1403 = vld [vmem:[%s146] sm:$0xf]
    %v1404 = vpack.c.bf16 %v1402, %v1402
    %v1413 = vunpack.c.l.b16 %v61
    %v1414 = vunpack.c.h.b16 %v61
    %v1415 = vunpack.c.l.b16 %v62
    %v1416 = vunpack.c.h.b16 %v62
    %v1417 = vunpack.c.l.b16 %v63
    %v1418 = vunpack.c.h.b16 %v63
    %v1419 = vunpack.c.l.b16 %v64
    %v1420 = vunpack.c.h.b16 %v64
    %v1421 = vunpack.c.l.b16 %v65
    %v1422 = vunpack.c.h.b16 %v65
    %v1423 = vunpack.c.l.b16 %v66
    %v1424 = vunpack.c.h.b16 %v66
    %v1425 = vunpack.c.l.b16 %v67
    %v1426 = vunpack.c.h.b16 %v67
    %v1427 = vunpack.c.l.b16 %v68
    %v1428 = vunpack.c.h.b16 %v68
    %v1429 = vpack.c.b16 %v1415, %v1413
    %v1430 = vpack.c.b16 %v1416, %v1414
    %v1431 = vpack.c.b16 %v1419, %v1417
    %v1432 = vpack.c.b16 %v1420, %v1418
    %v1433 = vpack.c.b16 %v1423, %v1421
    %v1434 = vpack.c.b16 %v1424, %v1422
    %v1435 = vpack.c.b16 %v1427, %v1425
    %v1436 = vpack.c.b16 %v1428, %v1426
    %v1446 = vsel %vm394, %v1404, 0
    %1448 = vmatpush.bf16.msra.mxu0 0
    %1449 = vmatpush.bf16.msra.mxu0 0
    %1450 = vmatpush.bf16.msra.mxu0 0
    %1451 = vmatpush.bf16.msra.mxu0 0
    %1452 = vmatpush.bf16.msra.mxu0 %v1435
    %1453 = vmatpush.bf16.msra.mxu0 %v1433
    %1454 = vmatpush.bf16.msra.mxu0 %v1431
    %1455 = vmatpush.bf16.msra.mxu0 %v1429
    %1456 = vmatmul.bf16.gmra.mxu0 %v1446
    %v1457 = vpop.f32.mrf.mxu0
    %v1458 = vadd.f32 0.0, %v1457
    %v1459 = vpop.f32.mrf.mxu0
    %1460 = vdwg.mxu0
    %1461 = vmatpush.bf16.msra.mxu0 0
    %1462 = vmatpush.bf16.msra.mxu0 0
    %1463 = vmatpush.bf16.msra.mxu0 0
    %1464 = vmatpush.bf16.msra.mxu0 0
    %1465 = vmatpush.bf16.msra.mxu0 %v1436
    %1466 = vmatpush.bf16.msra.mxu0 %v1434
    %1467 = vmatpush.bf16.msra.mxu0 %v1432
    %1468 = vmatpush.bf16.msra.mxu0 %v1430
    %1469 = vmatmul.bf16.gmra.mxu0 %v1446
    %v1470 = vpop.f32.mrf.mxu0
    %v1471 = vadd.f32 0.0, %v1470
    %v1472 = vpop.f32.mrf.mxu0
    %1473 = vdwg.mxu0
    %v1476 = vrot.slane %v1471, 6
    %v1477 = vsel %vm115, %v1458, %v1476
    %v1479 = vadd.f32 %v1403, %v1477
    %v1480 = vtanh.pop %v1479
    %v1481 = vmul.f32 %v1480, %v321
    %v1482 = vadd.f32 %v1481, %v329
    %v1483 = vmul.f32 %v1482, %v1392
    %v1485 = vrot.slane %v1482, 2
    %v1487 = vmul.f32 %v1482, %v1485
    %1489 = vrot.lane.b32.xlu0 %v1487, 64
    %v1490 = vpop.permute.xlu0 %1489
    %v1492 = vadd.f32 %v1483, %v1490
    %v1493 = vtanh.pop %v1492
    %1494 = vrot.lane.b32.xlu0 %v1482, 64
    %v1495 = vpop.permute.xlu0 %1494
    %v1496 = vrot.slane %v1495, 2
    %1499 = vrot.lane.b32.xlu0 %v1493, 64
    %v1500 = vpop.permute.xlu0 %1499
    %v1502 = vmul.f32 %v1496, %v1500
    %v1503 = vld [vmem:[%s175] sm:$0xf]
    %v1504 = vpack.c.bf16 %v1502, %v1502
    %v1506 = vsel %vm394, %v1504, 0
    %1508 = vmatpush.bf16.msra.mxu0 0
    %1509 = vmatpush.bf16.msra.mxu0 0
    %1510 = vmatpush.bf16.msra.mxu0 0
    %1511 = vmatpush.bf16.msra.mxu0 0
    %1512 = vmatpush.bf16.msra.mxu0 %v1435
    %1513 = vmatpush.bf16.msra.mxu0 %v1433
    %1514 = vmatpush.bf16.msra.mxu0 %v1431
    %1515 = vmatpush.bf16.msra.mxu0 %v1429
    %1516 = vmatmul.bf16.gmra.mxu0 %v1506
    %v1517 = vpop.f32.mrf.mxu0
    %v1518 = vadd.f32 0.0, %v1517
    %v1519 = vpop.f32.mrf.mxu0
    %1520 = vdwg.mxu0
    %1521 = vmatpush.bf16.msra.mxu0 0
    %1522 = vmatpush.bf16.msra.mxu0 0
    %1523 = vmatpush.bf16.msra.mxu0 0
    %1524 = vmatpush.bf16.msra.mxu0 0
    %1525 = vmatpush.bf16.msra.mxu0 %v1436
    %1526 = vmatpush.bf16.msra.mxu0 %v1434
    %1527 = vmatpush.bf16.msra.mxu0 %v1432
    %1528 = vmatpush.bf16.msra.mxu0 %v1430
    %1529 = vmatmul.bf16.gmra.mxu0 %v1506
    %v1530 = vpop.f32.mrf.mxu0
    %v1531 = vadd.f32 0.0, %v1530
    %v1532 = vpop.f32.mrf.mxu0
    %1533 = vdwg.mxu0
    %v1536 = vrot.slane %v1531, 6
    %v1537 = vsel %vm115, %v1518, %v1536
    %v1539 = vadd.f32 %v1503, %v1537
    %v1540 = vtanh.pop %v1539
    %v1541 = vmul.f32 %v1540, %v321
    %v1542 = vadd.f32 %v1541, %v329
    %v1543 = vmul.f32 %v1542, %v1492
    %v1545 = vrot.slane %v1542, 2
    %v1547 = vmul.f32 %v1542, %v1545
    %1549 = vrot.lane.b32.xlu0 %v1547, 64
    %v1550 = vpop.permute.xlu0 %1549
    %v1552 = vadd.f32 %v1543, %v1550
    %v1553 = vtanh.pop %v1552
    %1554 = vrot.lane.b32.xlu0 %v1542, 64
    %v1555 = vpop.permute.xlu0 %1554
    %v1556 = vrot.slane %v1555, 2
    %1559 = vrot.lane.b32.xlu0 %v1553, 64
    %v1560 = vpop.permute.xlu0 %1559
    %v1562 = vmul.f32 %v1556, %v1560
    %v1563 = vld [vmem:[%s204] sm:$0xf]
    %v1564 = vpack.c.bf16 %v1562, %v1562
    %v1566 = vsel %vm394, %v1564, 0
    %1568 = vmatpush.bf16.msra.mxu0 0
    %1569 = vmatpush.bf16.msra.mxu0 0
    %1570 = vmatpush.bf16.msra.mxu0 0
    %1571 = vmatpush.bf16.msra.mxu0 0
    %1572 = vmatpush.bf16.msra.mxu0 %v1435
    %1573 = vmatpush.bf16.msra.mxu0 %v1433
    %1574 = vmatpush.bf16.msra.mxu0 %v1431
    %1575 = vmatpush.bf16.msra.mxu0 %v1429
    %1576 = vmatmul.bf16.gmra.mxu0 %v1566
    %v1577 = vpop.f32.mrf.mxu0
    %v1578 = vadd.f32 0.0, %v1577
    %v1579 = vpop.f32.mrf.mxu0
    %1580 = vdwg.mxu0
    %1581 = vmatpush.bf16.msra.mxu0 0
    %1582 = vmatpush.bf16.msra.mxu0 0
    %1583 = vmatpush.bf16.msra.mxu0 0
    %1584 = vmatpush.bf16.msra.mxu0 0
    %1585 = vmatpush.bf16.msra.mxu0 %v1436
    %1586 = vmatpush.bf16.msra.mxu0 %v1434
    %1587 = vmatpush.bf16.msra.mxu0 %v1432
    %1588 = vmatpush.bf16.msra.mxu0 %v1430
    %1589 = vmatmul.bf16.gmra.mxu0 %v1566
    %v1590 = vpop.f32.mrf.mxu0
    %v1591 = vadd.f32 0.0, %v1590
    %v1592 = vpop.f32.mrf.mxu0
    %1593 = vdwg.mxu0
    %v1596 = vrot.slane %v1591, 6
    %v1597 = vsel %vm115, %v1578, %v1596
    %v1599 = vadd.f32 %v1563, %v1597
    %v1600 = vtanh.pop %v1599
    %v1601 = vmul.f32 %v1600, %v321
    %v1602 = vadd.f32 %v1601, %v329
    %v1603 = vmul.f32 %v1602, %v1552
    %v1605 = vrot.slane %v1602, 2
    %v1607 = vmul.f32 %v1602, %v1605
    %1609 = vrot.lane.b32.xlu0 %v1607, 64
    %v1610 = vpop.permute.xlu0 %1609
    %v1612 = vadd.f32 %v1603, %v1610
    %v1613 = vtanh.pop %v1612
    %1614 = vrot.lane.b32.xlu0 %v1602, 64
    %v1615 = vpop.permute.xlu0 %1614
    %v1616 = vrot.slane %v1615, 2
    %1619 = vrot.lane.b32.xlu0 %v1613, 64
    %v1620 = vpop.permute.xlu0 %1619
    %v1622 = vmul.f32 %v1616, %v1620
    %v1623 = vld [vmem:[%s231] sm:$0xf]
    %v1624 = vpack.c.bf16 %v1622, %v1622
    %v1626 = vsel %vm394, %v1624, 0
    %1628 = vmatpush.bf16.msra.mxu0 0
    %1629 = vmatpush.bf16.msra.mxu0 0
    %1630 = vmatpush.bf16.msra.mxu0 0
    %1631 = vmatpush.bf16.msra.mxu0 0
    %1632 = vmatpush.bf16.msra.mxu0 %v1435
    %1633 = vmatpush.bf16.msra.mxu0 %v1433
    %1634 = vmatpush.bf16.msra.mxu0 %v1431
    %1635 = vmatpush.bf16.msra.mxu0 %v1429
    %1636 = vmatmul.bf16.gmra.mxu0 %v1626
    %v1637 = vpop.f32.mrf.mxu0
    %v1638 = vadd.f32 0.0, %v1637
    %v1639 = vpop.f32.mrf.mxu0
    %1640 = vdwg.mxu0
    %1641 = vmatpush.bf16.msra.mxu0 0
    %1642 = vmatpush.bf16.msra.mxu0 0
    %1643 = vmatpush.bf16.msra.mxu0 0
    %1644 = vmatpush.bf16.msra.mxu0 0
    %1645 = vmatpush.bf16.msra.mxu0 %v1436
    %1646 = vmatpush.bf16.msra.mxu0 %v1434
    %1647 = vmatpush.bf16.msra.mxu0 %v1432
    %1648 = vmatpush.bf16.msra.mxu0 %v1430
    %1649 = vmatmul.bf16.gmra.mxu0 %v1626
    %v1650 = vpop.f32.mrf.mxu0
    %v1651 = vadd.f32 0.0, %v1650
    %v1652 = vpop.f32.mrf.mxu0
    %1653 = vdwg.mxu0
    %v1656 = vrot.slane %v1651, 6
    %v1657 = vsel %vm115, %v1638, %v1656
    %v1659 = vadd.f32 %v1623, %v1657
    %v1660 = vtanh.pop %v1659
    %v1661 = vmul.f32 %v1660, %v321
    %v1662 = vadd.f32 %v1661, %v329
    %v1663 = vmul.f32 %v1662, %v1612
    %v1665 = vrot.slane %v1662, 2
    %v1667 = vmul.f32 %v1662, %v1665
    %1669 = vrot.lane.b32.xlu0 %v1667, 64
    %v1670 = vpop.permute.xlu0 %1669
    %v1672 = vadd.f32 %v1663, %v1670
    %v1673 = vtanh.pop %v1672
    %1674 = vrot.lane.b32.xlu0 %v1662, 64
    %v1675 = vpop.permute.xlu0 %1674
    %v1676 = vrot.slane %v1675, 2
    %1679 = vrot.lane.b32.xlu0 %v1673, 64
    %v1680 = vpop.permute.xlu0 %1679
    %v1682 = vmul.f32 %v1676, %v1680
    %v1683 = vld [vmem:[%s258] sm:$0xf]
    %v1684 = vpack.c.bf16 %v1682, %v1682
    %v1686 = vsel %vm394, %v1684, 0
    %1688 = vmatpush.bf16.msra.mxu0 0
    %1689 = vmatpush.bf16.msra.mxu0 0
    %1690 = vmatpush.bf16.msra.mxu0 0
    %1691 = vmatpush.bf16.msra.mxu0 0
    %1692 = vmatpush.bf16.msra.mxu0 %v1435
    %1693 = vmatpush.bf16.msra.mxu0 %v1433
    %1694 = vmatpush.bf16.msra.mxu0 %v1431
    %1695 = vmatpush.bf16.msra.mxu0 %v1429
    %1696 = vmatmul.bf16.gmra.mxu0 %v1686
    %v1697 = vpop.f32.mrf.mxu0
    %v1698 = vadd.f32 0.0, %v1697
    %v1699 = vpop.f32.mrf.mxu0
    %1700 = vdwg.mxu0
    %1701 = vmatpush.bf16.msra.mxu0 0
    %1702 = vmatpush.bf16.msra.mxu0 0
    %1703 = vmatpush.bf16.msra.mxu0 0
    %1704 = vmatpush.bf16.msra.mxu0 0
    %1705 = vmatpush.bf16.msra.mxu0 %v1436
    %1706 = vmatpush.bf16.msra.mxu0 %v1434
    %1707 = vmatpush.bf16.msra.mxu0 %v1432
    %1708 = vmatpush.bf16.msra.mxu0 %v1430
    %1709 = vmatmul.bf16.gmra.mxu0 %v1686
    %v1710 = vpop.f32.mrf.mxu0
    %v1711 = vadd.f32 0.0, %v1710
    %v1712 = vpop.f32.mrf.mxu0
    %1713 = vdwg.mxu0
    %v1716 = vrot.slane %v1711, 6
    %v1717 = vsel %vm115, %v1698, %v1716
    %v1719 = vadd.f32 %v1683, %v1717
    %v1720 = vtanh.pop %v1719
    %v1721 = vmul.f32 %v1720, %v321
    %v1722 = vadd.f32 %v1721, %v329
    %v1723 = vmul.f32 %v1722, %v1672
    %v1725 = vrot.slane %v1722, 2
    %v1727 = vmul.f32 %v1722, %v1725
    %1729 = vrot.lane.b32.xlu0 %v1727, 64
    %v1730 = vpop.permute.xlu0 %1729
    %v1732 = vadd.f32 %v1723, %v1730
    %v1733 = vtanh.pop %v1732
    %1734 = vrot.lane.b32.xlu0 %v1722, 64
    %v1735 = vpop.permute.xlu0 %1734
    %v1736 = vrot.slane %v1735, 2
    %1739 = vrot.lane.b32.xlu0 %v1733, 64
    %v1740 = vpop.permute.xlu0 %1739
    %v1742 = vmul.f32 %v1736, %v1740
    %v1743 = vld [vmem:[%s285] sm:$0xf]
    %v1744 = vpack.c.bf16 %v1742, %v1742
    %v1746 = vsel %vm394, %v1744, 0
    %1748 = vmatpush.bf16.msra.mxu0 0
    %1749 = vmatpush.bf16.msra.mxu0 0
    %1750 = vmatpush.bf16.msra.mxu0 0
    %1751 = vmatpush.bf16.msra.mxu0 0
    %1752 = vmatpush.bf16.msra.mxu0 %v1435
    %1753 = vmatpush.bf16.msra.mxu0 %v1433
    %1754 = vmatpush.bf16.msra.mxu0 %v1431
    %1755 = vmatpush.bf16.msra.mxu0 %v1429
    %1756 = vmatmul.bf16.gmra.mxu0 %v1746
    %v1757 = vpop.f32.mrf.mxu0
    %v1758 = vadd.f32 0.0, %v1757
    %v1759 = vpop.f32.mrf.mxu0
    %1760 = vdwg.mxu0
    %1761 = vmatpush.bf16.msra.mxu0 0
    %1762 = vmatpush.bf16.msra.mxu0 0
    %1763 = vmatpush.bf16.msra.mxu0 0
    %1764 = vmatpush.bf16.msra.mxu0 0
    %1765 = vmatpush.bf16.msra.mxu0 %v1436
    %1766 = vmatpush.bf16.msra.mxu0 %v1434
    %1767 = vmatpush.bf16.msra.mxu0 %v1432
    %1768 = vmatpush.bf16.msra.mxu0 %v1430
    %1769 = vmatmul.bf16.gmra.mxu0 %v1746
    %v1770 = vpop.f32.mrf.mxu0
    %v1771 = vadd.f32 0.0, %v1770
    %v1772 = vpop.f32.mrf.mxu0
    %1773 = vdwg.mxu0
    %v1776 = vrot.slane %v1771, 6
    %v1777 = vsel %vm115, %v1758, %v1776
    %v1779 = vadd.f32 %v1743, %v1777
    %v1780 = vtanh.pop %v1779
    %v1781 = vmul.f32 %v1780, %v321
    %v1782 = vadd.f32 %v1781, %v329
    %v1783 = vmul.f32 %v1782, %v1732
    %v1785 = vrot.slane %v1782, 2
    %v1787 = vmul.f32 %v1782, %v1785
    %1789 = vrot.lane.b32.xlu0 %v1787, 64
    %v1790 = vpop.permute.xlu0 %1789
    %v1792 = vadd.f32 %v1783, %v1790
    %v1793 = vtanh.pop %v1792
    %1794 = vrot.lane.b32.xlu0 %v1782, 64
    %v1795 = vpop.permute.xlu0 %1794
    %v1796 = vrot.slane %v1795, 2
    %1799 = vrot.lane.b32.xlu0 %v1793, 64
    %v1800 = vpop.permute.xlu0 %1799
    %v1802 = vmul.f32 %v1796, %v1800
    %v1803 = vld [vmem:[%s312] sm:$0xf]
    %v1804 = vpack.c.bf16 %v1802, %v1802
    %v1806 = vsel %vm394, %v1804, 0
    %1808 = vmatpush.bf16.msra.mxu0 0
    %1809 = vmatpush.bf16.msra.mxu0 0
    %1810 = vmatpush.bf16.msra.mxu0 0
    %1811 = vmatpush.bf16.msra.mxu0 0
    %1812 = vmatpush.bf16.msra.mxu0 %v1435
    %1813 = vmatpush.bf16.msra.mxu0 %v1433
    %1814 = vmatpush.bf16.msra.mxu0 %v1431
    %1815 = vmatpush.bf16.msra.mxu0 %v1429
    %1816 = vmatmul.bf16.gmra.mxu0 %v1806
    %v1817 = vpop.f32.mrf.mxu0
    %v1818 = vadd.f32 0.0, %v1817
    %v1819 = vpop.f32.mrf.mxu0
    %1820 = vdwg.mxu0
    %1821 = vmatpush.bf16.msra.mxu0 0
    %1822 = vmatpush.bf16.msra.mxu0 0
    %1823 = vmatpush.bf16.msra.mxu0 0
    %1824 = vmatpush.bf16.msra.mxu0 0
    %1825 = vmatpush.bf16.msra.mxu0 %v1436
    %1826 = vmatpush.bf16.msra.mxu0 %v1434
    %1827 = vmatpush.bf16.msra.mxu0 %v1432
    %1828 = vmatpush.bf16.msra.mxu0 %v1430
    %1829 = vmatmul.bf16.gmra.mxu0 %v1806
    %v1830 = vpop.f32.mrf.mxu0
    %v1831 = vadd.f32 0.0, %v1830
    %v1832 = vpop.f32.mrf.mxu0
    %1833 = vdwg.mxu0
    %v1836 = vrot.slane %v1831, 6
    %v1837 = vsel %vm115, %v1818, %v1836
    %v1839 = vadd.f32 %v1803, %v1837
    %v1840 = vtanh.pop %v1839
    %v1841 = vmul.f32 %v1840, %v321
    %v1842 = vadd.f32 %v1841, %v329
    %v1843 = vmul.f32 %v1842, %v1792
    %v1845 = vrot.slane %v1842, 2
    %v1847 = vmul.f32 %v1842, %v1845
    %1849 = vrot.lane.b32.xlu0 %v1847, 64
    %v1850 = vpop.permute.xlu0 %1849
    %v1852 = vadd.f32 %v1843, %v1850
    %v1853 = vtanh.pop %v1852
    %1854 = vrot.lane.b32.xlu0 %v1842, 64
    %v1855 = vpop.permute.xlu0 %1854
    %v1856 = vrot.slane %v1855, 2
    %1859 = vrot.lane.b32.xlu0 %v1853, 64
    %v1860 = vpop.permute.xlu0 %1859
    %v1862 = vmul.f32 %v1856, %v1860
    %v1863 = vlaneseq
    %v1864 = vand.u32 %v1863, 127
    %vm1865 = vcmp.lt.s32.totalorder %v1864, 32
    %v1866 = vsel %vm1865, %v1402, %v1862
    %v1867 = vsel %vm1865, %v1502, %v1802
    %v1868 = vsel %vm1865, %v1562, %v1742
    %v1869 = vsel %vm1865, %v1622, %v1682
    %v1870 = vsel %vm1865, %v1682, %v1622
    %v1871 = vsel %vm1865, %v1742, %v1562
    %v1872 = vsel %vm1865, %v1802, %v1502
    %v1873 = vsel %vm1865, %v1862, %v1402
    %v1874 = vld [vmem:[#allocation6] sm:$0xff]
    %v1875 = vperm.slane %v1874, 0
    %v1876 = vmul.f32 %v1866, %v1875
    %vm1877 = vcmask 517120
    %v1878 = vsel %vm1877, %v1876, 0.0
    %1879 = vadd.xlane.f32.xlu0 %v1878
    %v1880 = vpop.xlane.xlu0 %1879
    %v1881 = vmul.f32 %v1867, %v1875
    %v1882 = vsel %vm1877, %v1881, 0.0
    %1883 = vadd.xlane.f32.xlu0 %v1882
    %v1884 = vpop.xlane.xlu0 %1883
    %v1885 = vmul.f32 %v1868, %v1875
    %v1886 = vsel %vm1877, %v1885, 0.0
    %1887 = vadd.xlane.f32.xlu0 %v1886
    %v1888 = vpop.xlane.xlu0 %1887
    %v1889 = vmul.f32 %v1869, %v1875
    %v1890 = vsel %vm1877, %v1889, 0.0
    %1891 = vadd.xlane.f32.xlu0 %v1890
    %v1892 = vpop.xlane.xlu0 %1891
    %v1893 = vmul.f32 %v1870, %v1875
    %v1894 = vsel %vm1877, %v1893, 0.0
    %1895 = vadd.xlane.f32.xlu0 %v1894
    %v1896 = vpop.xlane.xlu0 %1895
    %v1897 = vmul.f32 %v1871, %v1875
    %v1898 = vsel %vm1877, %v1897, 0.0
    %1899 = vadd.xlane.f32.xlu0 %v1898
    %v1900 = vpop.xlane.xlu0 %1899
    %v1901 = vmul.f32 %v1872, %v1875
    %v1902 = vsel %vm1877, %v1901, 0.0
    %1903 = vadd.xlane.f32.xlu0 %v1902
    %v1904 = vpop.xlane.xlu0 %1903
    %v1905 = vmul.f32 %v1873, %v1875
    %v1906 = vsel %vm1877, %v1905, 0.0
    %1907 = vadd.xlane.f32.xlu0 %v1906
    %v1908 = vpop.xlane.xlu0 %1907
    %vm1909 = vcmask 7168
    %v1910 = vsel %vm1909, %v1880, %v1884
    %vm1911 = vcmask 15360
    %v1912 = vsel %vm1911, %v1910, %v1888
    %vm1913 = vcmask 23552
    %v1914 = vsel %vm1913, %v1912, %v1892
    %vm1915 = vcmask 31744
    %v1916 = vsel %vm1915, %v1914, %v1896
    %vm1917 = vcmask 39936
    %v1918 = vsel %vm1917, %v1916, %v1900
    %vm1919 = vcmask 48128
    %v1920 = vsel %vm1919, %v1918, %v1904
    %vm1921 = vcmask 56320
    %v1922 = vsel %vm1921, %v1920, %v1908
    %vm1923 = vcmask 58368
    %v1924 = vsel %vm1923, %v1922, -inf
    %1925 = vmax.xlane.f32.xlu0 %v1924
    %v1926 = vpop.xlane.xlu0 %1925
    %v1927 = vsub.f32 %v1922, %v1926
    %v1928 = vmul.f32 %v1927, 1.442695
    %v1929 = vpow.pop %v1928
    %v1930 = vsel %vm1923, %v1929, 0.0
    %1931 = vadd.xlane.f32.xlu0 %v1930
    %v1932 = vpop.xlane.xlu0 %1931
    %v1933 = vrcp.pop %v1932
    %v1934 = vmul.f32 %v1929, %v1933
    %1935 = vst.msk [vmem:[#allocation8] sm:$0x3] %vm1923, %v1934
    %1937 = vset.pattern.permute.xlu0 0
    %1938 = vperm.xlu0 %1937, %v1934
    %v1939 = vpop.permute.xlu0 %1938
    %v1941 = vmul.f32 %v1866, %v1939
    %1942 = vset.pattern.permute.xlu0 1
    %1943 = vperm.xlu0 %1942, %v1934
    %v1944 = vpop.permute.xlu0 %1943
    %v1946 = vmul.f32 %v1867, %v1944
    %v1947 = vadd.f32 %v1941, %v1946
    %1948 = vset.pattern.permute.xlu0 2
    %1949 = vperm.xlu0 %1948, %v1934
    %v1950 = vpop.permute.xlu0 %1949
    %v1952 = vmul.f32 %v1868, %v1950
    %v1953 = vadd.f32 %v1947, %v1952
    %1954 = vset.pattern.permute.xlu0 3
    %1955 = vperm.xlu0 %1954, %v1934
    %v1956 = vpop.permute.xlu0 %1955
    %v1958 = vmul.f32 %v1869, %v1956
    %v1959 = vadd.f32 %v1953, %v1958
    %1960 = vset.pattern.permute.xlu0 4
    %1961 = vperm.xlu0 %1960, %v1934
    %v1962 = vpop.permute.xlu0 %1961
    %v1964 = vmul.f32 %v1870, %v1962
    %v1965 = vadd.f32 %v1959, %v1964
    %1966 = vset.pattern.permute.xlu0 5
    %1967 = vperm.xlu0 %1966, %v1934
    %v1968 = vpop.permute.xlu0 %1967
    %v1970 = vmul.f32 %v1871, %v1968
    %v1971 = vadd.f32 %v1965, %v1970
    %1972 = vset.pattern.permute.xlu0 6
    %1973 = vperm.xlu0 %1972, %v1934
    %v1974 = vpop.permute.xlu0 %1973
    %v1976 = vmul.f32 %v1872, %v1974
    %v1977 = vadd.f32 %v1971, %v1976
    %1978 = vset.pattern.permute.xlu0 7
    %1979 = vperm.xlu0 %1978, %v1934
    %v1980 = vpop.permute.xlu0 %1979
    %v1982 = vmul.f32 %v1873, %v1980
    %v1983 = vadd.f32 %v1977, %v1982
    %v1984 = vperm.slane %v1874, 1
    %v1985 = vmul.f32 %v1983, %v1984
    %v1986 = vperm.slane %v1874, 2
    %v1987 = vadd.f32 %v1985, %v1986
    %v1988 = vperm.slane %v1874, 3
    %v1989 = vmul.f32 %v1987, %v1988
    %v1990 = vsel %vm1877, %v1989, 0.0
    %1991 = vadd.xlane.f32.xlu0 %v1990
    %v1992 = vpop.xlane.xlu0 %1991
    %v1993 = vperm.slane %v1874, 6
    %v1994 = vadd.f32 %v1992, %v1993
    %v1995 = vperm.slane %v1874, 4
    %v1996 = vmul.f32 %v1987, %v1995
    %v1997 = vsel %vm1877, %v1996, 0.0
    %1998 = vadd.xlane.f32.xlu0 %v1997
    %v1999 = vpop.xlane.xlu0 %1998
    %v2000 = vadd.f32 %v1999, %v1993
    %v2001 = vperm.slane %v1874, 5
    %v2002 = vmul.f32 %v1987, %v2001
    %v2003 = vsel %vm1877, %v2002, 0.0
    %2004 = vadd.xlane.f32.xlu0 %v2003
    %v2005 = vpop.xlane.xlu0 %2004
    %v2006 = vadd.f32 %v2005, %v1993
    %v2007 = vtanh.pop %v2000
    %v2008 = vmul.f32 %v2006, 0.5
    %v2009 = vtanh.pop %v2008
    %v2010 = vmul.f32 %v2009, 0.5
    %v2011 = vadd.f32 %v2010, 0.5
    %v2012 = vmul.f32 %v1994, 0.4
    %2014 = vrot.lane.b32.xlu0 %v2011, 127
    %v2015 = vpop.permute.xlu0 %2014
    %v2017 = vmul.f32 %v2007, %v2015
    %v2018 = vmul.f32 %v2017, 0.6
    %2020 = vrot.lane.b32.xlu0 %v2018, 127
    %v2021 = vpop.permute.xlu0 %2020
    %v2023 = vadd.f32 %v2012, %v2021
    %vm2024 = vcmask 1024
    %2025 = vst.msk [vmem:[%s4] sm:$0x3] %vm2024, %v2023
    // Predicated region
    $region26: #{simple_lstm_forward.1} parent=1 // pred_check
      _
    $region27: #{simple_lstm_forward.1} parent=1 // pred_check_branch
      %2027 = sbr.rel (0) target = $region29
    $region28: #{simple_lstm_forward.1} parent=1 // pred_region
      _
    $region29: #{simple_lstm_forward.1} parent=1 // pred_fallthru
      _
    // Predicated region
    $region30: #{simple_lstm_forward.1} parent=1 // pred_check
      _
    $region31: #{simple_lstm_forward.1} parent=1 // pred_check_branch
      %2029 = sbr.rel (0) target = $region33
    $region32: #{simple_lstm_forward.1} parent=1 // pred_region
      %2031 = vsyncadd [#allocation5], 0
      %s2033 = sshll.u32 [#allocation8], 4
      %s2034 = int_to_ptr.vmem [resolvable:$true] %s2033
      %s2035 = sshll.u32 %s5, 4
      %s2036 = int_to_ptr.hbm [resolvable:$true] %s2035
      %2038 = dma.vmem_to_hbm [thread:$0]  %s2034, 32, %s2036, [#allocation5]
    $region33: #{simple_lstm_forward.1} parent=1 // pred_fallthru
      _
    // Predicated region
    $region34: #{simple_lstm_forward.1} parent=1 // pred_check
      _
    $region35: #{simple_lstm_forward.1} parent=1 // pred_check_branch
      %2040 = sbr.rel (0) target = $region37
    $region36: #{simple_lstm_forward.1} parent=1 // pred_region
      _
    $region37: #{simple_lstm_forward.1} parent=1 // pred_fallthru
      _
    // Predicated region
    $region38: #{simple_lstm_forward.1} parent=1 // pred_check
      _
    $region39: #{simple_lstm_forward.1} parent=1 // pred_check_branch
      %2042 = sbr.rel (0) target = $region41
    $region40: #{simple_lstm_forward.1} parent=1 // pred_region
      %2044 = dma.done [#allocation5], 32
    $region41: #{simple_lstm_forward.1} parent=1 // pred_fallthru
      _
    %2045 = vsyncpa [#allocation4], 1
    %2046 = vsyncpa [#allocation7], 1
    %2047 = vsyncpa [#allocation5], 1

</llo_original>
